<compile_context>
chip_gen: v7x
topology: tpu7x:2x2x1
jax: 0.10.0
libtpu: 0.0.40
codegen_flags: <defaults>
</compile_context>

<pallas_src>
import functools
import math

import jax
import jax.numpy as jnp
from jax.experimental import pallas as pl
from jax.experimental.pallas import tpu as pltpu


def _layernorm(z, g, b, eps=1e-5):
    mu = jnp.mean(z, axis=-1, keepdims=True)
    c = z - mu
    var = jnp.mean(c * c, axis=-1, keepdims=True)
    return c * jax.lax.rsqrt(var + eps) * g + b


# ---------------------------------------------------------------------------
# Stage 1 (runs once per forward): Gaussian kernel similarity + neighborhood
# aggregation.  Separate tiny pallas_call so points/neighbors (and their double
# buffers) are never held in VMEM during the L-step layer loop.
# ---------------------------------------------------------------------------
def _neighborhood_agg_kernel(pts_ref, nbr_ref, x0_ref, *, sigma):
    pts = pts_ref[...].astype(jnp.float32)                    # (Bb, N, D)
    nbr = nbr_ref[...].astype(jnp.float32)                    # (Bb, N, D)
    Bb, N, D = pts.shape
    # ||pi - pj||^2 via the Gram identity on the MXU; no (N,N,D) intermediate.
    gram = jnp.einsum('bnd,bmd->bnm', pts, pts,
                      preferred_element_type=jnp.float32)     # (Bb, N, N)
    sq = pts * pts
    sq_col = jnp.sum(sq, axis=-1, keepdims=True)              # (Bb, N, 1)
    sq_row = jnp.sum(sq, axis=-1)[:, None, :]                 # (Bb, 1, N)
    d2 = jnp.maximum(sq_col + sq_row - 2.0 * gram, 0.0)       # clamp cancellation noise
    ksim = jnp.exp(d2 * (-1.0 / (2.0 * sigma * sigma)))       # (Bb, N, N)
    agg = jnp.einsum('bij,bjd->bid', ksim, nbr,
                     preferred_element_type=jnp.float32)      # (Bb, N, D)
    denom = jnp.sum(ksim, axis=-1, keepdims=True)
    x0 = agg / denom                                          # exact divide (runs once)
    x0_ref[...] = x0.reshape(Bb * N, D)                       # fold batch: (Bb*N, D)
    # TODO(synk): for very large N, tile ksim over key chunks here as well.


# ---------------------------------------------------------------------------
# Stage 2: fused layer stack + classifier head.
# Grid = (batch_blocks, num_layers); activations stay resident in VMEM scratch
# across the (innermost, "arbitrary") layer axis; bf16 per-layer weights are
# streamed / double-buffered by the BlockSpec pipeline.
# ---------------------------------------------------------------------------
def _layer_stack_kernel(
        x0_ref,
        wqkv_ref, bqkv_ref, wo_ref, bo_ref,
        ln1g_ref, ln1b_ref,
        w1_ref, b1_ref, w2_ref, b2_ref,
        ln2g_ref, ln2b_ref,
        ng_ref, nb_ref, fcw_ref, fcb_ref,
        out_ref,
        x_ref,
        *, num_heads, batch_block, seq, kv_block):
    l = pl.program_id(1)
    Bb, N, H = batch_block, seq, num_heads
    M = Bb * N

    # new batch block -> load initial activations into the resident scratch
    @pl.when(l == 0)
    def _():
        x_ref[...] = x0_ref[...]

    x = x_ref[...]                                            # (M, D) f32, VMEM-resident
    D = x.shape[-1]
    hd = D // H
    scale = 1.0 / math.sqrt(hd)
    Z = H * Bb

    # ---- fused QKV projection: one lane-dense (M,D)@(D,3D) matmul (bf16 weights)
    x_bf = x.astype(jnp.bfloat16)
    qkv = jnp.dot(x_bf, wqkv_ref[...],
                  preferred_element_type=jnp.float32) + bqkv_ref[...]   # (M, 3D) f32

    # head relayout: pure data movement (lane split + concat), no per-head matmuls
    def to_heads(t):                                          # (M, D) -> (H*Bb, N, hd)
        heads = [t[:, h * hd:(h + 1) * hd].reshape(1, Bb, N, hd) for h in range(H)]
        return jnp.concatenate(heads, axis=0).reshape(Z, N, hd)

    def from_heads(o):                                        # (H*Bb, N, hd) -> (M, D)
        o4 = o.reshape(H, M, hd)
        return jnp.concatenate([o4[h] for h in range(H)], axis=-1)

    q_h = to_heads((qkv[:, 0 * D:1 * D] * scale).astype(jnp.bfloat16))  # scale folded in q
    k_h = to_heads(qkv[:, 1 * D:2 * D].astype(jnp.bfloat16))
    v_h = to_heads(qkv[:, 2 * D:3 * D].astype(jnp.bfloat16))

    # ---- attention: online softmax over KV chunks (bounded score working set)
    kv = min(kv_block, N)
    nk = -(-N // kv)                                          # static chunk count
    m_i = jnp.full((Z, N, 1), -jnp.inf, jnp.float32)
    l_i = jnp.zeros((Z, N, 1), jnp.float32)
    acc = jnp.zeros((Z, N, hd), jnp.float32)
    for c in range(nk):
        lo, hi = c * kv, min((c + 1) * kv, N)
        k_c = k_h[:, lo:hi, :]
        v_c = v_h[:, lo:hi, :]
        s = jnp.einsum('zqd,zkd->zqk', q_h, k_c,
                       preferred_element_type=jnp.float32)    # (Z, N, <=kv)
        m_new = jnp.maximum(m_i, jnp.max(s, axis=-1, keepdims=True))
        alpha = jnp.exp(m_i - m_new)
        p = jnp.exp(s - m_new)
        l_i = alpha * l_i + jnp.sum(p, axis=-1, keepdims=True)
        acc = alpha * acc + jnp.einsum('zqk,zkd->zqd', p.astype(jnp.bfloat16), v_c,
                                       preferred_element_type=jnp.float32)
        m_i = m_new
    # TODO(synk): for very large N convert this static chunk loop to a fori_loop /
    #             extra grid axis so chunk live-ranges are hard-bounded.
    o = acc * pl.reciprocal(l_i, approx=True)                 # (Z, N, hd) f32

    # ---- output projection: heads concatenated on lanes, one (M,D)@(D,D) matmul
    o_md = from_heads(o).astype(jnp.bfloat16)                 # (M, D)
    attn = jnp.dot(o_md, wo_ref[...],
                   preferred_element_type=jnp.float32) + bo_ref[...]     # (M, D)

    x1 = _layernorm(x + attn, ln1g_ref[...], ln1b_ref[...])

    # ---- feed-forward (bf16 weights, f32 accumulate)
    h1 = jnp.dot(x1.astype(jnp.bfloat16), w1_ref[...],
                 preferred_element_type=jnp.float32) + b1_ref[...]
    h1 = jnp.maximum(h1, 0.0)
    ff = jnp.dot(h1.astype(jnp.bfloat16), w2_ref[...],
                 preferred_element_type=jnp.float32) + b2_ref[...]
    # TODO(synk): for D >= 1024, tile the FFN over the F=4D axis (emit_pipeline over
    #             w1/w2 chunks) so w1/w2 never need to be fully resident.

    x2 = _layernorm(x1 + ff, ln2g_ref[...], ln2b_ref[...])
    x_ref[...] = x2                                           # carry to next layer

    # ---- classifier head on the last layer of this batch block
    @pl.when(l == pl.num_programs(1) - 1)
    def _():
        xn = _layernorm(x2, ng_ref[...], nb_ref[...])         # (M, D)
        pooled = jnp.max(xn.reshape(Bb, N, D), axis=1)        # == torch.max(dim=1)[0]
        logits = jnp.dot(pooled, fcw_ref[...],
                         preferred_element_type=jnp.float32) + fcb_ref[...]
        out_ref[...] = logits.astype(out_ref.dtype)           # (Bb, C)


def _vmem_limit_bytes(Bb, N, D, F, C, H, kv_block):
    """Explicit VMEM budget for the layer-stack kernel (hint to Mosaic)."""
    f32, bf16 = 4, 2
    hd = D // H
    kv = min(kv_block, N)
    M = Bb * N
    est = (
        M * D * f32                                           # resident activation scratch
        + 2 * M * D * f32                                     # x0 block (double-buffered)
        + 2 * (D * 3 * D + D * D + D * F + F * D) * bf16      # streamed bf16 matrices, 2 bufs
        + 2 * (3 * D + 6 * D + F) * f32                       # streamed bias/LN vectors, 2 bufs
        + (2 * D + D * C + C + Bb * C) * f32 * 2              # head params + logits block
        + M * 3 * D * (f32 + bf16)                            # qkv + head-split copies
        + H * Bb * N * kv * f32 * 2                           # score chunk + exp
        + H * Bb * N * (hd + 2) * f32                         # acc / m / l
        + M * F * f32 * 2                                     # ffn hidden
        + M * D * f32 * 4                                     # attn out, residuals, LN temps
    )
    # 1.5x headroom for compiler temporaries; >= 32 MiB, capped at v7x's 64 MiB/core.
    return int(min(max(est * 1.5 + (4 << 20), 32 << 20), 64 << 20))


def enhanced_geometric_transformer_forward(points, neighbors, params, *,
                                           sigma, num_heads,
                                           batch_block=None, kv_block=256):
    B, N, D = points.shape
    H = num_heads
    L = params["wqkv"].shape[0]
    F = params["w1"].shape[-1]
    C = params["fc_w"].shape[-1]
    Bb = B if batch_block is None else batch_block
    assert B % Bb == 0 and D % H == 0
    nb = B // Bb

    # ---- stage 1: kernel-similarity neighborhood aggregation ------------------
    x0 = pl.pallas_call(
        functools.partial(_neighborhood_agg_kernel, sigma=float(sigma)),
        out_shape=jax.ShapeDtypeStruct((B * N, D), jnp.float32),
        grid=(nb,),
        in_specs=[pl.BlockSpec((Bb, N, D), lambda b: (b, 0, 0)),
                  pl.BlockSpec((Bb, N, D), lambda b: (b, 0, 0))],
        out_specs=pl.BlockSpec((Bb * N, D), lambda b: (b, 0)),
        compiler_params=pltpu.CompilerParams(
            dimension_semantics=("parallel",)),
    )(points, neighbors)

    # ---- stage 2: fused layer stack + head -------------------------------------
    def per_layer(shape):
        nd = len(shape)
        # leading layer dim squeezed; weights for layer l streamed each inner step
        return pl.BlockSpec((None,) + tuple(shape[1:]),
                            lambda b, l, nd=nd: (l,) + (0,) * (nd - 1))

    def const(shape):
        nd = len(shape)
        return pl.BlockSpec(tuple(shape), lambda b, l, nd=nd: (0,) * nd)

    in_specs = [
        pl.BlockSpec((Bb * N, D), lambda b, l: (b, 0)),   # x0 (initial activations)
        per_layer((L, D, 3 * D)),     # wqkv (bf16)
        per_layer((L, 1, 3 * D)),     # bqkv
        per_layer((L, D, D)),         # wo   (bf16)
        per_layer((L, 1, D)),         # bo
        per_layer((L, 1, D)),         # ln1 gamma
        per_layer((L, 1, D)),         # ln1 beta
        per_layer((L, D, F)),         # w1   (bf16)
        per_layer((L, 1, F)),         # b1
        per_layer((L, F, D)),         # w2   (bf16)
        per_layer((L, 1, D)),         # b2
        per_layer((L, 1, D)),         # ln2 gamma
        per_layer((L, 1, D)),         # ln2 beta
        const((1, D)),                # final norm gamma
        const((1, D)),                # final norm beta
        const((D, C)),                # fc_out weight
        const((1, C)),                # fc_out bias
    ]

    kernel = functools.partial(_layer_stack_kernel, num_heads=H,
                               batch_block=Bb, seq=N, kv_block=kv_block)

    return pl.pallas_call(
        kernel,
        out_shape=jax.ShapeDtypeStruct((B, C), jnp.float32),
        grid=(nb, L),                       # batch blocks (parallel), layers innermost
        in_specs=in_specs,
        out_specs=pl.BlockSpec((Bb, C), lambda b, l: (b, 0)),
        scratch_shapes=[pltpu.VMEM((Bb * N, D), jnp.float32)],   # resident activations
        compiler_params=pltpu.CompilerParams(
            dimension_semantics=("parallel", "arbitrary"),
            vmem_limit_bytes=_vmem_limit_bytes(Bb, N, D, F, C, H, kv_block)),
    )(x0,
      params["wqkv"], params["bqkv"], params["wo"], params["bo"],
      params["ln1_g"], params["ln1_b"],
      params["w1"], params["b1"], params["w2"], params["b2"],
      params["ln2_g"], params["ln2_b"],
      params["norm_g"], params["norm_b"], params["fc_w"], params["fc_b"])


def init_params(key, embed_dim, num_layers, num_heads, num_classes):
    D, L = embed_dim, num_layers
    F = 4 * D
    std = 0.02
    ks = jax.random.split(key, 7)

    wq = std * jax.random.normal(ks[0], (L, D, D), jnp.float32)
    wk = std * jax.random.normal(ks[1], (L, D, D), jnp.float32)
    wv = std * jax.random.normal(ks[2], (L, D, D), jnp.float32)
    wo = std * jax.random.normal(ks[3], (L, D, D), jnp.float32)

    # Large streamed matrices stored as bf16 (halves HBM DMA + VMEM double-buffer
    # footprint); biases / LayerNorm params / head stay f32.
    return {
        "wqkv": jnp.concatenate([wq, wk, wv], axis=-1).astype(jnp.bfloat16),  # (L,D,3D)
        "bqkv": jnp.zeros((L, 1, 3 * D), jnp.float32),
        "wo": wo.astype(jnp.bfloat16),                                        # (L,D,D)
        "bo": jnp.zeros((L, 1, D), jnp.float32),
        "ln1_g": jnp.ones((L, 1, D), jnp.float32),
        "ln1_b": jnp.zeros((L, 1, D), jnp.float32),
        "w1": (std * jax.random.normal(ks[4], (L, D, F), jnp.float32)).astype(jnp.bfloat16),
        "b1": jnp.zeros((L, 1, F), jnp.float32),
        "w2": (std * jax.random.normal(ks[5], (L, F, D), jnp.float32)).astype(jnp.bfloat16),
        "b2": jnp.zeros((L, 1, D), jnp.float32),
        "ln2_g": jnp.ones((L, 1, D), jnp.float32),
        "ln2_b": jnp.zeros((L, 1, D), jnp.float32),
        "norm_g": jnp.ones((1, D), jnp.float32),
        "norm_b": jnp.zeros((1, D), jnp.float32),
        "fc_w": std * jax.random.normal(ks[6], (D, num_classes), jnp.float32),
        "fc_b": jnp.zeros((1, num_classes), jnp.float32),
    }


if __name__ == "__main__":
    # small, module-consistent shapes
    B, N = 2, 16            # batch, number of points (sequence length)
    embed_dim = 32          # D
    num_heads = 4
    num_layers = 2
    sigma = 1.0
    num_classes = 10

    key = jax.random.PRNGKey(0)
    kp, kn, kw = jax.random.split(key, 3)
    points = jax.random.normal(kp, (B, N, embed_dim), jnp.float32)
    neighbors = jax.random.normal(kn, (B, N, embed_dim), jnp.float32)
    params = init_params(kw, embed_dim, num_layers, num_heads, num_classes)

    fwd = jax.jit(functools.partial(enhanced_geometric_transformer_forward,
                                    sigma=sigma, num_heads=num_heads))
    logits = jax.block_until_ready(fwd(points, neighbors, params))
    assert logits.shape == (B, num_classes)
    assert bool(jnp.all(jnp.isfinite(logits)))
    print("KERNEL_OK")
</pallas_src>

<mosaic_0001>
module attributes {stable_mosaic.version = 11 : i64} {
  func.func @_neighborhood_agg_kernel(%arg0: i32, %arg1: memref<2x16x32xf32, #tpu.memory_space<vmem>>, %arg2: memref<2x16x32xf32, #tpu.memory_space<vmem>>, %arg3: memref<32x32xf32, #tpu.memory_space<vmem>>) attributes {dimension_semantics = [#tpu.dimension_semantics<parallel>], iteration_bounds = array<i64: 1>, scalar_prefetch = 0 : i64, scratch_operands = 0 : i64, tpu.core_type = #tpu.core_type<tc>, window_params = [{transform_indices = @transform_0, window_bounds = array<i64: 2, 16, 32>}, {transform_indices = @transform_1, window_bounds = array<i64: 2, 16, 32>}, {transform_indices = @transform_2, window_bounds = array<i64: 32, 32>}]} {
    %c0 = arith.constant 0 : index
    %c0_0 = arith.constant 0 : index
    %c0_1 = arith.constant 0 : index
    %0 = vector.load %arg1[%c0, %c0_0, %c0_1] : memref<2x16x32xf32, #tpu.memory_space<vmem>>, vector<2x16x32xf32>
    %c0_2 = arith.constant 0 : index
    %c0_3 = arith.constant 0 : index
    %c0_4 = arith.constant 0 : index
    %1 = vector.load %arg2[%c0_2, %c0_3, %c0_4] : memref<2x16x32xf32, #tpu.memory_space<vmem>>, vector<2x16x32xf32>
    "tpu.trace_start"() <{level = 10 : i32, message = "bnd,bmd->bnm"}> : () -> ()
    %cst = arith.constant dense<0.000000e+00> : vector<2x16x16xf32>
    %2 = tpu.matmul %0, %0, %cst {dimension_numbers = #tpu.dot_dimension_numbers<[2], [2], [1], [1], [0, 0, 0, 1, 1, 1], [0], [0]>} : vector<2x16x32xf32>, vector<2x16x32xf32>, vector<2x16x16xf32> -> vector<2x16x16xf32>
    "tpu.trace_stop"() : () -> ()
    %3 = arith.mulf %0, %0 : vector<2x16x32xf32>
    %cst_5 = arith.constant dense<0.000000e+00> : vector<2x16xf32>
    %4 = vector.multi_reduction <add>, %3, %cst_5 [2] : vector<2x16x32xf32> to vector<2x16xf32>
    %5 = vector.shape_cast %4 : vector<2x16xf32> to vector<2x16x1xf32>
    %cst_6 = arith.constant dense<0.000000e+00> : vector<2x16xf32>
    %6 = vector.multi_reduction <add>, %3, %cst_6 [2] : vector<2x16x32xf32> to vector<2x16xf32>
    %7 = vector.shape_cast %6 : vector<2x16xf32> to vector<2x1x16xf32>
    %8 = vector.broadcast %5 : vector<2x16x1xf32> to vector<2x16x16xf32>
    %9 = vector.broadcast %7 : vector<2x1x16xf32> to vector<2x16x16xf32>
    %10 = arith.addf %8, %9 : vector<2x16x16xf32>
    %cst_7 = arith.constant 2.000000e+00 : f32
    %11 = vector.broadcast %cst_7 : f32 to vector<2x16x16xf32>
    %12 = arith.mulf %11, %2 : vector<2x16x16xf32>
    %13 = arith.subf %10, %12 : vector<2x16x16xf32>
    %cst_8 = arith.constant 0.000000e+00 : f32
    %14 = vector.broadcast %cst_8 : f32 to vector<2x16x16xf32>
    %15 = arith.maximumf %13, %14 : vector<2x16x16xf32>
    %cst_9 = arith.constant -5.000000e-01 : f32
    %16 = vector.broadcast %cst_9 : f32 to vector<2x16x16xf32>
    %17 = arith.mulf %15, %16 : vector<2x16x16xf32>
    %18 = math.exp %17 : vector<2x16x16xf32>
    "tpu.trace_start"() <{level = 10 : i32, message = "bij,bjd->bid"}> : () -> ()
    %cst_10 = arith.constant dense<0.000000e+00> : vector<2x16x32xf32>
    %19 = tpu.matmul %18, %1, %cst_10 {dimension_numbers = #tpu.dot_dimension_numbers<[2], [1], [1], [2], [0, 0, 0, 1, 1, 2], [0], [0]>} : vector<2x16x16xf32>, vector<2x16x32xf32>, vector<2x16x32xf32> -> vector<2x16x32xf32>
    "tpu.trace_stop"() : () -> ()
    %cst_11 = arith.constant dense<0.000000e+00> : vector<2x16xf32>
    %20 = vector.multi_reduction <add>, %18, %cst_11 [2] : vector<2x16x16xf32> to vector<2x16xf32>
    %21 = vector.shape_cast %20 : vector<2x16xf32> to vector<2x16x1xf32>
    %22 = vector.broadcast %21 : vector<2x16x1xf32> to vector<2x16x32xf32>
    %23 = arith.divf %19, %22 : vector<2x16x32xf32>
    %24 = vector.shape_cast %23 : vector<2x16x32xf32> to vector<32x32xf32>
    %c0_12 = arith.constant 0 : index
    %c0_13 = arith.constant 0 : index
    %25 = vector.load %arg3[%c0_12, %c0_13] : memref<32x32xf32, #tpu.memory_space<vmem>>, vector<32x32xf32>
    tpu.vector_store %arg3[%c0_12, %c0_13], %24 {strides = array<i32>} : memref<32x32xf32, #tpu.memory_space<vmem>>, vector<32x32xf32>,
    return
  }
  func.func @transform_0(%arg0: i32) -> (i32, i32, i32) {
    %c0_i32 = arith.constant 0 : i32
    %c0_i32_0 = arith.constant 0 : i32
    %c0_i32_1 = arith.constant 0 : i32
    return %arg0, %c0_i32, %c0_i32_0 : i32, i32, i32
  }
  func.func @transform_1(%arg0: i32) -> (i32, i32, i32) {
    %c0_i32 = arith.constant 0 : i32
    %c0_i32_0 = arith.constant 0 : i32
    %c0_i32_1 = arith.constant 0 : i32
    return %arg0, %c0_i32, %c0_i32_0 : i32, i32, i32
  }
  func.func @transform_2(%arg0: i32) -> (i32, i32) {
    %c0_i32 = arith.constant 0 : i32
    %c0_i32_0 = arith.constant 0 : i32
    return %arg0, %c0_i32 : i32, i32
  }
}

module attributes {stable_mosaic.version = 11 : i64} {
  func.func @_layer_stack_kernel(%arg0: i32, %arg1: i32, %arg2: memref<32x32xf32, #tpu.memory_space<vmem>>, %arg3: memref<1x32x96xbf16, #tpu.memory_space<vmem>>, %arg4: memref<1x1x96xf32, #tpu.memory_space<vmem>>, %arg5: memref<1x32x32xbf16, #tpu.memory_space<vmem>>, %arg6: memref<1x1x32xf32, #tpu.memory_space<vmem>>, %arg7: memref<1x1x32xf32, #tpu.memory_space<vmem>>, %arg8: memref<1x1x32xf32, #tpu.memory_space<vmem>>, %arg9: memref<1x32x128xbf16, #tpu.memory_space<vmem>>, %arg10: memref<1x1x128xf32, #tpu.memory_space<vmem>>, %arg11: memref<1x128x32xbf16, #tpu.memory_space<vmem>>, %arg12: memref<1x1x32xf32, #tpu.memory_space<vmem>>, %arg13: memref<1x1x32xf32, #tpu.memory_space<vmem>>, %arg14: memref<1x1x32xf32, #tpu.memory_space<vmem>>, %arg15: memref<1x32xf32, #tpu.memory_space<vmem>>, %arg16: memref<1x32xf32, #tpu.memory_space<vmem>>, %arg17: memref<32x10xf32, #tpu.memory_space<vmem>>, %arg18: memref<1x10xf32, #tpu.memory_space<vmem>>, %arg19: memref<2x10xf32, #tpu.memory_space<vmem>>, %arg20: memref<32x32xf32, #tpu.memory_space<vmem>>) attributes {dimension_semantics = [#tpu.dimension_semantics<parallel>, #tpu.dimension_semantics<arbitrary>], iteration_bounds = array<i64: 1, 2>, scalar_prefetch = 0 : i64, scratch_operands = 1 : i64, tpu.core_type = #tpu.core_type<tc>, window_params = [{transform_indices = @transform_0, window_bounds = array<i64: 32, 32>}, {transform_indices = @transform_1, window_bounds = array<i64: 1, 32, 96>}, {transform_indices = @transform_2, window_bounds = array<i64: 1, 1, 96>}, {transform_indices = @transform_3, window_bounds = array<i64: 1, 32, 32>}, {transform_indices = @transform_4, window_bounds = array<i64: 1, 1, 32>}, {transform_indices = @transform_5, window_bounds = array<i64: 1, 1, 32>}, {transform_indices = @transform_6, window_bounds = array<i64: 1, 1, 32>}, {transform_indices = @transform_7, window_bounds = array<i64: 1, 32, 128>}, {transform_indices = @transform_8, window_bounds = array<i64: 1, 1, 128>}, {transform_indices = @transform_9, window_bounds = array<i64: 1, 128, 32>}, {transform_indices = @transform_10, window_bounds = array<i64: 1, 1, 32>}, {transform_indices = @transform_11, window_bounds = array<i64: 1, 1, 32>}, {transform_indices = @transform_12, window_bounds = array<i64: 1, 1, 32>}, {pipeline_mode = #tpu.pipeline_mode<synchronous>, transform_indices = @transform_13, window_bounds = array<i64: 1, 32>}, {pipeline_mode = #tpu.pipeline_mode<synchronous>, transform_indices = @transform_14, window_bounds = array<i64: 1, 32>}, {pipeline_mode = #tpu.pipeline_mode<synchronous>, transform_indices = @transform_15, window_bounds = array<i64: 32, 10>}, {pipeline_mode = #tpu.pipeline_mode<synchronous>, transform_indices = @transform_16, window_bounds = array<i64: 1, 10>}, {transform_indices = @transform_17, window_bounds = array<i64: 2, 10>}]} {
    %c0_i32 = arith.constant 0 : i32
    %0 = arith.cmpi eq, %arg1, %c0_i32 : i32
    %1 = arith.extui %0 : i1 to i32
    %c0_i32_0 = arith.constant 0 : i32
    %2 = arith.cmpi ne, %1, %c0_i32_0 : i32
    scf.if %2 {
      %c0_63 = arith.constant 0 : index
      %c0_64 = arith.constant 0 : index
      %164 = vector.load %arg2[%c0_63, %c0_64] : memref<32x32xf32, #tpu.memory_space<vmem>>, vector<32x32xf32>
      %c0_65 = arith.constant 0 : index
      %c0_66 = arith.constant 0 : index
      %165 = vector.load %arg20[%c0_65, %c0_66] : memref<32x32xf32, #tpu.memory_space<vmem>>, vector<32x32xf32>
      tpu.vector_store %arg20[%c0_65, %c0_66], %164 {strides = array<i32>} : memref<32x32xf32, #tpu.memory_space<vmem>>, vector<32x32xf32>,
    } else {
    }
    %c0 = arith.constant 0 : index
    %c0_1 = arith.constant 0 : index
    %3 = vector.load %arg20[%c0, %c0_1] : memref<32x32xf32, #tpu.memory_space<vmem>>, vector<32x32xf32>
    %4 = arith.truncf %3 : vector<32x32xf32> to vector<32x32xbf16>
    %c0_2 = arith.constant 0 : index
    %c0_3 = arith.constant 0 : index
    %c0_4 = arith.constant 0 : index
    %5 = vector.load %arg3[%c0_2, %c0_3, %c0_4] : memref<1x32x96xbf16, #tpu.memory_space<vmem>>, vector<1x32x96xbf16>
    %6 = vector.shape_cast %5 : vector<1x32x96xbf16> to vector<32x96xbf16>
    %cst = arith.constant dense<0.000000e+00> : vector<32x96xf32>
    %7 = tpu.matmul %4, %6, %cst {dimension_numbers = #tpu.dot_dimension_numbers<[1], [0], [0], [1], [0, 0, 1, 1], [], []>} : vector<32x32xbf16>, vector<32x96xbf16>, vector<32x96xf32> -> vector<32x96xf32>
    %c0_5 = arith.constant 0 : index
    %c0_6 = arith.constant 0 : index
    %c0_7 = arith.constant 0 : index
    %8 = vector.load %arg4[%c0_5, %c0_6, %c0_7] : memref<1x1x96xf32, #tpu.memory_space<vmem>>, vector<1x1x96xf32>
    %9 = vector.shape_cast %8 : vector<1x1x96xf32> to vector<1x96xf32>
    %10 = vector.broadcast %9 : vector<1x96xf32> to vector<32x96xf32>
    %11 = arith.addf %7, %10 : vector<32x96xf32>
    %12 = vector.extract_strided_slice %11 {offsets = [0, 0], sizes = [32, 32], strides = [1, 1]} : vector<32x96xf32> to vector<32x32xf32>
    %cst_8 = arith.constant 0.353553385 : f32
    %13 = vector.broadcast %cst_8 : f32 to vector<32x32xf32>
    %14 = arith.mulf %12, %13 : vector<32x32xf32>
    %15 = arith.truncf %14 : vector<32x32xf32> to vector<32x32xbf16>
    %16 = vector.extract_strided_slice %15 {offsets = [0, 0], sizes = [32, 8], strides = [1, 1]} : vector<32x32xbf16> to vector<32x8xbf16>
    %17 = vector.shape_cast %16 : vector<32x8xbf16> to vector<1x2x16x8xbf16>
    %18 = vector.extract_strided_slice %15 {offsets = [0, 8], sizes = [32, 8], strides = [1, 1]} : vector<32x32xbf16> to vector<32x8xbf16>
    %19 = vector.shape_cast %18 : vector<32x8xbf16> to vector<1x2x16x8xbf16>
    %20 = vector.extract_strided_slice %15 {offsets = [0, 16], sizes = [32, 8], strides = [1, 1]} : vector<32x32xbf16> to vector<32x8xbf16>
    %21 = vector.shape_cast %20 : vector<32x8xbf16> to vector<1x2x16x8xbf16>
    %22 = vector.extract_strided_slice %15 {offsets = [0, 24], sizes = [32, 8], strides = [1, 1]} : vector<32x32xbf16> to vector<32x8xbf16>
    %23 = vector.shape_cast %22 : vector<32x8xbf16> to vector<1x2x16x8xbf16>
    %24 = tpu.concatenate %17, %19, %21, %23 in 0 : vector<1x2x16x8xbf16>, vector<1x2x16x8xbf16>, vector<1x2x16x8xbf16>, vector<1x2x16x8xbf16> -> vector<4x2x16x8xbf16>
    %25 = vector.shape_cast %24 : vector<4x2x16x8xbf16> to vector<8x16x8xbf16>
    %26 = vector.extract_strided_slice %11 {offsets = [0, 32], sizes = [32, 32], strides = [1, 1]} : vector<32x96xf32> to vector<32x32xf32>
    %27 = arith.truncf %26 : vector<32x32xf32> to vector<32x32xbf16>
    %28 = vector.extract_strided_slice %27 {offsets = [0, 0], sizes = [32, 8], strides = [1, 1]} : vector<32x32xbf16> to vector<32x8xbf16>
    %29 = vector.shape_cast %28 : vector<32x8xbf16> to vector<1x2x16x8xbf16>
    %30 = vector.extract_strided_slice %27 {offsets = [0, 8], sizes = [32, 8], strides = [1, 1]} : vector<32x32xbf16> to vector<32x8xbf16>
    %31 = vector.shape_cast %30 : vector<32x8xbf16> to vector<1x2x16x8xbf16>
    %32 = vector.extract_strided_slice %27 {offsets = [0, 16], sizes = [32, 8], strides = [1, 1]} : vector<32x32xbf16> to vector<32x8xbf16>
    %33 = vector.shape_cast %32 : vector<32x8xbf16> to vector<1x2x16x8xbf16>
    %34 = vector.extract_strided_slice %27 {offsets = [0, 24], sizes = [32, 8], strides = [1, 1]} : vector<32x32xbf16> to vector<32x8xbf16>
    %35 = vector.shape_cast %34 : vector<32x8xbf16> to vector<1x2x16x8xbf16>
    %36 = tpu.concatenate %29, %31, %33, %35 in 0 : vector<1x2x16x8xbf16>, vector<1x2x16x8xbf16>, vector<1x2x16x8xbf16>, vector<1x2x16x8xbf16> -> vector<4x2x16x8xbf16>
    %37 = vector.shape_cast %36 : vector<4x2x16x8xbf16> to vector<8x16x8xbf16>
    %38 = vector.extract_strided_slice %11 {offsets = [0, 64], sizes = [32, 32], strides = [1, 1]} : vector<32x96xf32> to vector<32x32xf32>
    %39 = arith.truncf %38 : vector<32x32xf32> to vector<32x32xbf16>
    %40 = vector.extract_strided_slice %39 {offsets = [0, 0], sizes = [32, 8], strides = [1, 1]} : vector<32x32xbf16> to vector<32x8xbf16>
    %41 = vector.shape_cast %40 : vector<32x8xbf16> to vector<1x2x16x8xbf16>
    %42 = vector.extract_strided_slice %39 {offsets = [0, 8], sizes = [32, 8], strides = [1, 1]} : vector<32x32xbf16> to vector<32x8xbf16>
    %43 = vector.shape_cast %42 : vector<32x8xbf16> to vector<1x2x16x8xbf16>
    %44 = vector.extract_strided_slice %39 {offsets = [0, 16], sizes = [32, 8], strides = [1, 1]} : vector<32x32xbf16> to vector<32x8xbf16>
    %45 = vector.shape_cast %44 : vector<32x8xbf16> to vector<1x2x16x8xbf16>
    %46 = vector.extract_strided_slice %39 {offsets = [0, 24], sizes = [32, 8], strides = [1, 1]} : vector<32x32xbf16> to vector<32x8xbf16>
    %47 = vector.shape_cast %46 : vector<32x8xbf16> to vector<1x2x16x8xbf16>
    %48 = tpu.concatenate %41, %43, %45, %47 in 0 : vector<1x2x16x8xbf16>, vector<1x2x16x8xbf16>, vector<1x2x16x8xbf16>, vector<1x2x16x8xbf16> -> vector<4x2x16x8xbf16>
    %49 = vector.shape_cast %48 : vector<4x2x16x8xbf16> to vector<8x16x8xbf16>
    %cst_9 = arith.constant 0xFF800000 : f32
    %50 = vector.broadcast %cst_9 : f32 to vector<8x16x1xf32>
    %cst_10 = arith.constant 0.000000e+00 : f32
    %51 = vector.broadcast %cst_10 : f32 to vector<8x16x1xf32>
    %cst_11 = arith.constant 0.000000e+00 : f32
    %52 = vector.broadcast %cst_11 : f32 to vector<8x16x8xf32>
    "tpu.trace_start"() <{level = 10 : i32, message = "zqd,zkd->zqk"}> : () -> ()
    %cst_12 = arith.constant dense<0.000000e+00> : vector<8x16x16xf32>
    %53 = tpu.matmul %25, %37, %cst_12 {dimension_numbers = #tpu.dot_dimension_numbers<[2], [2], [1], [1], [0, 0, 0, 1, 1, 1], [0], [0]>} : vector<8x16x8xbf16>, vector<8x16x8xbf16>, vector<8x16x16xf32> -> vector<8x16x16xf32>
    "tpu.trace_stop"() : () -> ()
    %cst_13 = arith.constant dense<0xFF800000> : vector<8x16xf32>
    %54 = vector.multi_reduction <maximumf>, %53, %cst_13 [2] : vector<8x16x16xf32> to vector<8x16xf32>
    %55 = vector.shape_cast %54 : vector<8x16xf32> to vector<8x16x1xf32>
    %56 = arith.maximumf %50, %55 : vector<8x16x1xf32>
    %57 = arith.subf %50, %56 : vector<8x16x1xf32>
    %58 = math.exp %57 : vector<8x16x1xf32>
    %59 = vector.broadcast %56 : vector<8x16x1xf32> to vector<8x16x16xf32>
    %60 = arith.subf %53, %59 : vector<8x16x16xf32>
    %61 = math.exp %60 : vector<8x16x16xf32>
    %62 = arith.mulf %58, %51 : vector<8x16x1xf32>
    %cst_14 = arith.constant dense<0.000000e+00> : vector<8x16xf32>
    %63 = vector.multi_reduction <add>, %61, %cst_14 [2] : vector<8x16x16xf32> to vector<8x16xf32>
    %64 = vector.shape_cast %63 : vector<8x16xf32> to vector<8x16x1xf32>
    %65 = arith.addf %62, %64 : vector<8x16x1xf32>
    %66 = vector.broadcast %58 : vector<8x16x1xf32> to vector<8x16x8xf32>
    %67 = arith.mulf %66, %52 : vector<8x16x8xf32>
    %68 = arith.truncf %61 : vector<8x16x16xf32> to vector<8x16x16xbf16>
    "tpu.trace_start"() <{level = 10 : i32, message = "zqk,zkd->zqd"}> : () -> ()
    %cst_15 = arith.constant dense<0.000000e+00> : vector<8x16x8xf32>
    %69 = tpu.matmul %68, %49, %cst_15 {dimension_numbers = #tpu.dot_dimension_numbers<[2], [1], [1], [2], [0, 0, 0, 1, 1, 2], [0], [0]>} : vector<8x16x16xbf16>, vector<8x16x8xbf16>, vector<8x16x8xf32> -> vector<8x16x8xf32>
    "tpu.trace_stop"() : () -> ()
    %70 = arith.addf %67, %69 : vector<8x16x8xf32>
    %71 = tpu.reciprocal %65 {approx = true} : vector<8x16x1xf32> -> vector<8x16x1xf32>
    %72 = vector.broadcast %71 : vector<8x16x1xf32> to vector<8x16x8xf32>
    %73 = arith.mulf %70, %72 : vector<8x16x8xf32>
    %74 = vector.shape_cast %73 : vector<8x16x8xf32> to vector<4x32x8xf32>
    %75 = vector.extract_strided_slice %74 {offsets = [0, 0, 0], sizes = [1, 32, 8], strides = [1, 1, 1]} : vector<4x32x8xf32> to vector<1x32x8xf32>
    %76 = vector.shape_cast %75 : vector<1x32x8xf32> to vector<32x8xf32>
    %77 = vector.extract_strided_slice %74 {offsets = [1, 0, 0], sizes = [1, 32, 8], strides = [1, 1, 1]} : vector<4x32x8xf32> to vector<1x32x8xf32>
    %78 = vector.shape_cast %77 : vector<1x32x8xf32> to vector<32x8xf32>
    %79 = vector.extract_strided_slice %74 {offsets = [2, 0, 0], sizes = [1, 32, 8], strides = [1, 1, 1]} : vector<4x32x8xf32> to vector<1x32x8xf32>
    %80 = vector.shape_cast %79 : vector<1x32x8xf32> to vector<32x8xf32>
    %81 = vector.extract_strided_slice %74 {offsets = [3, 0, 0], sizes = [1, 32, 8], strides = [1, 1, 1]} : vector<4x32x8xf32> to vector<1x32x8xf32>
    %82 = vector.shape_cast %81 : vector<1x32x8xf32> to vector<32x8xf32>
    %83 = tpu.concatenate %76, %78, %80, %82 in 1 : vector<32x8xf32>, vector<32x8xf32>, vector<32x8xf32>, vector<32x8xf32> -> vector<32x32xf32>
    %84 = arith.truncf %83 : vector<32x32xf32> to vector<32x32xbf16>
    %c0_16 = arith.constant 0 : index
    %c0_17 = arith.constant 0 : index
    %c0_18 = arith.constant 0 : index
    %85 = vector.load %arg5[%c0_16, %c0_17, %c0_18] : memref<1x32x32xbf16, #tpu.memory_space<vmem>>, vector<1x32x32xbf16>
    %86 = vector.shape_cast %85 : vector<1x32x32xbf16> to vector<32x32xbf16>
    %cst_19 = arith.constant dense<0.000000e+00> : vector<32x32xf32>
    %87 = tpu.matmul %84, %86, %cst_19 {dimension_numbers = #tpu.dot_dimension_numbers<[1], [0], [0], [1], [0, 0, 1, 1], [], []>} : vector<32x32xbf16>, vector<32x32xbf16>, vector<32x32xf32> -> vector<32x32xf32>
    %c0_20 = arith.constant 0 : index
    %c0_21 = arith.constant 0 : index
    %c0_22 = arith.constant 0 : index
    %88 = vector.load %arg6[%c0_20, %c0_21, %c0_22] : memref<1x1x32xf32, #tpu.memory_space<vmem>>, vector<1x1x32xf32>
    %89 = vector.shape_cast %88 : vector<1x1x32xf32> to vector<1x32xf32>
    %90 = vector.broadcast %89 : vector<1x32xf32> to vector<32x32xf32>
    %91 = arith.addf %87, %90 : vector<32x32xf32>
    %92 = arith.addf %3, %91 : vector<32x32xf32>
    %c0_23 = arith.constant 0 : index
    %c0_24 = arith.constant 0 : index
    %c0_25 = arith.constant 0 : index
    %93 = vector.load %arg7[%c0_23, %c0_24, %c0_25] : memref<1x1x32xf32, #tpu.memory_space<vmem>>, vector<1x1x32xf32>
    %94 = vector.shape_cast %93 : vector<1x1x32xf32> to vector<1x32xf32>
    %c0_26 = arith.constant 0 : index
    %c0_27 = arith.constant 0 : index
    %c0_28 = arith.constant 0 : index
    %95 = vector.load %arg8[%c0_26, %c0_27, %c0_28] : memref<1x1x32xf32, #tpu.memory_space<vmem>>, vector<1x1x32xf32>
    %96 = vector.shape_cast %95 : vector<1x1x32xf32> to vector<1x32xf32>
    %cst_29 = arith.constant dense<0.000000e+00> : vector<32xf32>
    %97 = vector.multi_reduction <add>, %92, %cst_29 [1] : vector<32x32xf32> to vector<32xf32>
    %98 = vector.shape_cast %97 : vector<32xf32> to vector<32x1xf32>
    %cst_30 = arith.constant 3.200000e+01 : f32
    %99 = vector.broadcast %cst_30 : f32 to vector<32x1xf32>
    %100 = arith.divf %98, %99 : vector<32x1xf32>
    %101 = vector.broadcast %100 : vector<32x1xf32> to vector<32x32xf32>
    %102 = arith.subf %92, %101 : vector<32x32xf32>
    %103 = arith.mulf %102, %102 : vector<32x32xf32>
    %cst_31 = arith.constant dense<0.000000e+00> : vector<32xf32>
    %104 = vector.multi_reduction <add>, %103, %cst_31 [1] : vector<32x32xf32> to vector<32xf32>
    %105 = vector.shape_cast %104 : vector<32xf32> to vector<32x1xf32>
    %cst_32 = arith.constant 3.200000e+01 : f32
    %106 = vector.broadcast %cst_32 : f32 to vector<32x1xf32>
    %107 = arith.divf %105, %106 : vector<32x1xf32>
    %cst_33 = arith.constant 9.99999974E-6 : f32
    %108 = vector.broadcast %cst_33 : f32 to vector<32x1xf32>
    %109 = arith.addf %107, %108 : vector<32x1xf32>
    %110 = math.rsqrt %109 : vector<32x1xf32>
    %111 = vector.broadcast %110 : vector<32x1xf32> to vector<32x32xf32>
    %112 = arith.mulf %102, %111 : vector<32x32xf32>
    %113 = vector.broadcast %94 : vector<1x32xf32> to vector<32x32xf32>
    %114 = arith.mulf %112, %113 : vector<32x32xf32>
    %115 = vector.broadcast %96 : vector<1x32xf32> to vector<32x32xf32>
    %116 = arith.addf %114, %115 : vector<32x32xf32>
    %117 = arith.truncf %116 : vector<32x32xf32> to vector<32x32xbf16>
    %c0_34 = arith.constant 0 : index
    %c0_35 = arith.constant 0 : index
    %c0_36 = arith.constant 0 : index
    %118 = vector.load %arg9[%c0_34, %c0_35, %c0_36] : memref<1x32x128xbf16, #tpu.memory_space<vmem>>, vector<1x32x128xbf16>
    %119 = vector.shape_cast %118 : vector<1x32x128xbf16> to vector<32x128xbf16>
    %cst_37 = arith.constant dense<0.000000e+00> : vector<32x128xf32>
    %120 = tpu.matmul %117, %119, %cst_37 {dimension_numbers = #tpu.dot_dimension_numbers<[1], [0], [0], [1], [0, 0, 1, 1], [], []>} : vector<32x32xbf16>, vector<32x128xbf16>, vector<32x128xf32> -> vector<32x128xf32>
    %c0_38 = arith.constant 0 : index
    %c0_39 = arith.constant 0 : index
    %c0_40 = arith.constant 0 : index
    %121 = vector.load %arg10[%c0_38, %c0_39, %c0_40] : memref<1x1x128xf32, #tpu.memory_space<vmem>>, vector<1x1x128xf32>
    %122 = vector.shape_cast %121 : vector<1x1x128xf32> to vector<1x128xf32>
    %123 = vector.broadcast %122 : vector<1x128xf32> to vector<32x128xf32>
    %124 = arith.addf %120, %123 : vector<32x128xf32>
    %cst_41 = arith.constant 0.000000e+00 : f32
    %125 = vector.broadcast %cst_41 : f32 to vector<32x128xf32>
    %126 = arith.maximumf %124, %125 : vector<32x128xf32>
    %127 = arith.truncf %126 : vector<32x128xf32> to vector<32x128xbf16>
    %c0_42 = arith.constant 0 : index
    %c0_43 = arith.constant 0 : index
    %c0_44 = arith.constant 0 : index
    %128 = vector.load %arg11[%c0_42, %c0_43, %c0_44] : memref<1x128x32xbf16, #tpu.memory_space<vmem>>, vector<1x128x32xbf16>
    %129 = vector.shape_cast %128 : vector<1x128x32xbf16> to vector<128x32xbf16>
    %cst_45 = arith.constant dense<0.000000e+00> : vector<32x32xf32>
    %130 = tpu.matmul %127, %129, %cst_45 {dimension_numbers = #tpu.dot_dimension_numbers<[1], [0], [0], [1], [0, 0, 1, 1], [], []>} : vector<32x128xbf16>, vector<128x32xbf16>, vector<32x32xf32> -> vector<32x32xf32>
    %c0_46 = arith.constant 0 : index
    %c0_47 = arith.constant 0 : index
    %c0_48 = arith.constant 0 : index
    %131 = vector.load %arg12[%c0_46, %c0_47, %c0_48] : memref<1x1x32xf32, #tpu.memory_space<vmem>>, vector<1x1x32xf32>
    %132 = vector.shape_cast %131 : vector<1x1x32xf32> to vector<1x32xf32>
    %133 = vector.broadcast %132 : vector<1x32xf32> to vector<32x32xf32>
    %134 = arith.addf %130, %133 : vector<32x32xf32>
    %135 = arith.addf %116, %134 : vector<32x32xf32>
    %c0_49 = arith.constant 0 : index
    %c0_50 = arith.constant 0 : index
    %c0_51 = arith.constant 0 : index
    %136 = vector.load %arg13[%c0_49, %c0_50, %c0_51] : memref<1x1x32xf32, #tpu.memory_space<vmem>>, vector<1x1x32xf32>
    %137 = vector.shape_cast %136 : vector<1x1x32xf32> to vector<1x32xf32>
    %c0_52 = arith.constant 0 : index
    %c0_53 = arith.constant 0 : index
    %c0_54 = arith.constant 0 : index
    %138 = vector.load %arg14[%c0_52, %c0_53, %c0_54] : memref<1x1x32xf32, #tpu.memory_space<vmem>>, vector<1x1x32xf32>
    %139 = vector.shape_cast %138 : vector<1x1x32xf32> to vector<1x32xf32>
    %cst_55 = arith.constant dense<0.000000e+00> : vector<32xf32>
    %140 = vector.multi_reduction <add>, %135, %cst_55 [1] : vector<32x32xf32> to vector<32xf32>
    %141 = vector.shape_cast %140 : vector<32xf32> to vector<32x1xf32>
    %cst_56 = arith.constant 3.200000e+01 : f32
    %142 = vector.broadcast %cst_56 : f32 to vector<32x1xf32>
    %143 = arith.divf %141, %142 : vector<32x1xf32>
    %144 = vector.broadcast %143 : vector<32x1xf32> to vector<32x32xf32>
    %145 = arith.subf %135, %144 : vector<32x32xf32>
    %146 = arith.mulf %145, %145 : vector<32x32xf32>
    %cst_57 = arith.constant dense<0.000000e+00> : vector<32xf32>
    %147 = vector.multi_reduction <add>, %146, %cst_57 [1] : vector<32x32xf32> to vector<32xf32>
    %148 = vector.shape_cast %147 : vector<32xf32> to vector<32x1xf32>
    %cst_58 = arith.constant 3.200000e+01 : f32
    %149 = vector.broadcast %cst_58 : f32 to vector<32x1xf32>
    %150 = arith.divf %148, %149 : vector<32x1xf32>
    %cst_59 = arith.constant 9.99999974E-6 : f32
    %151 = vector.broadcast %cst_59 : f32 to vector<32x1xf32>
    %152 = arith.addf %150, %151 : vector<32x1xf32>
    %153 = math.rsqrt %152 : vector<32x1xf32>
    %154 = vector.broadcast %153 : vector<32x1xf32> to vector<32x32xf32>
    %155 = arith.mulf %145, %154 : vector<32x32xf32>
    %156 = vector.broadcast %137 : vector<1x32xf32> to vector<32x32xf32>
    %157 = arith.mulf %155, %156 : vector<32x32xf32>
    %158 = vector.broadcast %139 : vector<1x32xf32> to vector<32x32xf32>
    %159 = arith.addf %157, %158 : vector<32x32xf32>
    %c0_60 = arith.constant 0 : index
    %c0_61 = arith.constant 0 : index
    %160 = vector.load %arg20[%c0_60, %c0_61] : memref<32x32xf32, #tpu.memory_space<vmem>>, vector<32x32xf32>
    tpu.vector_store %arg20[%c0_60, %c0_61], %159 {strides = array<i32>} : memref<32x32xf32, #tpu.memory_space<vmem>>, vector<32x32xf32>,
    %c1_i32 = arith.constant 1 : i32
    %161 = arith.cmpi eq, %arg1, %c1_i32 : i32
    %162 = arith.extui %161 : i1 to i32
    %c0_i32_62 = arith.constant 0 : i32
    %163 = arith.cmpi ne, %162, %c0_i32_62 : i32
    scf.if %163 {
      %c0_63 = arith.constant 0 : index
      %c0_64 = arith.constant 0 : index
      %164 = vector.load %arg15[%c0_63, %c0_64] : memref<1x32xf32, #tpu.memory_space<vmem>>, vector<1x32xf32>
      %c0_65 = arith.constant 0 : index
      %c0_66 = arith.constant 0 : index
      %165 = vector.load %arg16[%c0_65, %c0_66] : memref<1x32xf32, #tpu.memory_space<vmem>>, vector<1x32xf32>
      %cst_67 = arith.constant dense<0.000000e+00> : vector<32xf32>
      %166 = vector.multi_reduction <add>, %159, %cst_67 [1] : vector<32x32xf32> to vector<32xf32>
      %167 = vector.shape_cast %166 : vector<32xf32> to vector<32x1xf32>
      %cst_68 = arith.constant 3.200000e+01 : f32
      %168 = vector.broadcast %cst_68 : f32 to vector<32x1xf32>
      %169 = arith.divf %167, %168 : vector<32x1xf32>
      %170 = vector.broadcast %169 : vector<32x1xf32> to vector<32x32xf32>
      %171 = arith.subf %159, %170 : vector<32x32xf32>
      %172 = arith.mulf %171, %171 : vector<32x32xf32>
      %cst_69 = arith.constant dense<0.000000e+00> : vector<32xf32>
      %173 = vector.multi_reduction <add>, %172, %cst_69 [1] : vector<32x32xf32> to vector<32xf32>
      %174 = vector.shape_cast %173 : vector<32xf32> to vector<32x1xf32>
      %cst_70 = arith.constant 3.200000e+01 : f32
      %175 = vector.broadcast %cst_70 : f32 to vector<32x1xf32>
      %176 = arith.divf %174, %175 : vector<32x1xf32>
      %cst_71 = arith.constant 9.99999974E-6 : f32
      %177 = vector.broadcast %cst_71 : f32 to vector<32x1xf32>
      %178 = arith.addf %176, %177 : vector<32x1xf32>
      %179 = math.rsqrt %178 : vector<32x1xf32>
      %180 = vector.broadcast %179 : vector<32x1xf32> to vector<32x32xf32>
      %181 = arith.mulf %171, %180 : vector<32x32xf32>
      %182 = vector.broadcast %164 : vector<1x32xf32> to vector<32x32xf32>
      %183 = arith.mulf %181, %182 : vector<32x32xf32>
      %184 = vector.broadcast %165 : vector<1x32xf32> to vector<32x32xf32>
      %185 = arith.addf %183, %184 : vector<32x32xf32>
      %186 = vector.shape_cast %185 : vector<32x32xf32> to vector<2x16x32xf32>
      %cst_72 = arith.constant dense<0xFF800000> : vector<2x32xf32>
      %187 = vector.multi_reduction <maximumf>, %186, %cst_72 [1] : vector<2x16x32xf32> to vector<2x32xf32>
      %c0_73 = arith.constant 0 : index
      %c0_74 = arith.constant 0 : index
      %188 = vector.load %arg17[%c0_73, %c0_74] : memref<32x10xf32, #tpu.memory_space<vmem>>, vector<32x10xf32>
      %cst_75 = arith.constant dense<0.000000e+00> : vector<2x10xf32>
      %189 = tpu.matmul %187, %188, %cst_75 {dimension_numbers = #tpu.dot_dimension_numbers<[1], [0], [0], [1], [0, 0, 1, 1], [], []>} : vector<2x32xf32>, vector<32x10xf32>, vector<2x10xf32> -> vector<2x10xf32>
      %c0_76 = arith.constant 0 : index
      %c0_77 = arith.constant 0 : index
      %190 = vector.load %arg18[%c0_76, %c0_77] : memref<1x10xf32, #tpu.memory_space<vmem>>, vector<1x10xf32>
      %191 = vector.broadcast %190 : vector<1x10xf32> to vector<2x10xf32>
      %192 = arith.addf %189, %191 : vector<2x10xf32>
      %c0_78 = arith.constant 0 : index
      %c0_79 = arith.constant 0 : index
      %193 = vector.load %arg19[%c0_78, %c0_79] : memref<2x10xf32, #tpu.memory_space<vmem>>, vector<2x10xf32>
      tpu.vector_store %arg19[%c0_78, %c0_79], %192 {strides = array<i32>} : memref<2x10xf32, #tpu.memory_space<vmem>>, vector<2x10xf32>,
    } else {
    }
    return
  }
  func.func @transform_0(%arg0: i32, %arg1: i32) -> (i32, i32) {
    %c0_i32 = arith.constant 0 : i32
    %c0_i32_0 = arith.constant 0 : i32
    return %arg0, %c0_i32 : i32, i32
  }
  func.func @transform_1(%arg0: i32, %arg1: i32) -> (i32, i32, i32) {
    %c0_i32 = arith.constant 0 : i32
    %c0_i32_0 = arith.constant 0 : i32
    %c0_i32_1 = arith.constant 0 : i32
    return %arg1, %c0_i32, %c0_i32_0 : i32, i32, i32
  }
  func.func @transform_2(%arg0: i32, %arg1: i32) -> (i32, i32, i32) {
    %c0_i32 = arith.constant 0 : i32
    %c0_i32_0 = arith.constant 0 : i32
    %c0_i32_1 = arith.constant 0 : i32
    return %arg1, %c0_i32, %c0_i32_0 : i32, i32, i32
  }
  func.func @transform_3(%arg0: i32, %arg1: i32) -> (i32, i32, i32) {
    %c0_i32 = arith.constant 0 : i32
    %c0_i32_0 = arith.constant 0 : i32
    %c0_i32_1 = arith.constant 0 : i32
    return %arg1, %c0_i32, %c0_i32_0 : i32, i32, i32
  }
  func.func @transform_4(%arg0: i32, %arg1: i32) -> (i32, i32, i32) {
    %c0_i32 = arith.constant 0 : i32
    %c0_i32_0 = arith.constant 0 : i32
    %c0_i32_1 = arith.constant 0 : i32
    return %arg1, %c0_i32, %c0_i32_0 : i32, i32, i32
  }
  func.func @transform_5(%arg0: i32, %arg1: i32) -> (i32, i32, i32) {
    %c0_i32 = arith.constant 0 : i32
    %c0_i32_0 = arith.constant 0 : i32
    %c0_i32_1 = arith.constant 0 : i32
    return %arg1, %c0_i32, %c0_i32_0 : i32, i32, i32
  }
  func.func @transform_6(%arg0: i32, %arg1: i32) -> (i32, i32, i32) {
    %c0_i32 = arith.constant 0 : i32
    %c0_i32_0 = arith.constant 0 : i32
    %c0_i32_1 = arith.constant 0 : i32
    return %arg1, %c0_i32, %c0_i32_0 : i32, i32, i32
  }
  func.func @transform_7(%arg0: i32, %arg1: i32) -> (i32, i32, i32) {
    %c0_i32 = arith.constant 0 : i32
    %c0_i32_0 = arith.constant 0 : i32
    %c0_i32_1 = arith.constant 0 : i32
    return %arg1, %c0_i32, %c0_i32_0 : i32, i32, i32
  }
  func.func @transform_8(%arg0: i32, %arg1: i32) -> (i32, i32, i32) {
    %c0_i32 = arith.constant 0 : i32
    %c0_i32_0 = arith.constant 0 : i32
    %c0_i32_1 = arith.constant 0 : i32
    return %arg1, %c0_i32, %c0_i32_0 : i32, i32, i32
  }
  func.func @transform_9(%arg0: i32, %arg1: i32) -> (i32, i32, i32) {
    %c0_i32 = arith.constant 0 : i32
    %c0_i32_0 = arith.constant 0 : i32
    %c0_i32_1 = arith.constant 0 : i32
    return %arg1, %c0_i32, %c0_i32_0 : i32, i32, i32
  }
  func.func @transform_10(%arg0: i32, %arg1: i32) -> (i32, i32, i32) {
    %c0_i32 = arith.constant 0 : i32
    %c0_i32_0 = arith.constant 0 : i32
    %c0_i32_1 = arith.constant 0 : i32
    return %arg1, %c0_i32, %c0_i32_0 : i32, i32, i32
  }
  func.func @transform_11(%arg0: i32, %arg1: i32) -> (i32, i32, i32) {
    %c0_i32 = arith.constant 0 : i32
    %c0_i32_0 = arith.constant 0 : i32
    %c0_i32_1 = arith.constant 0 : i32
    return %arg1, %c0_i32, %c0_i32_0 : i32, i32, i32
  }
  func.func @transform_12(%arg0: i32, %arg1: i32) -> (i32, i32, i32) {
    %c0_i32 = arith.constant 0 : i32
    %c0_i32_0 = arith.constant 0 : i32
    %c0_i32_1 = arith.constant 0 : i32
    return %arg1, %c0_i32, %c0_i32_0 : i32, i32, i32
  }
  func.func @transform_13(%arg0: i32, %arg1: i32) -> (i32, i32) {
    %c0_i32 = arith.constant 0 : i32
    %c0_i32_0 = arith.constant 0 : i32
    %c0_i32_1 = arith.constant 0 : i32
    return %c0_i32, %c0_i32_0 : i32, i32
  }
  func.func @transform_14(%arg0: i32, %arg1: i32) -> (i32, i32) {
    %c0_i32 = arith.constant 0 : i32
    %c0_i32_0 = arith.constant 0 : i32
    %c0_i32_1 = arith.constant 0 : i32
    return %c0_i32, %c0_i32_0 : i32, i32
  }
  func.func @transform_15(%arg0: i32, %arg1: i32) -> (i32, i32) {
    %c0_i32 = arith.constant 0 : i32
    %c0_i32_0 = arith.constant 0 : i32
    %c0_i32_1 = arith.constant 0 : i32
    return %c0_i32, %c0_i32_0 : i32, i32
  }
  func.func @transform_16(%arg0: i32, %arg1: i32) -> (i32, i32) {
    %c0_i32 = arith.constant 0 : i32
    %c0_i32_0 = arith.constant 0 : i32
    %c0_i32_1 = arith.constant 0 : i32
    return %c0_i32, %c0_i32_0 : i32, i32
  }
  func.func @transform_17(%arg0: i32, %arg1: i32) -> (i32, i32) {
    %c0_i32 = arith.constant 0 : i32
    %c0_i32_0 = arith.constant 0 : i32
    return %arg0, %c0_i32 : i32, i32
  }
}

</mosaic_0001>

<llo_original>
// kernel: enhanced_geometric_transformer_forward.2
$region0: #{enhanced_geometric_transformer_forward.2}
  #allocation0 [shape = 'u32[]', space=smem, size = 0x4, offset = 0x4, fixed_abs, tag = 'smem constant byte address 0x4 - core index']
  #allocation1 [shape = 'u32[144,128]{1,0:T(1,128)}', space=vmem, size = 0x12000, scoped, tag = 'internal scratch']
  %s0 = inlined_call_operand.hbm [shape: f32[2,16,32], index: 0, kind: input, shape index: {}]
  %s1 = inlined_call_operand.hbm [shape: f32[2,16,32], index: 1, kind: input, shape index: {}]
  %s2 = inlined_call_operand.vmem [shape: f32[32,32], index: 2, kind: output, shape index: {}]
  %s3 = sld [smem:[#allocation0]]
  $region26: #{enhanced_geometric_transformer_forward.2} parent=0
    _
  %s5 = ssub.s32 1, %s3
  %s6 = scalar_select 0, %s5, %s3
  $region1: #{enhanced_geometric_transformer_forward.2} parent=0
    #allocation2 [shape = 'u8[16384]{0}', space=vmem, size = 0x4000, scoped, tag = 'input window, operand 0, single buffered']
    #allocation3 [shape = 's32[1]{0}', space=sflag, size = 0x4, scoped, tag = 'scoped memory for enhanced_geometric_transformer_forward.2']
    #allocation4 [shape = 'u8[16384]{0}', space=vmem, size = 0x4000, scoped, tag = 'input window, operand 1, single buffered']
    #allocation5 [shape = 's32[1]{0}', space=sflag, size = 0x4, scoped, tag = 'scoped memory for enhanced_geometric_transformer_forward.2']
    %7 = vsyncpa [#allocation3], 0
    %8 = vsyncpa [#allocation5], 0
    // Predicated region
    $region2: #{enhanced_geometric_transformer_forward.2} parent=1 // pred_check
      _
    $region3: #{enhanced_geometric_transformer_forward.2} parent=1 // pred_check_branch
      %10 = sbr.rel (0) target = $region5
    $region4: #{enhanced_geometric_transformer_forward.2} parent=1 // pred_region
      %s12 = ssub.s32 512, 512
      %13 = vsyncadd [#allocation3], %s12
      %s14 = sshll.u32 [#allocation2], 4
      %s15 = int_to_ptr.vmem [resolvable:$true] %s14
      %20 = dma.hbm_to_vmem [thread:$0]  %s0, 512, %s15, [#allocation3], 128, 128, 8
    $region5: #{enhanced_geometric_transformer_forward.2} parent=1 // pred_fallthru
      _
    // Predicated region
    $region6: #{enhanced_geometric_transformer_forward.2} parent=1 // pred_check
      _
    $region7: #{enhanced_geometric_transformer_forward.2} parent=1 // pred_check_branch
      %22 = sbr.rel (0) target = $region9
    $region8: #{enhanced_geometric_transformer_forward.2} parent=1 // pred_region
      %s24 = ssub.s32 512, 512
      %25 = vsyncadd [#allocation5], %s24
      %s26 = sshll.u32 [#allocation4], 4
      %s27 = int_to_ptr.vmem [resolvable:$true] %s26
      %32 = dma.hbm_to_vmem [thread:$0]  %s1, 512, %s27, [#allocation5], 128, 128, 8
    $region9: #{enhanced_geometric_transformer_forward.2} parent=1 // pred_fallthru
      _
    // Predicated region
    $region10: #{enhanced_geometric_transformer_forward.2} parent=1 // pred_check
      _
    $region11: #{enhanced_geometric_transformer_forward.2} parent=1 // pred_check_branch
      %34 = sbr.rel (0) target = $region13
    $region12: #{enhanced_geometric_transformer_forward.2} parent=1 // pred_region
      %35 = dma.done [#allocation3], 512
    $region13: #{enhanced_geometric_transformer_forward.2} parent=1 // pred_fallthru
      _
    // Predicated region
    $region14: #{enhanced_geometric_transformer_forward.2} parent=1 // pred_check
      _
    $region15: #{enhanced_geometric_transformer_forward.2} parent=1 // pred_check_branch
      %37 = sbr.rel (0) target = $region17
    $region16: #{enhanced_geometric_transformer_forward.2} parent=1 // pred_region
      %38 = dma.done [#allocation5], 512
    $region17: #{enhanced_geometric_transformer_forward.2} parent=1 // pred_fallthru
      _
    %v39 = vld [vmem:[#allocation2] sm:$0xff]
    %v40 = vld [vmem:[#allocation2 + $0x8] sm:$0xff]
    %v41 = vld [vmem:[#allocation2 + $0x10] sm:$0xff]
    %v42 = vld [vmem:[#allocation2 + $0x18] sm:$0xff]
    %v43 = vld [vmem:[#allocation4] sm:$0xff]
    %v44 = vld [vmem:[#allocation4 + $0x8] sm:$0xff]
    %v45 = vld [vmem:[#allocation4 + $0x10] sm:$0xff]
    %v46 = vld [vmem:[#allocation4 + $0x18] sm:$0xff]
    %vm47 = vcmask 261120
    %v49 = vsel %vm47, %v39, 0
    %v52 = vsel %vm47, %v40, 0
    %54 = vmatprep.subr.mxu0 0.0
    %55 = vmatpush1.xpose.msra.mxu0 %v49
    %56 = vmatprep.subr.mxu0 0.0
    %57 = vmatpush1.xpose.msra.mxu0 %v52
    %58 = vmatprep.subr.mxu0 0.0
    %59 = vmatpush1.xpose.msra.mxu0 0.0
    %60 = vmatprep.subr.mxu0 0.0
    %61 = vmatpush1.xpose.msra.mxu0 0.0
    %62 = vmatprep.subr.mxu0 0.0
    %63 = vmatpush1.xpose.msra.mxu0 0.0
    %64 = vmatprep.subr.mxu0 0.0
    %65 = vmatpush1.xpose.msra.mxu0 0.0
    %66 = vmatprep.subr.mxu0 0.0
    %67 = vmatpush1.xpose.msra.mxu0 0.0
    %68 = vmatprep.subr.mxu0 0.0
    %69 = vmatpush1.xpose.msra.mxu0 0.0
    %70 = vmatprep.subr.mxu0 0.0
    %71 = vmatpush1.xpose.msra.mxu0 0.0
    %72 = vmatprep.subr.mxu0 0.0
    %73 = vmatpush1.xpose.msra.mxu0 0.0
    %74 = vmatprep.subr.mxu0 0.0
    %75 = vmatpush1.xpose.msra.mxu0 0.0
    %76 = vmatprep.subr.mxu0 0.0
    %77 = vmatpush1.xpose.msra.mxu0 0.0
    %78 = vmatprep.subr.mxu0 0.0
    %79 = vmatpush1.xpose.msra.mxu0 0.0
    %80 = vmatprep.subr.mxu0 0.0
    %81 = vmatpush1.xpose.msra.mxu0 0.0
    %82 = vmatprep.subr.mxu0 0.0
    %83 = vmatpush1.xpose.msra.mxu0 0.0
    %84 = vmatprep.subr.mxu0 0.0
    %85 = vmatpush1.xpose.msra.mxu0 0.0
    %86 = vmatprep.subr.mxu0 0.0
    %87 = vmatpush1.xpose.msra.mxu0 0.0
    %88 = vmatprep.subr.mxu0 0.0
    %89 = vmatpush1.xpose.msra.mxu0 0.0
    %90 = vmatprep.subr.mxu0 0.0
    %91 = vmatpush1.xpose.msra.mxu0 0.0
    %92 = vmatprep.subr.mxu0 0.0
    %93 = vmatpush1.xpose.msra.mxu0 0.0
    %94 = vmatprep.subr.mxu0 0.0
    %95 = vmatpush1.xpose.msra.mxu0 0.0
    %96 = vmatprep.subr.mxu0 0.0
    %97 = vmatpush1.xpose.msra.mxu0 0.0
    %98 = vmatprep.subr.mxu0 0.0
    %99 = vmatpush1.xpose.msra.mxu0 0.0
    %100 = vmatprep.subr.mxu0 0.0
    %101 = vmatpush1.xpose.msra.mxu0 0.0
    %102 = vmatprep.subr.mxu0 0.0
    %103 = vmatpush1.xpose.msra.mxu0 0.0
    %104 = vmatprep.subr.mxu0 0.0
    %105 = vmatpush1.xpose.msra.mxu0 0.0
    %106 = vmatprep.subr.mxu0 0.0
    %107 = vmatpush1.xpose.msra.mxu0 0.0
    %108 = vmatprep.subr.mxu0 0.0
    %109 = vmatpush1.xpose.msra.mxu0 0.0
    %110 = vmatprep.subr.mxu0 0.0
    %111 = vmatpush1.xpose.msra.mxu0 0.0
    %112 = vmatprep.subr.mxu0 0.0
    %113 = vmatpush1.xpose.msra.mxu0 0.0
    %114 = vmatprep.subr.mxu0 0.0
    %115 = vmatpush1.xpose.msra.mxu0 0.0
    %116 = vmatprep.subr.mxu0 0.0
    %117 = vmatpush1.xpose.msra.mxu0 0.0
    %118 = vmatprep.mubr.f32.mxu0 0.0
    %119 = vmatmul.mubr.f32.gmra.mrb[0].mxu0 %v49
    %v120 = vpop.f32.mrb[0].mxu0
    %v121 = vadd.f32 0.0, %v120
    %v122 = vpop.f32.mrb[0].mxu0
    %123 = vmatprep.mubr.f32.mxu0 0.0
    %124 = vmatmul.mubr.f32.gmra.mrb[0].mxu0 %v52
    %v125 = vpop.f32.mrb[0].mxu0
    %v126 = vadd.f32 0.0, %v125
    %v127 = vpop.f32.mrb[0].mxu0
    %128 = vdwg.mxu0
    %v130 = vsel %vm47, %v41, 0
    %v133 = vsel %vm47, %v42, 0
    %135 = vmatprep.subr.mxu0 0.0
    %136 = vmatpush1.xpose.msra.mxu0 %v130
    %137 = vmatprep.subr.mxu0 0.0
    %138 = vmatpush1.xpose.msra.mxu0 %v133
    %139 = vmatprep.subr.mxu0 0.0
    %140 = vmatpush1.xpose.msra.mxu0 0.0
    %141 = vmatprep.subr.mxu0 0.0
    %142 = vmatpush1.xpose.msra.mxu0 0.0
    %143 = vmatprep.subr.mxu0 0.0
    %144 = vmatpush1.xpose.msra.mxu0 0.0
    %145 = vmatprep.subr.mxu0 0.0
    %146 = vmatpush1.xpose.msra.mxu0 0.0
    %147 = vmatprep.subr.mxu0 0.0
    %148 = vmatpush1.xpose.msra.mxu0 0.0
    %149 = vmatprep.subr.mxu0 0.0
    %150 = vmatpush1.xpose.msra.mxu0 0.0
    %151 = vmatprep.subr.mxu0 0.0
    %152 = vmatpush1.xpose.msra.mxu0 0.0
    %153 = vmatprep.subr.mxu0 0.0
    %154 = vmatpush1.xpose.msra.mxu0 0.0
    %155 = vmatprep.subr.mxu0 0.0
    %156 = vmatpush1.xpose.msra.mxu0 0.0
    %157 = vmatprep.subr.mxu0 0.0
    %158 = vmatpush1.xpose.msra.mxu0 0.0
    %159 = vmatprep.subr.mxu0 0.0
    %160 = vmatpush1.xpose.msra.mxu0 0.0
    %161 = vmatprep.subr.mxu0 0.0
    %162 = vmatpush1.xpose.msra.mxu0 0.0
    %163 = vmatprep.subr.mxu0 0.0
    %164 = vmatpush1.xpose.msra.mxu0 0.0
    %165 = vmatprep.subr.mxu0 0.0
    %166 = vmatpush1.xpose.msra.mxu0 0.0
    %167 = vmatprep.subr.mxu0 0.0
    %168 = vmatpush1.xpose.msra.mxu0 0.0
    %169 = vmatprep.subr.mxu0 0.0
    %170 = vmatpush1.xpose.msra.mxu0 0.0
    %171 = vmatprep.subr.mxu0 0.0
    %172 = vmatpush1.xpose.msra.mxu0 0.0
    %173 = vmatprep.subr.mxu0 0.0
    %174 = vmatpush1.xpose.msra.mxu0 0.0
    %175 = vmatprep.subr.mxu0 0.0
    %176 = vmatpush1.xpose.msra.mxu0 0.0
    %177 = vmatprep.subr.mxu0 0.0
    %178 = vmatpush1.xpose.msra.mxu0 0.0
    %179 = vmatprep.subr.mxu0 0.0
    %180 = vmatpush1.xpose.msra.mxu0 0.0
    %181 = vmatprep.subr.mxu0 0.0
    %182 = vmatpush1.xpose.msra.mxu0 0.0
    %183 = vmatprep.subr.mxu0 0.0
    %184 = vmatpush1.xpose.msra.mxu0 0.0
    %185 = vmatprep.subr.mxu0 0.0
    %186 = vmatpush1.xpose.msra.mxu0 0.0
    %187 = vmatprep.subr.mxu0 0.0
    %188 = vmatpush1.xpose.msra.mxu0 0.0
    %189 = vmatprep.subr.mxu0 0.0
    %190 = vmatpush1.xpose.msra.mxu0 0.0
    %191 = vmatprep.subr.mxu0 0.0
    %192 = vmatpush1.xpose.msra.mxu0 0.0
    %193 = vmatprep.subr.mxu0 0.0
    %194 = vmatpush1.xpose.msra.mxu0 0.0
    %195 = vmatprep.subr.mxu0 0.0
    %196 = vmatpush1.xpose.msra.mxu0 0.0
    %197 = vmatprep.subr.mxu0 0.0
    %198 = vmatpush1.xpose.msra.mxu0 0.0
    %199 = vmatprep.mubr.f32.mxu0 0.0
    %200 = vmatmul.mubr.f32.gmra.mrb[0].mxu0 %v130
    %v201 = vpop.f32.mrb[0].mxu0
    %v202 = vadd.f32 0.0, %v201
    %v203 = vpop.f32.mrb[0].mxu0
    %204 = vmatprep.mubr.f32.mxu0 0.0
    %205 = vmatmul.mubr.f32.gmra.mrb[0].mxu0 %v133
    %v206 = vpop.f32.mrb[0].mxu0
    %v207 = vadd.f32 0.0, %v206
    %v208 = vpop.f32.mrb[0].mxu0
    %209 = vdwg.mxu0
    %v210 = vmul.f32 %v39, %v39
    %v211 = vmul.f32 %v40, %v40
    %v212 = vmul.f32 %v41, %v41
    %v213 = vmul.f32 %v42, %v42
    %v214 = vsel %vm47, %v210, 0.0
    %215 = vadd.xlane.f32.xlu0 %v214
    %v216 = vpop.xlane.xlu0 %215
    %v217 = vsel %vm47, %v211, 0.0
    %218 = vadd.xlane.f32.xlu0 %v217
    %v219 = vpop.xlane.xlu0 %218
    %v220 = vsel %vm47, %v212, 0.0
    %221 = vadd.xlane.f32.xlu0 %v220
    %v222 = vpop.xlane.xlu0 %221
    %v223 = vsel %vm47, %v213, 0.0
    %224 = vadd.xlane.f32.xlu0 %v223
    %v225 = vpop.xlane.xlu0 %224
    %v230 = vlaneseq
    %v231 = vand.u32 %v230, 127
    %v232 = vlaneseq
    %v233 = vshrl.u32 %v232, 7
    %v234 = vsub.s32 %v231, %v233
    %v235 = vrot.slane %v216, %v234
    %v236 = vadd.s32 %v231, 4294967288
    %v237 = vlaneseq
    %v238 = vshrl.u32 %v237, 7
    %v239 = vsub.s32 %v236, %v238
    %v240 = vrot.slane %v219, %v239
    %vm241 = vcmask 130112
    %v242 = vsel %vm241, %v240, %v235
    %v243 = vlaneseq
    %v244 = vshrl.u32 %v243, 7
    %v245 = vsub.s32 %v231, %v244
    %v246 = vrot.slane %v222, %v245
    %v247 = vlaneseq
    %v248 = vshrl.u32 %v247, 7
    %v249 = vsub.s32 %v236, %v248
    %v250 = vrot.slane %v225, %v249
    %v251 = vsel %vm241, %v250, %v246
    %vm252 = vcmask 1042434
    %v253 = vsel %vm252, %v242, %v242
    %vm254 = vcmask 1043459
    %v255 = vsel %vm254, %v242, %v253
    %vm256 = vcmask 1044484
    %v257 = vsel %vm256, %v242, %v255
    %vm258 = vcmask 1045509
    %v259 = vsel %vm258, %v242, %v257
    %vm260 = vcmask 1046534
    %v261 = vsel %vm260, %v242, %v259
    %vm262 = vcmask 1047559
    %v263 = vsel %vm262, %v242, %v261
    %v264 = vsel %vm252, %v251, %v251
    %v265 = vsel %vm254, %v251, %v264
    %v266 = vsel %vm256, %v251, %v265
    %v267 = vsel %vm258, %v251, %v266
    %v268 = vsel %vm260, %v251, %v267
    %v269 = vsel %vm262, %v251, %v268
    %v272 = vadd.f32 %v216, %v263
    %v273 = vadd.f32 %v219, %v263
    %v274 = vadd.f32 %v222, %v269
    %v275 = vadd.f32 %v225, %v269
    %v276 = vmul.f32 %v121, 2.0
    %v277 = vmul.f32 %v126, 2.0
    %v278 = vmul.f32 %v202, 2.0
    %v279 = vmul.f32 %v207, 2.0
    %v280 = vsub.f32 %v272, %v276
    %v281 = vsub.f32 %v273, %v277
    %v282 = vsub.f32 %v274, %v278
    %v283 = vsub.f32 %v275, %v279
    %v284 = vmax.f32 %v280, 0.0
    %v285 = vmax.f32 %v281, 0.0
    %v286 = vmax.f32 %v282, 0.0
    %v287 = vmax.f32 %v283, 0.0
    %v288 = vmul.f32 %v284, -0.5
    %v289 = vmul.f32 %v285, -0.5
    %v290 = vmul.f32 %v286, -0.5
    %v291 = vmul.f32 %v287, -0.5
    %v292 = vmul.f32 %v288, 1.442695
    %v293 = vpow.pop %v292
    %v294 = vmul.f32 %v289, 1.442695
    %v295 = vpow.pop %v294
    %v296 = vmul.f32 %v290, 1.442695
    %v297 = vpow.pop %v296
    %v298 = vmul.f32 %v291, 1.442695
    %v299 = vpow.pop %v298
    %vm300 = vcmask 130048
    %v302 = vsel %vm300, %v293, 0
    %v305 = vsel %vm300, %v295, 0
    %307 = vmatprep.subr.mxu0 0.0
    %308 = vmatpush1.msra.mxu0 %v43
    %309 = vmatprep.subr.mxu0 0.0
    %310 = vmatpush1.msra.mxu0 %v44
    %311 = vmatprep.subr.mxu0 0.0
    %312 = vmatpush1.msra.mxu0 0.0
    %313 = vmatprep.subr.mxu0 0.0
    %314 = vmatpush1.msra.mxu0 0.0
    %315 = vmatprep.subr.mxu0 0.0
    %316 = vmatpush1.msra.mxu0 0.0
    %317 = vmatprep.subr.mxu0 0.0
    %318 = vmatpush1.msra.mxu0 0.0
    %319 = vmatprep.subr.mxu0 0.0
    %320 = vmatpush1.msra.mxu0 0.0
    %321 = vmatprep.subr.mxu0 0.0
    %322 = vmatpush1.msra.mxu0 0.0
    %323 = vmatprep.subr.mxu0 0.0
    %324 = vmatpush1.msra.mxu0 0.0
    %325 = vmatprep.subr.mxu0 0.0
    %326 = vmatpush1.msra.mxu0 0.0
    %327 = vmatprep.subr.mxu0 0.0
    %328 = vmatpush1.msra.mxu0 0.0
    %329 = vmatprep.subr.mxu0 0.0
    %330 = vmatpush1.msra.mxu0 0.0
    %331 = vmatprep.subr.mxu0 0.0
    %332 = vmatpush1.msra.mxu0 0.0
    %333 = vmatprep.subr.mxu0 0.0
    %334 = vmatpush1.msra.mxu0 0.0
    %335 = vmatprep.subr.mxu0 0.0
    %336 = vmatpush1.msra.mxu0 0.0
    %337 = vmatprep.subr.mxu0 0.0
    %338 = vmatpush1.msra.mxu0 0.0
    %339 = vmatprep.subr.mxu0 0.0
    %340 = vmatpush1.msra.mxu0 0.0
    %341 = vmatprep.subr.mxu0 0.0
    %342 = vmatpush1.msra.mxu0 0.0
    %343 = vmatprep.subr.mxu0 0.0
    %344 = vmatpush1.msra.mxu0 0.0
    %345 = vmatprep.subr.mxu0 0.0
    %346 = vmatpush1.msra.mxu0 0.0
    %347 = vmatprep.subr.mxu0 0.0
    %348 = vmatpush1.msra.mxu0 0.0
    %349 = vmatprep.subr.mxu0 0.0
    %350 = vmatpush1.msra.mxu0 0.0
    %351 = vmatprep.subr.mxu0 0.0
    %352 = vmatpush1.msra.mxu0 0.0
    %353 = vmatprep.subr.mxu0 0.0
    %354 = vmatpush1.msra.mxu0 0.0
    %355 = vmatprep.subr.mxu0 0.0
    %356 = vmatpush1.msra.mxu0 0.0
    %357 = vmatprep.subr.mxu0 0.0
    %358 = vmatpush1.msra.mxu0 0.0
    %359 = vmatprep.subr.mxu0 0.0
    %360 = vmatpush1.msra.mxu0 0.0
    %361 = vmatprep.subr.mxu0 0.0
    %362 = vmatpush1.msra.mxu0 0.0
    %363 = vmatprep.subr.mxu0 0.0
    %364 = vmatpush1.msra.mxu0 0.0
    %365 = vmatprep.subr.mxu0 0.0
    %366 = vmatpush1.msra.mxu0 0.0
    %367 = vmatprep.subr.mxu0 0.0
    %368 = vmatpush1.msra.mxu0 0.0
    %369 = vmatprep.subr.mxu0 0.0
    %370 = vmatpush1.msra.mxu0 0.0
    %371 = vmatprep.mubr.f32.mxu0 0.0
    %372 = vmatmul.mubr.f32.gmra.mrb[0].mxu0 %v302
    %v373 = vpop.f32.mrb[0].mxu0
    %v374 = vadd.f32 0.0, %v373
    %v375 = vpop.f32.mrb[0].mxu0
    %376 = vmatprep.mubr.f32.mxu0 0.0
    %377 = vmatmul.mubr.f32.gmra.mrb[0].mxu0 %v305
    %v378 = vpop.f32.mrb[0].mxu0
    %v379 = vadd.f32 0.0, %v378
    %v380 = vpop.f32.mrb[0].mxu0
    %381 = vdwg.mxu0
    %v383 = vsel %vm300, %v297, 0
    %v386 = vsel %vm300, %v299, 0
    %388 = vmatprep.subr.mxu0 0.0
    %389 = vmatpush1.msra.mxu0 %v45
    %390 = vmatprep.subr.mxu0 0.0
    %391 = vmatpush1.msra.mxu0 %v46
    %392 = vmatprep.subr.mxu0 0.0
    %393 = vmatpush1.msra.mxu0 0.0
    %394 = vmatprep.subr.mxu0 0.0
    %395 = vmatpush1.msra.mxu0 0.0
    %396 = vmatprep.subr.mxu0 0.0
    %397 = vmatpush1.msra.mxu0 0.0
    %398 = vmatprep.subr.mxu0 0.0
    %399 = vmatpush1.msra.mxu0 0.0
    %400 = vmatprep.subr.mxu0 0.0
    %401 = vmatpush1.msra.mxu0 0.0
    %402 = vmatprep.subr.mxu0 0.0
    %403 = vmatpush1.msra.mxu0 0.0
    %404 = vmatprep.subr.mxu0 0.0
    %405 = vmatpush1.msra.mxu0 0.0
    %406 = vmatprep.subr.mxu0 0.0
    %407 = vmatpush1.msra.mxu0 0.0
    %408 = vmatprep.subr.mxu0 0.0
    %409 = vmatpush1.msra.mxu0 0.0
    %410 = vmatprep.subr.mxu0 0.0
    %411 = vmatpush1.msra.mxu0 0.0
    %412 = vmatprep.subr.mxu0 0.0
    %413 = vmatpush1.msra.mxu0 0.0
    %414 = vmatprep.subr.mxu0 0.0
    %415 = vmatpush1.msra.mxu0 0.0
    %416 = vmatprep.subr.mxu0 0.0
    %417 = vmatpush1.msra.mxu0 0.0
    %418 = vmatprep.subr.mxu0 0.0
    %419 = vmatpush1.msra.mxu0 0.0
    %420 = vmatprep.subr.mxu0 0.0
    %421 = vmatpush1.msra.mxu0 0.0
    %422 = vmatprep.subr.mxu0 0.0
    %423 = vmatpush1.msra.mxu0 0.0
    %424 = vmatprep.subr.mxu0 0.0
    %425 = vmatpush1.msra.mxu0 0.0
    %426 = vmatprep.subr.mxu0 0.0
    %427 = vmatpush1.msra.mxu0 0.0
    %428 = vmatprep.subr.mxu0 0.0
    %429 = vmatpush1.msra.mxu0 0.0
    %430 = vmatprep.subr.mxu0 0.0
    %431 = vmatpush1.msra.mxu0 0.0
    %432 = vmatprep.subr.mxu0 0.0
    %433 = vmatpush1.msra.mxu0 0.0
    %434 = vmatprep.subr.mxu0 0.0
    %435 = vmatpush1.msra.mxu0 0.0
    %436 = vmatprep.subr.mxu0 0.0
    %437 = vmatpush1.msra.mxu0 0.0
    %438 = vmatprep.subr.mxu0 0.0
    %439 = vmatpush1.msra.mxu0 0.0
    %440 = vmatprep.subr.mxu0 0.0
    %441 = vmatpush1.msra.mxu0 0.0
    %442 = vmatprep.subr.mxu0 0.0
    %443 = vmatpush1.msra.mxu0 0.0
    %444 = vmatprep.subr.mxu0 0.0
    %445 = vmatpush1.msra.mxu0 0.0
    %446 = vmatprep.subr.mxu0 0.0
    %447 = vmatpush1.msra.mxu0 0.0
    %448 = vmatprep.subr.mxu0 0.0
    %449 = vmatpush1.msra.mxu0 0.0
    %450 = vmatprep.subr.mxu0 0.0
    %451 = vmatpush1.msra.mxu0 0.0
    %452 = vmatprep.mubr.f32.mxu0 0.0
    %453 = vmatmul.mubr.f32.gmra.mrb[0].mxu0 %v383
    %v454 = vpop.f32.mrb[0].mxu0
    %v455 = vadd.f32 0.0, %v454
    %v456 = vpop.f32.mrb[0].mxu0
    %457 = vmatprep.mubr.f32.mxu0 0.0
    %458 = vmatmul.mubr.f32.gmra.mrb[0].mxu0 %v386
    %v459 = vpop.f32.mrb[0].mxu0
    %v460 = vadd.f32 0.0, %v459
    %v461 = vpop.f32.mrb[0].mxu0
    %462 = vdwg.mxu0
    %v463 = vsel %vm300, %v293, 0.0
    %464 = vadd.xlane.f32.xlu0 %v463
    %v465 = vpop.xlane.xlu0 %464
    %v466 = vsel %vm300, %v295, 0.0
    %467 = vadd.xlane.f32.xlu0 %v466
    %v468 = vpop.xlane.xlu0 %467
    %v469 = vsel %vm300, %v297, 0.0
    %470 = vadd.xlane.f32.xlu0 %v469
    %v471 = vpop.xlane.xlu0 %470
    %v472 = vsel %vm300, %v299, 0.0
    %473 = vadd.xlane.f32.xlu0 %v472
    %v474 = vpop.xlane.xlu0 %473
    %v475 = vrcp.pop %v465
    %v476 = vmul.f32 %v374, %v475
    %v477 = vrcp.pop %v468
    %v478 = vmul.f32 %v379, %v477
    %v479 = vrcp.pop %v471
    %v480 = vmul.f32 %v455, %v479
    %v481 = vrcp.pop %v474
    %v482 = vmul.f32 %v460, %v481
    %483 = vst.msk [vmem:[%s2] sm:$0xff] %vm47, %v476
    %484 = vst.msk [vmem:[%s2 + $0x8] sm:$0xff] %vm47, %v478
    %485 = vst.msk [vmem:[%s2 + $0x10] sm:$0xff] %vm47, %v480
    %486 = vst.msk [vmem:[%s2 + $0x18] sm:$0xff] %vm47, %v482
    // Predicated region
    $region18: #{enhanced_geometric_transformer_forward.2} parent=1 // pred_check
      _
    $region19: #{enhanced_geometric_transformer_forward.2} parent=1 // pred_check_branch
      %488 = sbr.rel (0) target = $region21
    $region20: #{enhanced_geometric_transformer_forward.2} parent=1 // pred_region
      _
    $region21: #{enhanced_geometric_transformer_forward.2} parent=1 // pred_fallthru
      _
    // Predicated region
    $region22: #{enhanced_geometric_transformer_forward.2} parent=1 // pred_check
      _
    $region23: #{enhanced_geometric_transformer_forward.2} parent=1 // pred_check_branch
      %490 = sbr.rel (0) target = $region25
    $region24: #{enhanced_geometric_transformer_forward.2} parent=1 // pred_region
      _
    $region25: #{enhanced_geometric_transformer_forward.2} parent=1 // pred_fallthru
      _
    %491 = vsyncpa [#allocation3], 1
    %492 = vsyncpa [#allocation5], 1

// kernel: enhanced_geometric_transformer_forward.3
$region0: #{enhanced_geometric_transformer_forward.3}
  #allocation0 [shape = 'u32[]', space=smem, size = 0x4, offset = 0x4, fixed_abs, tag = 'smem constant byte address 0x4 - core index']
  #allocation1 [shape = 'u32[144,128]{1,0:T(1,128)}', space=vmem, size = 0x12000, scoped, tag = 'internal scratch']
  #allocation2 [shape = 'f32[32,32]{1,0:T(8,128)}', space=vmem, size = 0x4000, scoped, tag = 'scratch operand']
  %s0 = inlined_call_operand.vmem [shape: f32[32,32], index: 0, kind: input, shape index: {}]
  %s1 = inlined_call_operand.vmem [shape: bf16[2,32,96], index: 1, kind: input, shape index: {}]
  %s2 = inlined_call_operand.vmem [shape: f32[2,1,96], index: 2, kind: input, shape index: {}]
  %s3 = inlined_call_operand.vmem [shape: bf16[2,32,32], index: 3, kind: input, shape index: {}]
  %s4 = inlined_call_operand.vmem [shape: f32[2,1,32], index: 4, kind: input, shape index: {}]
  %s5 = inlined_call_operand.vmem [shape: f32[2,1,32], index: 5, kind: input, shape index: {}]
  %s6 = inlined_call_operand.vmem [shape: f32[2,1,32], index: 6, kind: input, shape index: {}]
  %s7 = inlined_call_operand.vmem [shape: bf16[2,32,128], index: 7, kind: input, shape index: {}]
  %s8 = inlined_call_operand.vmem [shape: f32[2,1,128], index: 8, kind: input, shape index: {}]
  %s9 = inlined_call_operand.vmem [shape: bf16[2,128,32], index: 9, kind: input, shape index: {}]
  %s10 = inlined_call_operand.vmem [shape: f32[2,1,32], index: 10, kind: input, shape index: {}]
  %s11 = inlined_call_operand.vmem [shape: f32[2,1,32], index: 11, kind: input, shape index: {}]
  %s12 = inlined_call_operand.vmem [shape: f32[2,1,32], index: 12, kind: input, shape index: {}]
  %s13 = inlined_call_operand.vmem [shape: f32[1,32], index: 13, kind: input, shape index: {}]
  %s14 = inlined_call_operand.vmem [shape: f32[1,32], index: 14, kind: input, shape index: {}]
  %s15 = inlined_call_operand.vmem [shape: f32[32,10], index: 15, kind: input, shape index: {}]
  %s16 = inlined_call_operand.vmem [shape: f32[1,10], index: 16, kind: input, shape index: {}]
  %s17 = inlined_call_operand.hbm [shape: f32[2,10], index: 17, kind: output, shape index: {}]
  %s18 = sld [smem:[#allocation0]]
  $region109: #{enhanced_geometric_transformer_forward.3} parent=0
    _
  %s20 = ssub.s32 1, %s18
  %s21 = scalar_select 0, %s20, %s18
  $region1: #{enhanced_geometric_transformer_forward.3} parent=0
    #allocation3 [shape = 'u8[1024]{0}', space=vmem, size = 0x400, scoped, tag = 'output window, operand 0, single buffered']
    #allocation4 [shape = 's32[2]{0}', space=sflag, size = 0x8, scoped, tag = 'scoped memory for enhanced_geometric_transformer_forward.3']
    %22 = vsyncpa [#allocation4], 0
    loop: start=0, step=1, limit=4
    $region2: #{enhanced_geometric_transformer_forward.3} parent=1 // loop_pre_header
      _
    $region3: #{enhanced_geometric_transformer_forward.3} parent=1 // loop_header
      %s24 = sphi 0, %s28
      %p25 = scmp.ge.s32.totalorder %s24, 4
      %s31 = sphi 0, %s43
      %s32 = sphi 0, %s39
      %s33 = sphi 0, %s31
      %s34 = sphi 0, %s32
      %s35 = sphi 0, %s33
      %s36 = sphi 0, %s34
      %s46 = sphi 0, %s48
      %s49 = sphi 0, %s46
      %s50 = sphi 0, %s49
      %s66 = sphi 0, %s50
      %s72 = sphi 0, %s74
      %s75 = sphi 0, %s72
      %s76 = sphi 0, %s75
      %s92 = sphi 0, %s76
      %s98 = sphi 0, %s100
      %s101 = sphi 0, %s98
      %s102 = sphi 0, %s101
      %s118 = sphi 0, %s102
      %s124 = sphi 0, %s126
      %s127 = sphi 0, %s124
      %s128 = sphi 0, %s127
      %s144 = sphi 0, %s128
      %s150 = sphi 0, %s152
      %s153 = sphi 0, %s150
      %s154 = sphi 0, %s153
      %s170 = sphi 0, %s154
      %s176 = sphi 0, %s178
      %s179 = sphi 0, %s176
      %s180 = sphi 0, %s179
      %s196 = sphi 0, %s180
      %s202 = sphi 0, %s204
      %s205 = sphi 0, %s202
      %s206 = sphi 0, %s205
      %s222 = sphi 0, %s206
      %s228 = sphi 0, %s230
      %s231 = sphi 0, %s228
      %s232 = sphi 0, %s231
      %s248 = sphi 0, %s232
      %s254 = sphi 0, %s256
      %s257 = sphi 0, %s254
      %s258 = sphi 0, %s257
      %s274 = sphi 0, %s258
      %s280 = sphi 0, %s282
      %s283 = sphi 0, %s280
      %s284 = sphi 0, %s283
      %s300 = sphi 0, %s284
      %s306 = sphi 0, %s308
      %s309 = sphi 0, %s306
      %s310 = sphi 0, %s309
      %s326 = sphi 0, %s310
      %s332 = sphi 0, %s334
      %s335 = sphi 0, %s332
      %s336 = sphi 0, %s335
      %s352 = sphi 0, %s336
      %s358 = sphi 0, %s360
      %s361 = sphi 0, %s358
      %s362 = sphi 0, %s361
      %s378 = sphi 0, %s362
      %s382 = sphi 0, %s382
      %s384 = sphi 0, %s382
      %s385 = sphi 0, %s384
      %s399 = sphi 0, %s385
      %s403 = sphi 0, %s403
      %s405 = sphi 0, %s403
      %s406 = sphi 0, %s405
      %s420 = sphi 0, %s406
      %s424 = sphi 0, %s424
      %s426 = sphi 0, %s424
      %s427 = sphi 0, %s426
      %s441 = sphi 0, %s427
      %s445 = sphi 0, %s445
      %s447 = sphi 0, %s445
      %s448 = sphi 0, %s447
      %s462 = sphi 0, %s448
      %s468 = sphi 0, %s470
      %s471 = sphi 0, %s468
      %s472 = sphi 0, %s471
      %s488 = sphi 0, %s472
    $region4: #{enhanced_geometric_transformer_forward.3} parent=1 // loop_header_branch
      %27 = sbr.rel (%p25) target = $region8
    $region5: #{enhanced_geometric_transformer_forward.3} parent=1 // loop_body
      %s29 = ssub.s32 %s24, 1
      %s30 = ssub.s32 %s24, 2
      %s37 = sadd.s32 1, %s32
      %p38 = scmp.ge.s32.totalorder %s37, 2
      %s39 = scalar_select %p38, 0, %s37
      %s40 = sadd.s32 1, %s31
      %s41 = scalar_select %p38, %s40, %s31
      %p42 = scmp.ge.s32.totalorder %s41, 1
      %s43 = scalar_select %p42, 0, %s41
      %s44 = ssub.s32 %s31, %s43
      %p45 = scmp.eq.s32.totalorder %s44, 0
      %s47 = sadd.s32 %s46, 1
      %s48 = scalar_select %p45, %s46, %s47
      %p51 = pneg %p45
      %p52 = scmp.eq.s32.totalorder %s24, 1
      %p53 = por %p51, %p52
      %p54 = scmp.ne.s32.totalorder %s46, %s49
      %p55 = scmp.eq.s32.totalorder %s24, 0
      %p56 = por %p54, %p55
      %p57 = scmp.ne.s32.totalorder %s46, %s49
      %p58 = scmp.eq.s32.totalorder %s29, 1
      %p59 = por %p57, %p58
      %p60 = scmp.ne.s32.totalorder %s49, %s50
      %p61 = scmp.eq.s32.totalorder %s29, 0
      %p62 = por %p60, %p61
      %p63 = scmp.ne.s32.totalorder %s49, %s50
      %p64 = scmp.eq.s32.totalorder %s30, 1
      %p65 = por %p63, %p64
      %p67 = scmp.ne.s32.totalorder %s50, %s66
      %p68 = scmp.eq.s32.totalorder %s30, 0
      %p69 = por %p67, %p68
      %s70 = ssub.s32 %s32, %s39
      %p71 = scmp.eq.s32.totalorder %s70, 0
      %s73 = sadd.s32 %s72, 1
      %s74 = scalar_select %p71, %s72, %s73
      %p77 = pneg %p71
      %p78 = scmp.eq.s32.totalorder %s24, 1
      %p79 = por %p77, %p78
      %p80 = scmp.ne.s32.totalorder %s72, %s75
      %p81 = scmp.eq.s32.totalorder %s24, 0
      %p82 = por %p80, %p81
      %p83 = scmp.ne.s32.totalorder %s72, %s75
      %p84 = scmp.eq.s32.totalorder %s29, 1
      %p85 = por %p83, %p84
      %p86 = scmp.ne.s32.totalorder %s75, %s76
      %p87 = scmp.eq.s32.totalorder %s29, 0
      %p88 = por %p86, %p87
      %p89 = scmp.ne.s32.totalorder %s75, %s76
      %p90 = scmp.eq.s32.totalorder %s30, 1
      %p91 = por %p89, %p90
      %p93 = scmp.ne.s32.totalorder %s76, %s92
      %p94 = scmp.eq.s32.totalorder %s30, 0
      %p95 = por %p93, %p94
      %s96 = ssub.s32 %s32, %s39
      %p97 = scmp.eq.s32.totalorder %s96, 0
      %s99 = sadd.s32 %s98, 1
      %s100 = scalar_select %p97, %s98, %s99
      %p103 = pneg %p97
      %p104 = scmp.eq.s32.totalorder %s24, 1
      %p105 = por %p103, %p104
      %p106 = scmp.ne.s32.totalorder %s98, %s101
      %p107 = scmp.eq.s32.totalorder %s24, 0
      %p108 = por %p106, %p107
      %p109 = scmp.ne.s32.totalorder %s98, %s101
      %p110 = scmp.eq.s32.totalorder %s29, 1
      %p111 = por %p109, %p110
      %p112 = scmp.ne.s32.totalorder %s101, %s102
      %p113 = scmp.eq.s32.totalorder %s29, 0
      %p114 = por %p112, %p113
      %p115 = scmp.ne.s32.totalorder %s101, %s102
      %p116 = scmp.eq.s32.totalorder %s30, 1
      %p117 = por %p115, %p116
      %p119 = scmp.ne.s32.totalorder %s102, %s118
      %p120 = scmp.eq.s32.totalorder %s30, 0
      %p121 = por %p119, %p120
      %s122 = ssub.s32 %s32, %s39
      %p123 = scmp.eq.s32.totalorder %s122, 0
      %s125 = sadd.s32 %s124, 1
      %s126 = scalar_select %p123, %s124, %s125
      %p129 = pneg %p123
      %p130 = scmp.eq.s32.totalorder %s24, 1
      %p131 = por %p129, %p130
      %p132 = scmp.ne.s32.totalorder %s124, %s127
      %p133 = scmp.eq.s32.totalorder %s24, 0
      %p134 = por %p132, %p133
      %p135 = scmp.ne.s32.totalorder %s124, %s127
      %p136 = scmp.eq.s32.totalorder %s29, 1
      %p137 = por %p135, %p136
      %p138 = scmp.ne.s32.totalorder %s127, %s128
      %p139 = scmp.eq.s32.totalorder %s29, 0
      %p140 = por %p138, %p139
      %p141 = scmp.ne.s32.totalorder %s127, %s128
      %p142 = scmp.eq.s32.totalorder %s30, 1
      %p143 = por %p141, %p142
      %p145 = scmp.ne.s32.totalorder %s128, %s144
      %p146 = scmp.eq.s32.totalorder %s30, 0
      %p147 = por %p145, %p146
      %s148 = ssub.s32 %s32, %s39
      %p149 = scmp.eq.s32.totalorder %s148, 0
      %s151 = sadd.s32 %s150, 1
      %s152 = scalar_select %p149, %s150, %s151
      %p155 = pneg %p149
      %p156 = scmp.eq.s32.totalorder %s24, 1
      %p157 = por %p155, %p156
      %p158 = scmp.ne.s32.totalorder %s150, %s153
      %p159 = scmp.eq.s32.totalorder %s24, 0
      %p160 = por %p158, %p159
      %p161 = scmp.ne.s32.totalorder %s150, %s153
      %p162 = scmp.eq.s32.totalorder %s29, 1
      %p163 = por %p161, %p162
      %p164 = scmp.ne.s32.totalorder %s153, %s154
      %p165 = scmp.eq.s32.totalorder %s29, 0
      %p166 = por %p164, %p165
      %p167 = scmp.ne.s32.totalorder %s153, %s154
      %p168 = scmp.eq.s32.totalorder %s30, 1
      %p169 = por %p167, %p168
      %p171 = scmp.ne.s32.totalorder %s154, %s170
      %p172 = scmp.eq.s32.totalorder %s30, 0
      %p173 = por %p171, %p172
      %s174 = ssub.s32 %s32, %s39
      %p175 = scmp.eq.s32.totalorder %s174, 0
      %s177 = sadd.s32 %s176, 1
      %s178 = scalar_select %p175, %s176, %s177
      %p181 = pneg %p175
      %p182 = scmp.eq.s32.totalorder %s24, 1
      %p183 = por %p181, %p182
      %p184 = scmp.ne.s32.totalorder %s176, %s179
      %p185 = scmp.eq.s32.totalorder %s24, 0
      %p186 = por %p184, %p185
      %p187 = scmp.ne.s32.totalorder %s176, %s179
      %p188 = scmp.eq.s32.totalorder %s29, 1
      %p189 = por %p187, %p188
      %p190 = scmp.ne.s32.totalorder %s179, %s180
      %p191 = scmp.eq.s32.totalorder %s29, 0
      %p192 = por %p190, %p191
      %p193 = scmp.ne.s32.totalorder %s179, %s180
      %p194 = scmp.eq.s32.totalorder %s30, 1
      %p195 = por %p193, %p194
      %p197 = scmp.ne.s32.totalorder %s180, %s196
      %p198 = scmp.eq.s32.totalorder %s30, 0
      %p199 = por %p197, %p198
      %s200 = ssub.s32 %s32, %s39
      %p201 = scmp.eq.s32.totalorder %s200, 0
      %s203 = sadd.s32 %s202, 1
      %s204 = scalar_select %p201, %s202, %s203
      %p207 = pneg %p201
      %p208 = scmp.eq.s32.totalorder %s24, 1
      %p209 = por %p207, %p208
      %p210 = scmp.ne.s32.totalorder %s202, %s205
      %p211 = scmp.eq.s32.totalorder %s24, 0
      %p212 = por %p210, %p211
      %p213 = scmp.ne.s32.totalorder %s202, %s205
      %p214 = scmp.eq.s32.totalorder %s29, 1
      %p215 = por %p213, %p214
      %p216 = scmp.ne.s32.totalorder %s205, %s206
      %p217 = scmp.eq.s32.totalorder %s29, 0
      %p218 = por %p216, %p217
      %p219 = scmp.ne.s32.totalorder %s205, %s206
      %p220 = scmp.eq.s32.totalorder %s30, 1
      %p221 = por %p219, %p220
      %p223 = scmp.ne.s32.totalorder %s206, %s222
      %p224 = scmp.eq.s32.totalorder %s30, 0
      %p225 = por %p223, %p224
      %s226 = ssub.s32 %s32, %s39
      %p227 = scmp.eq.s32.totalorder %s226, 0
      %s229 = sadd.s32 %s228, 1
      %s230 = scalar_select %p227, %s228, %s229
      %p233 = pneg %p227
      %p234 = scmp.eq.s32.totalorder %s24, 1
      %p235 = por %p233, %p234
      %p236 = scmp.ne.s32.totalorder %s228, %s231
      %p237 = scmp.eq.s32.totalorder %s24, 0
      %p238 = por %p236, %p237
      %p239 = scmp.ne.s32.totalorder %s228, %s231
      %p240 = scmp.eq.s32.totalorder %s29, 1
      %p241 = por %p239, %p240
      %p242 = scmp.ne.s32.totalorder %s231, %s232
      %p243 = scmp.eq.s32.totalorder %s29, 0
      %p244 = por %p242, %p243
      %p245 = scmp.ne.s32.totalorder %s231, %s232
      %p246 = scmp.eq.s32.totalorder %s30, 1
      %p247 = por %p245, %p246
      %p249 = scmp.ne.s32.totalorder %s232, %s248
      %p250 = scmp.eq.s32.totalorder %s30, 0
      %p251 = por %p249, %p250
      %s252 = ssub.s32 %s32, %s39
      %p253 = scmp.eq.s32.totalorder %s252, 0
      %s255 = sadd.s32 %s254, 1
      %s256 = scalar_select %p253, %s254, %s255
      %p259 = pneg %p253
      %p260 = scmp.eq.s32.totalorder %s24, 1
      %p261 = por %p259, %p260
      %p262 = scmp.ne.s32.totalorder %s254, %s257
      %p263 = scmp.eq.s32.totalorder %s24, 0
      %p264 = por %p262, %p263
      %p265 = scmp.ne.s32.totalorder %s254, %s257
      %p266 = scmp.eq.s32.totalorder %s29, 1
      %p267 = por %p265, %p266
      %p268 = scmp.ne.s32.totalorder %s257, %s258
      %p269 = scmp.eq.s32.totalorder %s29, 0
      %p270 = por %p268, %p269
      %p271 = scmp.ne.s32.totalorder %s257, %s258
      %p272 = scmp.eq.s32.totalorder %s30, 1
      %p273 = por %p271, %p272
      %p275 = scmp.ne.s32.totalorder %s258, %s274
      %p276 = scmp.eq.s32.totalorder %s30, 0
      %p277 = por %p275, %p276
      %s278 = ssub.s32 %s32, %s39
      %p279 = scmp.eq.s32.totalorder %s278, 0
      %s281 = sadd.s32 %s280, 1
      %s282 = scalar_select %p279, %s280, %s281
      %p285 = pneg %p279
      %p286 = scmp.eq.s32.totalorder %s24, 1
      %p287 = por %p285, %p286
      %p288 = scmp.ne.s32.totalorder %s280, %s283
      %p289 = scmp.eq.s32.totalorder %s24, 0
      %p290 = por %p288, %p289
      %p291 = scmp.ne.s32.totalorder %s280, %s283
      %p292 = scmp.eq.s32.totalorder %s29, 1
      %p293 = por %p291, %p292
      %p294 = scmp.ne.s32.totalorder %s283, %s284
      %p295 = scmp.eq.s32.totalorder %s29, 0
      %p296 = por %p294, %p295
      %p297 = scmp.ne.s32.totalorder %s283, %s284
      %p298 = scmp.eq.s32.totalorder %s30, 1
      %p299 = por %p297, %p298
      %p301 = scmp.ne.s32.totalorder %s284, %s300
      %p302 = scmp.eq.s32.totalorder %s30, 0
      %p303 = por %p301, %p302
      %s304 = ssub.s32 %s32, %s39
      %p305 = scmp.eq.s32.totalorder %s304, 0
      %s307 = sadd.s32 %s306, 1
      %s308 = scalar_select %p305, %s306, %s307
      %p311 = pneg %p305
      %p312 = scmp.eq.s32.totalorder %s24, 1
      %p313 = por %p311, %p312
      %p314 = scmp.ne.s32.totalorder %s306, %s309
      %p315 = scmp.eq.s32.totalorder %s24, 0
      %p316 = por %p314, %p315
      %p317 = scmp.ne.s32.totalorder %s306, %s309
      %p318 = scmp.eq.s32.totalorder %s29, 1
      %p319 = por %p317, %p318
      %p320 = scmp.ne.s32.totalorder %s309, %s310
      %p321 = scmp.eq.s32.totalorder %s29, 0
      %p322 = por %p320, %p321
      %p323 = scmp.ne.s32.totalorder %s309, %s310
      %p324 = scmp.eq.s32.totalorder %s30, 1
      %p325 = por %p323, %p324
      %p327 = scmp.ne.s32.totalorder %s310, %s326
      %p328 = scmp.eq.s32.totalorder %s30, 0
      %p329 = por %p327, %p328
      %s330 = ssub.s32 %s32, %s39
      %p331 = scmp.eq.s32.totalorder %s330, 0
      %s333 = sadd.s32 %s332, 1
      %s334 = scalar_select %p331, %s332, %s333
      %p337 = pneg %p331
      %p338 = scmp.eq.s32.totalorder %s24, 1
      %p339 = por %p337, %p338
      %p340 = scmp.ne.s32.totalorder %s332, %s335
      %p341 = scmp.eq.s32.totalorder %s24, 0
      %p342 = por %p340, %p341
      %p343 = scmp.ne.s32.totalorder %s332, %s335
      %p344 = scmp.eq.s32.totalorder %s29, 1
      %p345 = por %p343, %p344
      %p346 = scmp.ne.s32.totalorder %s335, %s336
      %p347 = scmp.eq.s32.totalorder %s29, 0
      %p348 = por %p346, %p347
      %p349 = scmp.ne.s32.totalorder %s335, %s336
      %p350 = scmp.eq.s32.totalorder %s30, 1
      %p351 = por %p349, %p350
      %p353 = scmp.ne.s32.totalorder %s336, %s352
      %p354 = scmp.eq.s32.totalorder %s30, 0
      %p355 = por %p353, %p354
      %s356 = ssub.s32 %s32, %s39
      %p357 = scmp.eq.s32.totalorder %s356, 0
      %s359 = sadd.s32 %s358, 1
      %s360 = scalar_select %p357, %s358, %s359
      %p363 = pneg %p357
      %p364 = scmp.eq.s32.totalorder %s24, 1
      %p365 = por %p363, %p364
      %p366 = scmp.ne.s32.totalorder %s358, %s361
      %p367 = scmp.eq.s32.totalorder %s24, 0
      %p368 = por %p366, %p367
      %p369 = scmp.ne.s32.totalorder %s358, %s361
      %p370 = scmp.eq.s32.totalorder %s29, 1
      %p371 = por %p369, %p370
      %p372 = scmp.ne.s32.totalorder %s361, %s362
      %p373 = scmp.eq.s32.totalorder %s29, 0
      %p374 = por %p372, %p373
      %p375 = scmp.ne.s32.totalorder %s361, %s362
      %p376 = scmp.eq.s32.totalorder %s30, 1
      %p377 = por %p375, %p376
      %p379 = scmp.ne.s32.totalorder %s362, %s378
      %p380 = scmp.eq.s32.totalorder %s30, 0
      %p381 = por %p379, %p380
      %s383 = sadd.s32 %s382, 1
      %p386 = scmp.eq.s32.totalorder %s24, 1
      %p387 = scmp.ne.s32.totalorder %s382, %s384
      %p388 = scmp.eq.s32.totalorder %s24, 0
      %p389 = por %p387, %p388
      %p390 = scmp.ne.s32.totalorder %s382, %s384
      %p391 = scmp.eq.s32.totalorder %s29, 1
      %p392 = por %p390, %p391
      %p393 = scmp.ne.s32.totalorder %s384, %s385
      %p394 = scmp.eq.s32.totalorder %s29, 0
      %p395 = por %p393, %p394
      %p396 = scmp.ne.s32.totalorder %s384, %s385
      %p397 = scmp.eq.s32.totalorder %s30, 1
      %p398 = por %p396, %p397
      %p400 = scmp.ne.s32.totalorder %s385, %s399
      %p401 = scmp.eq.s32.totalorder %s30, 0
      %p402 = por %p400, %p401
      %s404 = sadd.s32 %s403, 1
      %p407 = scmp.eq.s32.totalorder %s24, 1
      %p408 = scmp.ne.s32.totalorder %s403, %s405
      %p409 = scmp.eq.s32.totalorder %s24, 0
      %p410 = por %p408, %p409
      %p411 = scmp.ne.s32.totalorder %s403, %s405
      %p412 = scmp.eq.s32.totalorder %s29, 1
      %p413 = por %p411, %p412
      %p414 = scmp.ne.s32.totalorder %s405, %s406
      %p415 = scmp.eq.s32.totalorder %s29, 0
      %p416 = por %p414, %p415
      %p417 = scmp.ne.s32.totalorder %s405, %s406
      %p418 = scmp.eq.s32.totalorder %s30, 1
      %p419 = por %p417, %p418
      %p421 = scmp.ne.s32.totalorder %s406, %s420
      %p422 = scmp.eq.s32.totalorder %s30, 0
      %p423 = por %p421, %p422
      %s425 = sadd.s32 %s424, 1
      %p428 = scmp.eq.s32.totalorder %s24, 1
      %p429 = scmp.ne.s32.totalorder %s424, %s426
      %p430 = scmp.eq.s32.totalorder %s24, 0
      %p431 = por %p429, %p430
      %p432 = scmp.ne.s32.totalorder %s424, %s426
      %p433 = scmp.eq.s32.totalorder %s29, 1
      %p434 = por %p432, %p433
      %p435 = scmp.ne.s32.totalorder %s426, %s427
      %p436 = scmp.eq.s32.totalorder %s29, 0
      %p437 = por %p435, %p436
      %p438 = scmp.ne.s32.totalorder %s426, %s427
      %p439 = scmp.eq.s32.totalorder %s30, 1
      %p440 = por %p438, %p439
      %p442 = scmp.ne.s32.totalorder %s427, %s441
      %p443 = scmp.eq.s32.totalorder %s30, 0
      %p444 = por %p442, %p443
      %s446 = sadd.s32 %s445, 1
      %p449 = scmp.eq.s32.totalorder %s24, 1
      %p450 = scmp.ne.s32.totalorder %s445, %s447
      %p451 = scmp.eq.s32.totalorder %s24, 0
      %p452 = por %p450, %p451
      %p453 = scmp.ne.s32.totalorder %s445, %s447
      %p454 = scmp.eq.s32.totalorder %s29, 1
      %p455 = por %p453, %p454
      %p456 = scmp.ne.s32.totalorder %s447, %s448
      %p457 = scmp.eq.s32.totalorder %s29, 0
      %p458 = por %p456, %p457
      %p459 = scmp.ne.s32.totalorder %s447, %s448
      %p460 = scmp.eq.s32.totalorder %s30, 1
      %p461 = por %p459, %p460
      %p463 = scmp.ne.s32.totalorder %s448, %s462
      %p464 = scmp.eq.s32.totalorder %s30, 0
      %p465 = por %p463, %p464
      %s466 = ssub.s32 %s31, %s43
      %p467 = scmp.eq.s32.totalorder %s466, 0
      %s469 = sadd.s32 %s468, 1
      %s470 = scalar_select %p467, %s468, %s469
      %p473 = pneg %p467
      %p474 = scmp.eq.s32.totalorder %s24, 1
      %p475 = por %p473, %p474
      %p476 = scmp.ne.s32.totalorder %s468, %s471
      %p477 = scmp.eq.s32.totalorder %s24, 0
      %p478 = por %p476, %p477
      %p479 = scmp.ne.s32.totalorder %s468, %s471
      %p480 = scmp.eq.s32.totalorder %s29, 1
      %p481 = por %p479, %p480
      %p482 = scmp.ne.s32.totalorder %s471, %s472
      %p483 = scmp.eq.s32.totalorder %s29, 0
      %p484 = por %p482, %p483
      %p485 = scmp.ne.s32.totalorder %s471, %s472
      %p486 = scmp.eq.s32.totalorder %s30, 1
      %p487 = por %p485, %p486
      %p489 = scmp.ne.s32.totalorder %s472, %s488
      %p490 = scmp.eq.s32.totalorder %s30, 0
      %p491 = por %p489, %p490
      %p492 = scmp.le.s32.totalorder 1, %s24
      %p493 = scmp.lt.s32.totalorder %s24, 3
      %p494 = pnand %p492, %p493
      %p495 = pneg %p494
      // Predicated region
      $region9: #{enhanced_geometric_transformer_forward.3} parent=5 // pred_check
        _
      $region10: #{enhanced_geometric_transformer_forward.3} parent=5 // pred_check_branch
        %497 = sbr.rel (%p494) target = $region12
      $region11: #{enhanced_geometric_transformer_forward.3} parent=5 // pred_region
        %s498 = ssub.s32 %s24, 1
        // Predicated region
        $region13: #{enhanced_geometric_transformer_forward.3} parent=11 // pred_check
          %p499 = pneg %p62
        $region14: #{enhanced_geometric_transformer_forward.3} parent=11 // pred_check_branch
          %501 = sbr.rel (%p499) target = $region16
        $region15: #{enhanced_geometric_transformer_forward.3} parent=11 // pred_region
          %s502 = smul.u32 4, %s33
          %p503 = scmp.lt.s32.totalorder %s502, 3
          %s504 = scalar_select %p503, %s502, 3
          %s505 = smul.addr %s504, 8
          %s506 = scalar_lea.vmem %s0, %s505
          %s507 = smul.u32 4, %s33
        $region16: #{enhanced_geometric_transformer_forward.3} parent=11 // pred_fallthru
          _
        // Predicated region
        $region17: #{enhanced_geometric_transformer_forward.3} parent=11 // pred_check
          %p508 = pneg %p395
        $region18: #{enhanced_geometric_transformer_forward.3} parent=11 // pred_check_branch
          %510 = sbr.rel (%p508) target = $region20
        $region19: #{enhanced_geometric_transformer_forward.3} parent=11 // pred_region
          _
        $region20: #{enhanced_geometric_transformer_forward.3} parent=11 // pred_fallthru
          _
        // Predicated region
        $region21: #{enhanced_geometric_transformer_forward.3} parent=11 // pred_check
          %p511 = pneg %p416
        $region22: #{enhanced_geometric_transformer_forward.3} parent=11 // pred_check_branch
          %513 = sbr.rel (%p511) target = $region24
        $region23: #{enhanced_geometric_transformer_forward.3} parent=11 // pred_region
          _
        $region24: #{enhanced_geometric_transformer_forward.3} parent=11 // pred_fallthru
          _
        // Predicated region
        $region25: #{enhanced_geometric_transformer_forward.3} parent=11 // pred_check
          %p514 = pneg %p437
        $region26: #{enhanced_geometric_transformer_forward.3} parent=11 // pred_check_branch
          %516 = sbr.rel (%p514) target = $region28
        $region27: #{enhanced_geometric_transformer_forward.3} parent=11 // pred_region
          _
        $region28: #{enhanced_geometric_transformer_forward.3} parent=11 // pred_fallthru
          _
        // Predicated region
        $region29: #{enhanced_geometric_transformer_forward.3} parent=11 // pred_check
          %p517 = pneg %p458
        $region30: #{enhanced_geometric_transformer_forward.3} parent=11 // pred_check_branch
          %519 = sbr.rel (%p517) target = $region32
        $region31: #{enhanced_geometric_transformer_forward.3} parent=11 // pred_region
          _
        $region32: #{enhanced_geometric_transformer_forward.3} parent=11 // pred_fallthru
          _
      $region12: #{enhanced_geometric_transformer_forward.3} parent=5 // pred_fallthru
        _
      %p520 = scmp.lt.s32.totalorder %s24, 2
      // Predicated region
      $region33: #{enhanced_geometric_transformer_forward.3} parent=5 // pred_check
        %p521 = pneg %p520
      $region34: #{enhanced_geometric_transformer_forward.3} parent=5 // pred_check_branch
        %523 = sbr.rel (%p521) target = $region36
      $region35: #{enhanced_geometric_transformer_forward.3} parent=5 // pred_region
        // Predicated region
        $region37: #{enhanced_geometric_transformer_forward.3} parent=35 // pred_check
          %p524 = pneg %p82
        $region38: #{enhanced_geometric_transformer_forward.3} parent=35 // pred_check_branch
          %526 = sbr.rel (%p524) target = $region40
        $region39: #{enhanced_geometric_transformer_forward.3} parent=35 // pred_region
          %p527 = scmp.lt.s32.totalorder %s32, 1
          %s528 = scalar_select %p527, %s32, 1
          %s529 = smul.addr %s528, 4
          %s530 = smul.addr %s529, 4
          %s531 = scalar_lea.vmem %s1, %s530
        $region40: #{enhanced_geometric_transformer_forward.3} parent=35 // pred_fallthru
          _
        // Predicated region
        $region41: #{enhanced_geometric_transformer_forward.3} parent=35 // pred_check
          %p532 = pneg %p108
        $region42: #{enhanced_geometric_transformer_forward.3} parent=35 // pred_check_branch
          %534 = sbr.rel (%p532) target = $region44
        $region43: #{enhanced_geometric_transformer_forward.3} parent=35 // pred_region
          %p535 = scmp.lt.s32.totalorder %s32, 1
          %s536 = scalar_select %p535, %s32, 1
          %s537 = scalar_lea.vmem %s2, %s536
        $region44: #{enhanced_geometric_transformer_forward.3} parent=35 // pred_fallthru
          _
        // Predicated region
        $region45: #{enhanced_geometric_transformer_forward.3} parent=35 // pred_check
          %p538 = pneg %p134
        $region46: #{enhanced_geometric_transformer_forward.3} parent=35 // pred_check_branch
          %540 = sbr.rel (%p538) target = $region48
        $region47: #{enhanced_geometric_transformer_forward.3} parent=35 // pred_region
          %p541 = scmp.lt.s32.totalorder %s32, 1
          %s542 = scalar_select %p541, %s32, 1
          %s543 = smul.addr %s542, 4
          %s544 = smul.addr %s543, 4
          %s545 = scalar_lea.vmem %s3, %s544
        $region48: #{enhanced_geometric_transformer_forward.3} parent=35 // pred_fallthru
          _
        // Predicated region
        $region49: #{enhanced_geometric_transformer_forward.3} parent=35 // pred_check
          %p546 = pneg %p160
        $region50: #{enhanced_geometric_transformer_forward.3} parent=35 // pred_check_branch
          %548 = sbr.rel (%p546) target = $region52
        $region51: #{enhanced_geometric_transformer_forward.3} parent=35 // pred_region
          %p549 = scmp.lt.s32.totalorder %s32, 1
          %s550 = scalar_select %p549, %s32, 1
          %s551 = scalar_lea.vmem %s4, %s550
        $region52: #{enhanced_geometric_transformer_forward.3} parent=35 // pred_fallthru
          _
        // Predicated region
        $region53: #{enhanced_geometric_transformer_forward.3} parent=35 // pred_check
          %p552 = pneg %p186
        $region54: #{enhanced_geometric_transformer_forward.3} parent=35 // pred_check_branch
          %554 = sbr.rel (%p552) target = $region56
        $region55: #{enhanced_geometric_transformer_forward.3} parent=35 // pred_region
          %p555 = scmp.lt.s32.totalorder %s32, 1
          %s556 = scalar_select %p555, %s32, 1
          %s557 = scalar_lea.vmem %s5, %s556
        $region56: #{enhanced_geometric_transformer_forward.3} parent=35 // pred_fallthru
          _
        // Predicated region
        $region57: #{enhanced_geometric_transformer_forward.3} parent=35 // pred_check
          %p558 = pneg %p212
        $region58: #{enhanced_geometric_transformer_forward.3} parent=35 // pred_check_branch
          %560 = sbr.rel (%p558) target = $region60
        $region59: #{enhanced_geometric_transformer_forward.3} parent=35 // pred_region
          %p561 = scmp.lt.s32.totalorder %s32, 1
          %s562 = scalar_select %p561, %s32, 1
          %s563 = scalar_lea.vmem %s6, %s562
        $region60: #{enhanced_geometric_transformer_forward.3} parent=35 // pred_fallthru
          _
        // Predicated region
        $region61: #{enhanced_geometric_transformer_forward.3} parent=35 // pred_check
          %p564 = pneg %p238
        $region62: #{enhanced_geometric_transformer_forward.3} parent=35 // pred_check_branch
          %566 = sbr.rel (%p564) target = $region64
        $region63: #{enhanced_geometric_transformer_forward.3} parent=35 // pred_region
          %p567 = scmp.lt.s32.totalorder %s32, 1
          %s568 = scalar_select %p567, %s32, 1
          %s569 = smul.addr %s568, 4
          %s570 = smul.addr %s569, 4
          %s571 = scalar_lea.vmem %s7, %s570
        $region64: #{enhanced_geometric_transformer_forward.3} parent=35 // pred_fallthru
          _
        // Predicated region
        $region65: #{enhanced_geometric_transformer_forward.3} parent=35 // pred_check
          %p572 = pneg %p264
        $region66: #{enhanced_geometric_transformer_forward.3} parent=35 // pred_check_branch
          %574 = sbr.rel (%p572) target = $region68
        $region67: #{enhanced_geometric_transformer_forward.3} parent=35 // pred_region
          %p575 = scmp.lt.s32.totalorder %s32, 1
          %s576 = scalar_select %p575, %s32, 1
          %s577 = scalar_lea.vmem %s8, %s576
        $region68: #{enhanced_geometric_transformer_forward.3} parent=35 // pred_fallthru
          _
        // Predicated region
        $region69: #{enhanced_geometric_transformer_forward.3} parent=35 // pred_check
          %p578 = pneg %p290
        $region70: #{enhanced_geometric_transformer_forward.3} parent=35 // pred_check_branch
          %580 = sbr.rel (%p578) target = $region72
        $region71: #{enhanced_geometric_transformer_forward.3} parent=35 // pred_region
          %p581 = scmp.lt.s32.totalorder %s32, 1
          %s582 = scalar_select %p581, %s32, 1
          %s583 = smul.addr %s582, 16
          %s584 = smul.addr %s583, 4
          %s585 = scalar_lea.vmem %s9, %s584
        $region72: #{enhanced_geometric_transformer_forward.3} parent=35 // pred_fallthru
          _
        // Predicated region
        $region73: #{enhanced_geometric_transformer_forward.3} parent=35 // pred_check
          %p586 = pneg %p316
        $region74: #{enhanced_geometric_transformer_forward.3} parent=35 // pred_check_branch
          %588 = sbr.rel (%p586) target = $region76
        $region75: #{enhanced_geometric_transformer_forward.3} parent=35 // pred_region
          %p589 = scmp.lt.s32.totalorder %s32, 1
          %s590 = scalar_select %p589, %s32, 1
          %s591 = scalar_lea.vmem %s10, %s590
        $region76: #{enhanced_geometric_transformer_forward.3} parent=35 // pred_fallthru
          _
        // Predicated region
        $region77: #{enhanced_geometric_transformer_forward.3} parent=35 // pred_check
          %p592 = pneg %p342
        $region78: #{enhanced_geometric_transformer_forward.3} parent=35 // pred_check_branch
          %594 = sbr.rel (%p592) target = $region80
        $region79: #{enhanced_geometric_transformer_forward.3} parent=35 // pred_region
          %p595 = scmp.lt.s32.totalorder %s32, 1
          %s596 = scalar_select %p595, %s32, 1
          %s597 = scalar_lea.vmem %s11, %s596
        $region80: #{enhanced_geometric_transformer_forward.3} parent=35 // pred_fallthru
          _
        // Predicated region
        $region81: #{enhanced_geometric_transformer_forward.3} parent=35 // pred_check
          %p598 = pneg %p368
        $region82: #{enhanced_geometric_transformer_forward.3} parent=35 // pred_check_branch
          %600 = sbr.rel (%p598) target = $region84
        $region83: #{enhanced_geometric_transformer_forward.3} parent=35 // pred_region
          %p601 = scmp.lt.s32.totalorder %s32, 1
          %s602 = scalar_select %p601, %s32, 1
          %s603 = scalar_lea.vmem %s12, %s602
        $region84: #{enhanced_geometric_transformer_forward.3} parent=35 // pred_fallthru
          _
      $region36: #{enhanced_geometric_transformer_forward.3} parent=5 // pred_fallthru
        _
      %p604 = scmp.le.s32.totalorder 1, %s24
      %p605 = scmp.lt.s32.totalorder %s24, 3
      %p606 = pnand %p604, %p605
      %p607 = pneg %p606
      // Predicated region
      $region85: #{enhanced_geometric_transformer_forward.3} parent=5 // pred_check
        _
      $region86: #{enhanced_geometric_transformer_forward.3} parent=5 // pred_check_branch
        %609 = sbr.rel (%p606) target = $region88
      $region87: #{enhanced_geometric_transformer_forward.3} parent=5 // pred_region
        %s610 = ssub.s32 %s24, 1
        %s611 = smul.u32 4, %s33
        %p612 = scmp.lt.s32.totalorder %s611, 3
        %s613 = scalar_select %p612, %s611, 3
        %s614 = smul.addr %s613, 8
        %s615 = scalar_lea.vmem %s0, %s614
        %p616 = pneg %p62
        %p617 = pneg %p59
        %p618 = scmp.lt.s32.totalorder %s34, 1
        %s619 = scalar_select %p618, %s34, 1
        %s620 = smul.addr %s619, 4
        %s621 = smul.addr %s620, 4
        %s622 = scalar_lea.vmem %s1, %s621
        %p623 = pneg %p88
        %p624 = pneg %p85
        %p625 = scmp.lt.s32.totalorder %s34, 1
        %s626 = scalar_select %p625, %s34, 1
        %s627 = scalar_lea.vmem %s2, %s626
        %p628 = pneg %p114
        %p629 = pneg %p111
        %p630 = scmp.lt.s32.totalorder %s34, 1
        %s631 = scalar_select %p630, %s34, 1
        %s632 = smul.addr %s631, 4
        %s633 = smul.addr %s632, 4
        %s634 = scalar_lea.vmem %s3, %s633
        %p635 = pneg %p140
        %p636 = pneg %p137
        %p637 = scmp.lt.s32.totalorder %s34, 1
        %s638 = scalar_select %p637, %s34, 1
        %s639 = scalar_lea.vmem %s4, %s638
        %p640 = pneg %p166
        %p641 = pneg %p163
        %p642 = scmp.lt.s32.totalorder %s34, 1
        %s643 = scalar_select %p642, %s34, 1
        %s644 = scalar_lea.vmem %s5, %s643
        %p645 = pneg %p192
        %p646 = pneg %p189
        %p647 = scmp.lt.s32.totalorder %s34, 1
        %s648 = scalar_select %p647, %s34, 1
        %s649 = scalar_lea.vmem %s6, %s648
        %p650 = pneg %p218
        %p651 = pneg %p215
        %p652 = scmp.lt.s32.totalorder %s34, 1
        %s653 = scalar_select %p652, %s34, 1
        %s654 = smul.addr %s653, 4
        %s655 = smul.addr %s654, 4
        %s656 = scalar_lea.vmem %s7, %s655
        %p657 = pneg %p244
        %p658 = pneg %p241
        %p659 = scmp.lt.s32.totalorder %s34, 1
        %s660 = scalar_select %p659, %s34, 1
        %s661 = scalar_lea.vmem %s8, %s660
        %p662 = pneg %p270
        %p663 = pneg %p267
        %p664 = scmp.lt.s32.totalorder %s34, 1
        %s665 = scalar_select %p664, %s34, 1
        %s666 = smul.addr %s665, 16
        %s667 = smul.addr %s666, 4
        %s668 = scalar_lea.vmem %s9, %s667
        %p669 = pneg %p296
        %p670 = pneg %p293
        %p671 = scmp.lt.s32.totalorder %s34, 1
        %s672 = scalar_select %p671, %s34, 1
        %s673 = scalar_lea.vmem %s10, %s672
        %p674 = pneg %p322
        %p675 = pneg %p319
        %p676 = scmp.lt.s32.totalorder %s34, 1
        %s677 = scalar_select %p676, %s34, 1
        %s678 = scalar_lea.vmem %s11, %s677
        %p679 = pneg %p348
        %p680 = pneg %p345
        %p681 = scmp.lt.s32.totalorder %s34, 1
        %s682 = scalar_select %p681, %s34, 1
        %s683 = scalar_lea.vmem %s12, %s682
        %p684 = pneg %p374
        %p685 = pneg %p371
        %p686 = pneg %p395
        %p687 = pneg %p392
        %p688 = pneg %p416
        %p689 = pneg %p413
        %p690 = pneg %p437
        %p691 = pneg %p434
        %p692 = pneg %p458
        %p693 = pneg %p455
        %p694 = pneg %p484
        %p695 = pneg %p481
        %s696 = smul.u32 4, %s33
        %p697 = scmp.lt.s32.totalorder %s696, 3
        %s698 = scalar_select %p697, %s696, 3
        %s699 = smul.addr %s698, 8
        %s700 = scalar_lea.vmem %s0, %s699
        %s701 = smul.u32 4, %s33
        %p702 = scmp.lt.s32.totalorder %s34, 1
        %s703 = scalar_select %p702, %s34, 1
        %s704 = smul.addr %s703, 4
        %s705 = smul.addr %s704, 4
        %s706 = scalar_lea.vmem %s1, %s705
        %p707 = scmp.lt.s32.totalorder %s34, 1
        %s708 = scalar_select %p707, %s34, 1
        %s709 = scalar_lea.vmem %s2, %s708
        %p710 = scmp.lt.s32.totalorder %s34, 1
        %s711 = scalar_select %p710, %s34, 1
        %s712 = smul.addr %s711, 4
        %s713 = smul.addr %s712, 4
        %s714 = scalar_lea.vmem %s3, %s713
        %p715 = scmp.lt.s32.totalorder %s34, 1
        %s716 = scalar_select %p715, %s34, 1
        %s717 = scalar_lea.vmem %s4, %s716
        %p718 = scmp.lt.s32.totalorder %s34, 1
        %s719 = scalar_select %p718, %s34, 1
        %s720 = scalar_lea.vmem %s5, %s719
        %p721 = scmp.lt.s32.totalorder %s34, 1
        %s722 = scalar_select %p721, %s34, 1
        %s723 = scalar_lea.vmem %s6, %s722
        %p724 = scmp.lt.s32.totalorder %s34, 1
        %s725 = scalar_select %p724, %s34, 1
        %s726 = smul.addr %s725, 4
        %s727 = smul.addr %s726, 4
        %s728 = scalar_lea.vmem %s7, %s727
        %p729 = scmp.lt.s32.totalorder %s34, 1
        %s730 = scalar_select %p729, %s34, 1
        %s731 = scalar_lea.vmem %s8, %s730
        %p732 = scmp.lt.s32.totalorder %s34, 1
        %s733 = scalar_select %p732, %s34, 1
        %s734 = smul.addr %s733, 16
        %s735 = smul.addr %s734, 4
        %s736 = scalar_lea.vmem %s9, %s735
        %p737 = scmp.lt.s32.totalorder %s34, 1
        %s738 = scalar_select %p737, %s34, 1
        %s739 = scalar_lea.vmem %s10, %s738
        %p740 = scmp.lt.s32.totalorder %s34, 1
        %s741 = scalar_select %p740, %s34, 1
        %s742 = scalar_lea.vmem %s11, %s741
        %p743 = scmp.lt.s32.totalorder %s34, 1
        %s744 = scalar_select %p743, %s34, 1
        %s745 = scalar_lea.vmem %s12, %s744
        %p747 = scmp.eq.s32.totalorder %s34, 0
        // Predicated region
        $region89: #{enhanced_geometric_transformer_forward.3} parent=87 // pred_check
          %p748 = pneg %p747
        $region90: #{enhanced_geometric_transformer_forward.3} parent=87 // pred_check_branch
          %750 = sbr.rel (%p748) target = $region92
        $region91: #{enhanced_geometric_transformer_forward.3} parent=87 // pred_region
          %v751 = vld [vmem:[%s700] sm:$0xff]
          %v752 = vld [vmem:[%s700 + $0x8] sm:$0xff]
          %v753 = vld [vmem:[%s700 + $0x10] sm:$0xff]
          %v754 = vld [vmem:[%s700 + $0x18] sm:$0xff]
          %vm755 = vcmask 261120
          %756 = vst.msk [vmem:[#allocation2] sm:$0xff] %vm755, %v751
          %757 = vst.msk [vmem:[#allocation2 + $0x8] sm:$0xff] %vm755, %v752
          %758 = vst.msk [vmem:[#allocation2 + $0x10] sm:$0xff] %vm755, %v753
          %759 = vst.msk [vmem:[#allocation2 + $0x18] sm:$0xff] %vm755, %v754
        $region92: #{enhanced_geometric_transformer_forward.3} parent=87 // pred_fallthru
          _
        %v760 = vld [vmem:[#allocation2] sm:$0xff]
        %v761 = vld [vmem:[#allocation2 + $0x8] sm:$0xff]
        %v762 = vld [vmem:[#allocation2 + $0x10] sm:$0xff]
        %v763 = vld [vmem:[#allocation2 + $0x18] sm:$0xff]
        %v764 = vpack.c.bf16 %v761, %v760
        %v765 = vpack.c.bf16 %v763, %v762
        %v766 = vld [vmem:[%s706] sm:$0xf]
        %v767 = vld [vmem:[%s706 + $0x4] sm:$0xf]
        %v768 = vld [vmem:[%s706 + $0x8] sm:$0xf]
        %v769 = vld [vmem:[%s706 + $0xc] sm:$0xf]
        %v770 = vld [vmem:[%s709] sm:$0x1]
        %v772 = vlaneseq
        %v773 = vshrl.u32 %v772, 7
        %v774 = vsub.s32 0, %v773
        %v775 = vrot.slane %v770, %v774
        %v781 = vunpack.c.l.b16 %v766
        %v782 = vunpack.c.l.b16 %v767
        %v783 = vunpack.c.l.b16 %v768
        %v784 = vunpack.c.l.b16 %v769
        %v785 = vpack.c.b16 %v782, %v781
        %v786 = vpack.c.b16 %v784, %v783
        %vm789 = vcmask 261120
        %v791 = vsel %vm789, %v764, 0
        %v794 = vsel %vm789, %v765, 0
        %796 = vmatprep.subr.bf16.mxu0 0
        %797 = vmatpush1.bf16.msra.mxu0 %v785
        %798 = vmatprep.subr.bf16.mxu0 0
        %799 = vmatpush1.bf16.msra.mxu0 %v786
        %800 = vmatprep.subr.bf16.mxu0 0
        %801 = vmatpush1.bf16.msra.mxu0 0
        %802 = vmatprep.subr.bf16.mxu0 0
        %803 = vmatpush1.bf16.msra.mxu0 0
        %804 = vmatprep.subr.bf16.mxu0 0
        %805 = vmatpush1.bf16.msra.mxu0 0
        %806 = vmatprep.subr.bf16.mxu0 0
        %807 = vmatpush1.bf16.msra.mxu0 0
        %808 = vmatprep.subr.bf16.mxu0 0
        %809 = vmatpush1.bf16.msra.mxu0 0
        %810 = vmatprep.subr.bf16.mxu0 0
        %811 = vmatpush1.bf16.msra.mxu0 0
        %812 = vmatprep.subr.bf16.mxu0 0
        %813 = vmatpush1.bf16.msra.mxu0 0
        %814 = vmatprep.subr.bf16.mxu0 0
        %815 = vmatpush1.bf16.msra.mxu0 0
        %816 = vmatprep.subr.bf16.mxu0 0
        %817 = vmatpush1.bf16.msra.mxu0 0
        %818 = vmatprep.subr.bf16.mxu0 0
        %819 = vmatpush1.bf16.msra.mxu0 0
        %820 = vmatprep.subr.bf16.mxu0 0
        %821 = vmatpush1.bf16.msra.mxu0 0
        %822 = vmatprep.subr.bf16.mxu0 0
        %823 = vmatpush1.bf16.msra.mxu0 0
        %824 = vmatprep.subr.bf16.mxu0 0
        %825 = vmatpush1.bf16.msra.mxu0 0
        %826 = vmatprep.subr.bf16.mxu0 0
        %827 = vmatpush1.bf16.msra.mxu0 0
        %828 = vmatprep.mubr.bf16.mxu0 0
        %829 = vmatmul.mubr.bf16.gmra.mrb[0].mxu0 %v791
        %v830 = vpop.f32.mrb[0].mxu0
        %v831 = vadd.f32 %v775, %v830
        %v832 = vpop.f32.mrb[0].mxu0
        %v833 = vpop.f32.mrb[0].mxu0
        %v834 = vadd.f32 %v775, %v833
        %v835 = vpop.f32.mrb[0].mxu0
        %836 = vmatprep.mubr.bf16.mxu0 0
        %837 = vmatmul.mubr.bf16.gmra.mrb[0].mxu0 %v794
        %v838 = vpop.f32.mrb[0].mxu0
        %v839 = vadd.f32 %v775, %v838
        %v840 = vpop.f32.mrb[0].mxu0
        %v841 = vpop.f32.mrb[0].mxu0
        %v842 = vadd.f32 %v775, %v841
        %v843 = vpop.f32.mrb[0].mxu0
        %844 = vdwg.mxu0
        %v845 = vmul.f32 %v831, 0.35355338
        %v846 = vmul.f32 %v834, 0.35355338
        %v847 = vmul.f32 %v839, 0.35355338
        %v848 = vmul.f32 %v842, 0.35355338
        %v849 = vpack.c.bf16 %v846, %v845
        %v850 = vpack.c.bf16 %v848, %v847
        %853 = vrot.lane.b32.xlu0 %v849, 120
        %v854 = vpop.permute.xlu0 %853
        %855 = vrot.lane.b32.xlu0 %v850, 120
        %v856 = vpop.permute.xlu0 %855
        %857 = vrot.lane.b32.xlu0 %v849, 112
        %v858 = vpop.permute.xlu0 %857
        %859 = vrot.lane.b32.xlu0 %v850, 112
        %v860 = vpop.permute.xlu0 %859
        %861 = vrot.lane.b32.xlu0 %v849, 104
        %v862 = vpop.permute.xlu0 %861
        %863 = vrot.lane.b32.xlu0 %v850, 104
        %v864 = vpop.permute.xlu0 %863
        %v865 = vpack.c.bf16 %v834, %v831
        %v866 = vpack.c.bf16 %v842, %v839
        %869 = vrot.lane.b32.xlu0 %v865, 120
        %v870 = vpop.permute.xlu0 %869
        %871 = vrot.lane.b32.xlu0 %v866, 120
        %v872 = vpop.permute.xlu0 %871
        %873 = vrot.lane.b32.xlu0 %v865, 112
        %v874 = vpop.permute.xlu0 %873
        %875 = vrot.lane.b32.xlu0 %v866, 112
        %v876 = vpop.permute.xlu0 %875
        %877 = vrot.lane.b32.xlu0 %v865, 104
        %v878 = vpop.permute.xlu0 %877
        %879 = vrot.lane.b32.xlu0 %v866, 104
        %v880 = vpop.permute.xlu0 %879
        %881 = vrot.lane.b32.xlu0 %v865, 96
        %v882 = vpop.permute.xlu0 %881
        %vm883 = vcmask 64512
        %v885 = vsel %vm883, %v849, 0
        %v888 = vsel %vm883, %v882, 0
        %890 = vmatprep.subr.bf16.mxu0 0
        %891 = vmatpush1.bf16.xpose.msra.mxu0 %v888
        %892 = vmatprep.subr.bf16.mxu0 0
        %893 = vmatpush1.bf16.xpose.msra.mxu0 0
        %894 = vmatprep.subr.bf16.mxu0 0
        %895 = vmatpush1.bf16.xpose.msra.mxu0 0
        %896 = vmatprep.subr.bf16.mxu0 0
        %897 = vmatpush1.bf16.xpose.msra.mxu0 0
        %898 = vmatprep.subr.bf16.mxu0 0
        %899 = vmatpush1.bf16.xpose.msra.mxu0 0
        %900 = vmatprep.subr.bf16.mxu0 0
        %901 = vmatpush1.bf16.xpose.msra.mxu0 0
        %902 = vmatprep.subr.bf16.mxu0 0
        %903 = vmatpush1.bf16.xpose.msra.mxu0 0
        %904 = vmatprep.subr.bf16.mxu0 0
        %905 = vmatpush1.bf16.xpose.msra.mxu0 0
        %906 = vmatprep.subr.bf16.mxu0 0
        %907 = vmatpush1.bf16.xpose.msra.mxu0 0
        %908 = vmatprep.subr.bf16.mxu0 0
        %909 = vmatpush1.bf16.xpose.msra.mxu0 0
        %910 = vmatprep.subr.bf16.mxu0 0
        %911 = vmatpush1.bf16.xpose.msra.mxu0 0
        %912 = vmatprep.subr.bf16.mxu0 0
        %913 = vmatpush1.bf16.xpose.msra.mxu0 0
        %914 = vmatprep.subr.bf16.mxu0 0
        %915 = vmatpush1.bf16.xpose.msra.mxu0 0
        %916 = vmatprep.subr.bf16.mxu0 0
        %917 = vmatpush1.bf16.xpose.msra.mxu0 0
        %918 = vmatprep.subr.bf16.mxu0 0
        %919 = vmatpush1.bf16.xpose.msra.mxu0 0
        %920 = vmatprep.subr.bf16.mxu0 0
        %921 = vmatpush1.bf16.xpose.msra.mxu0 0
        %922 = vmatprep.mubr.bf16.mxu0 0
        %923 = vmatmul.mubr.bf16.gmra.mrb[0].mxu0 %v885
        %v924 = vpop.f32.mrb[0].mxu0
        %v925 = vadd.f32 0.0, %v924
        %v926 = vpop.f32.mrb[0].mxu0
        %v927 = vpop.f32.mrb[0].mxu0
        %v928 = vadd.f32 0.0, %v927
        %v929 = vpop.f32.mrb[0].mxu0
        %930 = vdwg.mxu0
        %931 = vrot.lane.b32.xlu0 %v866, 96
        %v932 = vpop.permute.xlu0 %931
        %v934 = vsel %vm883, %v850, 0
        %v937 = vsel %vm883, %v932, 0
        %939 = vmatprep.subr.bf16.mxu0 0
        %940 = vmatpush1.bf16.xpose.msra.mxu0 %v937
        %941 = vmatprep.subr.bf16.mxu0 0
        %942 = vmatpush1.bf16.xpose.msra.mxu0 0
        %943 = vmatprep.subr.bf16.mxu0 0
        %944 = vmatpush1.bf16.xpose.msra.mxu0 0
        %945 = vmatprep.subr.bf16.mxu0 0
        %946 = vmatpush1.bf16.xpose.msra.mxu0 0
        %947 = vmatprep.subr.bf16.mxu0 0
        %948 = vmatpush1.bf16.xpose.msra.mxu0 0
        %949 = vmatprep.subr.bf16.mxu0 0
        %950 = vmatpush1.bf16.xpose.msra.mxu0 0
        %951 = vmatprep.subr.bf16.mxu0 0
        %952 = vmatpush1.bf16.xpose.msra.mxu0 0
        %953 = vmatprep.subr.bf16.mxu0 0
        %954 = vmatpush1.bf16.xpose.msra.mxu0 0
        %955 = vmatprep.subr.bf16.mxu0 0
        %956 = vmatpush1.bf16.xpose.msra.mxu0 0
        %957 = vmatprep.subr.bf16.mxu0 0
        %958 = vmatpush1.bf16.xpose.msra.mxu0 0
        %959 = vmatprep.subr.bf16.mxu0 0
        %960 = vmatpush1.bf16.xpose.msra.mxu0 0
        %961 = vmatprep.subr.bf16.mxu0 0
        %962 = vmatpush1.bf16.xpose.msra.mxu0 0
        %963 = vmatprep.subr.bf16.mxu0 0
        %964 = vmatpush1.bf16.xpose.msra.mxu0 0
        %965 = vmatprep.subr.bf16.mxu0 0
        %966 = vmatpush1.bf16.xpose.msra.mxu0 0
        %967 = vmatprep.subr.bf16.mxu0 0
        %968 = vmatpush1.bf16.xpose.msra.mxu0 0
        %969 = vmatprep.subr.bf16.mxu0 0
        %970 = vmatpush1.bf16.xpose.msra.mxu0 0
        %971 = vmatprep.mubr.bf16.mxu0 0
        %972 = vmatmul.mubr.bf16.gmra.mrb[0].mxu0 %v934
        %v973 = vpop.f32.mrb[0].mxu0
        %v974 = vadd.f32 0.0, %v973
        %v975 = vpop.f32.mrb[0].mxu0
        %v976 = vpop.f32.mrb[0].mxu0
        %v977 = vadd.f32 0.0, %v976
        %v978 = vpop.f32.mrb[0].mxu0
        %979 = vdwg.mxu0
        %980 = vrot.lane.b32.xlu0 %v870, 96
        %v981 = vpop.permute.xlu0 %980
        %v983 = vsel %vm883, %v854, 0
        %v986 = vsel %vm883, %v981, 0
        %988 = vmatprep.subr.bf16.mxu0 0
        %989 = vmatpush1.bf16.xpose.msra.mxu0 %v986
        %990 = vmatprep.subr.bf16.mxu0 0
        %991 = vmatpush1.bf16.xpose.msra.mxu0 0
        %992 = vmatprep.subr.bf16.mxu0 0
        %993 = vmatpush1.bf16.xpose.msra.mxu0 0
        %994 = vmatprep.subr.bf16.mxu0 0
        %995 = vmatpush1.bf16.xpose.msra.mxu0 0
        %996 = vmatprep.subr.bf16.mxu0 0
        %997 = vmatpush1.bf16.xpose.msra.mxu0 0
        %998 = vmatprep.subr.bf16.mxu0 0
        %999 = vmatpush1.bf16.xpose.msra.mxu0 0
        %1000 = vmatprep.subr.bf16.mxu0 0
        %1001 = vmatpush1.bf16.xpose.msra.mxu0 0
        %1002 = vmatprep.subr.bf16.mxu0 0
        %1003 = vmatpush1.bf16.xpose.msra.mxu0 0
        %1004 = vmatprep.subr.bf16.mxu0 0
        %1005 = vmatpush1.bf16.xpose.msra.mxu0 0
        %1006 = vmatprep.subr.bf16.mxu0 0
        %1007 = vmatpush1.bf16.xpose.msra.mxu0 0
        %1008 = vmatprep.subr.bf16.mxu0 0
        %1009 = vmatpush1.bf16.xpose.msra.mxu0 0
        %1010 = vmatprep.subr.bf16.mxu0 0
        %1011 = vmatpush1.bf16.xpose.msra.mxu0 0
        %1012 = vmatprep.subr.bf16.mxu0 0
        %1013 = vmatpush1.bf16.xpose.msra.mxu0 0
        %1014 = vmatprep.subr.bf16.mxu0 0
        %1015 = vmatpush1.bf16.xpose.msra.mxu0 0
        %1016 = vmatprep.subr.bf16.mxu0 0
        %1017 = vmatpush1.bf16.xpose.msra.mxu0 0
        %1018 = vmatprep.subr.bf16.mxu0 0
        %1019 = vmatpush1.bf16.xpose.msra.mxu0 0
        %1020 = vmatprep.mubr.bf16.mxu0 0
        %1021 = vmatmul.mubr.bf16.gmra.mrb[0].mxu0 %v983
        %v1022 = vpop.f32.mrb[0].mxu0
        %v1023 = vadd.f32 0.0, %v1022
        %v1024 = vpop.f32.mrb[0].mxu0
        %v1025 = vpop.f32.mrb[0].mxu0
        %v1026 = vadd.f32 0.0, %v1025
        %v1027 = vpop.f32.mrb[0].mxu0
        %1028 = vdwg.mxu0
        %1029 = vrot.lane.b32.xlu0 %v872, 96
        %v1030 = vpop.permute.xlu0 %1029
        %v1032 = vsel %vm883, %v856, 0
        %v1035 = vsel %vm883, %v1030, 0
        %1037 = vmatprep.subr.bf16.mxu0 0
        %1038 = vmatpush1.bf16.xpose.msra.mxu0 %v1035
        %1039 = vmatprep.subr.bf16.mxu0 0
        %1040 = vmatpush1.bf16.xpose.msra.mxu0 0
        %1041 = vmatprep.subr.bf16.mxu0 0
        %1042 = vmatpush1.bf16.xpose.msra.mxu0 0
        %1043 = vmatprep.subr.bf16.mxu0 0
        %1044 = vmatpush1.bf16.xpose.msra.mxu0 0
        %1045 = vmatprep.subr.bf16.mxu0 0
        %1046 = vmatpush1.bf16.xpose.msra.mxu0 0
        %1047 = vmatprep.subr.bf16.mxu0 0
        %1048 = vmatpush1.bf16.xpose.msra.mxu0 0
        %1049 = vmatprep.subr.bf16.mxu0 0
        %1050 = vmatpush1.bf16.xpose.msra.mxu0 0
        %1051 = vmatprep.subr.bf16.mxu0 0
        %1052 = vmatpush1.bf16.xpose.msra.mxu0 0
        %1053 = vmatprep.subr.bf16.mxu0 0
        %1054 = vmatpush1.bf16.xpose.msra.mxu0 0
        %1055 = vmatprep.subr.bf16.mxu0 0
        %1056 = vmatpush1.bf16.xpose.msra.mxu0 0
        %1057 = vmatprep.subr.bf16.mxu0 0
        %1058 = vmatpush1.bf16.xpose.msra.mxu0 0
        %1059 = vmatprep.subr.bf16.mxu0 0
        %1060 = vmatpush1.bf16.xpose.msra.mxu0 0
        %1061 = vmatprep.subr.bf16.mxu0 0
        %1062 = vmatpush1.bf16.xpose.msra.mxu0 0
        %1063 = vmatprep.subr.bf16.mxu0 0
        %1064 = vmatpush1.bf16.xpose.msra.mxu0 0
        %1065 = vmatprep.subr.bf16.mxu0 0
        %1066 = vmatpush1.bf16.xpose.msra.mxu0 0
        %1067 = vmatprep.subr.bf16.mxu0 0
        %1068 = vmatpush1.bf16.xpose.msra.mxu0 0
        %1069 = vmatprep.mubr.bf16.mxu0 0
        %1070 = vmatmul.mubr.bf16.gmra.mrb[0].mxu0 %v1032
        %v1071 = vpop.f32.mrb[0].mxu0
        %v1072 = vadd.f32 0.0, %v1071
        %v1073 = vpop.f32.mrb[0].mxu0
        %v1074 = vpop.f32.mrb[0].mxu0
        %v1075 = vadd.f32 0.0, %v1074
        %v1076 = vpop.f32.mrb[0].mxu0
        %1077 = vdwg.mxu0
        %1078 = vrot.lane.b32.xlu0 %v874, 96
        %v1079 = vpop.permute.xlu0 %1078
        %v1081 = vsel %vm883, %v858, 0
        %v1084 = vsel %vm883, %v1079, 0
        %1086 = vmatprep.subr.bf16.mxu0 0
        %1087 = vmatpush1.bf16.xpose.msra.mxu0 %v1084
        %1088 = vmatprep.subr.bf16.mxu0 0
        %1089 = vmatpush1.bf16.xpose.msra.mxu0 0
        %1090 = vmatprep.subr.bf16.mxu0 0
        %1091 = vmatpush1.bf16.xpose.msra.mxu0 0
        %1092 = vmatprep.subr.bf16.mxu0 0
        %1093 = vmatpush1.bf16.xpose.msra.mxu0 0
        %1094 = vmatprep.subr.bf16.mxu0 0
        %1095 = vmatpush1.bf16.xpose.msra.mxu0 0
        %1096 = vmatprep.subr.bf16.mxu0 0
        %1097 = vmatpush1.bf16.xpose.msra.mxu0 0
        %1098 = vmatprep.subr.bf16.mxu0 0
        %1099 = vmatpush1.bf16.xpose.msra.mxu0 0
        %1100 = vmatprep.subr.bf16.mxu0 0
        %1101 = vmatpush1.bf16.xpose.msra.mxu0 0
        %1102 = vmatprep.subr.bf16.mxu0 0
        %1103 = vmatpush1.bf16.xpose.msra.mxu0 0
        %1104 = vmatprep.subr.bf16.mxu0 0
        %1105 = vmatpush1.bf16.xpose.msra.mxu0 0
        %1106 = vmatprep.subr.bf16.mxu0 0
        %1107 = vmatpush1.bf16.xpose.msra.mxu0 0
        %1108 = vmatprep.subr.bf16.mxu0 0
        %1109 = vmatpush1.bf16.xpose.msra.mxu0 0
        %1110 = vmatprep.subr.bf16.mxu0 0
        %1111 = vmatpush1.bf16.xpose.msra.mxu0 0
        %1112 = vmatprep.subr.bf16.mxu0 0
        %1113 = vmatpush1.bf16.xpose.msra.mxu0 0
        %1114 = vmatprep.subr.bf16.mxu0 0
        %1115 = vmatpush1.bf16.xpose.msra.mxu0 0
        %1116 = vmatprep.subr.bf16.mxu0 0
        %1117 = vmatpush1.bf16.xpose.msra.mxu0 0
        %1118 = vmatprep.mubr.bf16.mxu0 0
        %1119 = vmatmul.mubr.bf16.gmra.mrb[0].mxu0 %v1081
        %v1120 = vpop.f32.mrb[0].mxu0
        %v1121 = vadd.f32 0.0, %v1120
        %v1122 = vpop.f32.mrb[0].mxu0
        %v1123 = vpop.f32.mrb[0].mxu0
        %v1124 = vadd.f32 0.0, %v1123
        %v1125 = vpop.f32.mrb[0].mxu0
        %1126 = vdwg.mxu0
        %1127 = vrot.lane.b32.xlu0 %v876, 96
        %v1128 = vpop.permute.xlu0 %1127
        %v1130 = vsel %vm883, %v860, 0
        %v1133 = vsel %vm883, %v1128, 0
        %1135 = vmatprep.subr.bf16.mxu0 0
        %1136 = vmatpush1.bf16.xpose.msra.mxu0 %v1133
        %1137 = vmatprep.subr.bf16.mxu0 0
        %1138 = vmatpush1.bf16.xpose.msra.mxu0 0
        %1139 = vmatprep.subr.bf16.mxu0 0
        %1140 = vmatpush1.bf16.xpose.msra.mxu0 0
        %1141 = vmatprep.subr.bf16.mxu0 0
        %1142 = vmatpush1.bf16.xpose.msra.mxu0 0
        %1143 = vmatprep.subr.bf16.mxu0 0
        %1144 = vmatpush1.bf16.xpose.msra.mxu0 0
        %1145 = vmatprep.subr.bf16.mxu0 0
        %1146 = vmatpush1.bf16.xpose.msra.mxu0 0
        %1147 = vmatprep.subr.bf16.mxu0 0
        %1148 = vmatpush1.bf16.xpose.msra.mxu0 0
        %1149 = vmatprep.subr.bf16.mxu0 0
        %1150 = vmatpush1.bf16.xpose.msra.mxu0 0
        %1151 = vmatprep.subr.bf16.mxu0 0
        %1152 = vmatpush1.bf16.xpose.msra.mxu0 0
        %1153 = vmatprep.subr.bf16.mxu0 0
        %1154 = vmatpush1.bf16.xpose.msra.mxu0 0
        %1155 = vmatprep.subr.bf16.mxu0 0
        %1156 = vmatpush1.bf16.xpose.msra.mxu0 0
        %1157 = vmatprep.subr.bf16.mxu0 0
        %1158 = vmatpush1.bf16.xpose.msra.mxu0 0
        %1159 = vmatprep.subr.bf16.mxu0 0
        %1160 = vmatpush1.bf16.xpose.msra.mxu0 0
        %1161 = vmatprep.subr.bf16.mxu0 0
        %1162 = vmatpush1.bf16.xpose.msra.mxu0 0
        %1163 = vmatprep.subr.bf16.mxu0 0
        %1164 = vmatpush1.bf16.xpose.msra.mxu0 0
        %1165 = vmatprep.subr.bf16.mxu0 0
        %1166 = vmatpush1.bf16.xpose.msra.mxu0 0
        %1167 = vmatprep.mubr.bf16.mxu0 0
        %1168 = vmatmul.mubr.bf16.gmra.mrb[0].mxu0 %v1130
        %v1169 = vpop.f32.mrb[0].mxu0
        %v1170 = vadd.f32 0.0, %v1169
        %v1171 = vpop.f32.mrb[0].mxu0
        %v1172 = vpop.f32.mrb[0].mxu0
        %v1173 = vadd.f32 0.0, %v1172
        %v1174 = vpop.f32.mrb[0].mxu0
        %1175 = vdwg.mxu0
        %1176 = vrot.lane.b32.xlu0 %v878, 96
        %v1177 = vpop.permute.xlu0 %1176
        %v1179 = vsel %vm883, %v862, 0
        %v1182 = vsel %vm883, %v1177, 0
        %1184 = vmatprep.subr.bf16.mxu0 0
        %1185 = vmatpush1.bf16.xpose.msra.mxu0 %v1182
        %1186 = vmatprep.subr.bf16.mxu0 0
        %1187 = vmatpush1.bf16.xpose.msra.mxu0 0
        %1188 = vmatprep.subr.bf16.mxu0 0
        %1189 = vmatpush1.bf16.xpose.msra.mxu0 0
        %1190 = vmatprep.subr.bf16.mxu0 0
        %1191 = vmatpush1.bf16.xpose.msra.mxu0 0
        %1192 = vmatprep.subr.bf16.mxu0 0
        %1193 = vmatpush1.bf16.xpose.msra.mxu0 0
        %1194 = vmatprep.subr.bf16.mxu0 0
        %1195 = vmatpush1.bf16.xpose.msra.mxu0 0
        %1196 = vmatprep.subr.bf16.mxu0 0
        %1197 = vmatpush1.bf16.xpose.msra.mxu0 0
        %1198 = vmatprep.subr.bf16.mxu0 0
        %1199 = vmatpush1.bf16.xpose.msra.mxu0 0
        %1200 = vmatprep.subr.bf16.mxu0 0
        %1201 = vmatpush1.bf16.xpose.msra.mxu0 0
        %1202 = vmatprep.subr.bf16.mxu0 0
        %1203 = vmatpush1.bf16.xpose.msra.mxu0 0
        %1204 = vmatprep.subr.bf16.mxu0 0
        %1205 = vmatpush1.bf16.xpose.msra.mxu0 0
        %1206 = vmatprep.subr.bf16.mxu0 0
        %1207 = vmatpush1.bf16.xpose.msra.mxu0 0
        %1208 = vmatprep.subr.bf16.mxu0 0
        %1209 = vmatpush1.bf16.xpose.msra.mxu0 0
        %1210 = vmatprep.subr.bf16.mxu0 0
        %1211 = vmatpush1.bf16.xpose.msra.mxu0 0
        %1212 = vmatprep.subr.bf16.mxu0 0
        %1213 = vmatpush1.bf16.xpose.msra.mxu0 0
        %1214 = vmatprep.subr.bf16.mxu0 0
        %1215 = vmatpush1.bf16.xpose.msra.mxu0 0
        %1216 = vmatprep.mubr.bf16.mxu0 0
        %1217 = vmatmul.mubr.bf16.gmra.mrb[0].mxu0 %v1179
        %v1218 = vpop.f32.mrb[0].mxu0
        %v1219 = vadd.f32 0.0, %v1218
        %v1220 = vpop.f32.mrb[0].mxu0
        %v1221 = vpop.f32.mrb[0].mxu0
        %v1222 = vadd.f32 0.0, %v1221
        %v1223 = vpop.f32.mrb[0].mxu0
        %1224 = vdwg.mxu0
        %1225 = vrot.lane.b32.xlu0 %v880, 96
        %v1226 = vpop.permute.xlu0 %1225
        %v1228 = vsel %vm883, %v864, 0
        %v1231 = vsel %vm883, %v1226, 0
        %1233 = vmatprep.subr.bf16.mxu0 0
        %1234 = vmatpush1.bf16.xpose.msra.mxu0 %v1231
        %1235 = vmatprep.subr.bf16.mxu0 0
        %1236 = vmatpush1.bf16.xpose.msra.mxu0 0
        %1237 = vmatprep.subr.bf16.mxu0 0
        %1238 = vmatpush1.bf16.xpose.msra.mxu0 0
        %1239 = vmatprep.subr.bf16.mxu0 0
        %1240 = vmatpush1.bf16.xpose.msra.mxu0 0
        %1241 = vmatprep.subr.bf16.mxu0 0
        %1242 = vmatpush1.bf16.xpose.msra.mxu0 0
        %1243 = vmatprep.subr.bf16.mxu0 0
        %1244 = vmatpush1.bf16.xpose.msra.mxu0 0
        %1245 = vmatprep.subr.bf16.mxu0 0
        %1246 = vmatpush1.bf16.xpose.msra.mxu0 0
        %1247 = vmatprep.subr.bf16.mxu0 0
        %1248 = vmatpush1.bf16.xpose.msra.mxu0 0
        %1249 = vmatprep.subr.bf16.mxu0 0
        %1250 = vmatpush1.bf16.xpose.msra.mxu0 0
        %1251 = vmatprep.subr.bf16.mxu0 0
        %1252 = vmatpush1.bf16.xpose.msra.mxu0 0
        %1253 = vmatprep.subr.bf16.mxu0 0
        %1254 = vmatpush1.bf16.xpose.msra.mxu0 0
        %1255 = vmatprep.subr.bf16.mxu0 0
        %1256 = vmatpush1.bf16.xpose.msra.mxu0 0
        %1257 = vmatprep.subr.bf16.mxu0 0
        %1258 = vmatpush1.bf16.xpose.msra.mxu0 0
        %1259 = vmatprep.subr.bf16.mxu0 0
        %1260 = vmatpush1.bf16.xpose.msra.mxu0 0
        %1261 = vmatprep.subr.bf16.mxu0 0
        %1262 = vmatpush1.bf16.xpose.msra.mxu0 0
        %1263 = vmatprep.subr.bf16.mxu0 0
        %1264 = vmatpush1.bf16.xpose.msra.mxu0 0
        %1265 = vmatprep.mubr.bf16.mxu0 0
        %1266 = vmatmul.mubr.bf16.gmra.mrb[0].mxu0 %v1228
        %v1267 = vpop.f32.mrb[0].mxu0
        %v1268 = vadd.f32 0.0, %v1267
        %v1269 = vpop.f32.mrb[0].mxu0
        %v1270 = vpop.f32.mrb[0].mxu0
        %v1271 = vadd.f32 0.0, %v1270
        %v1272 = vpop.f32.mrb[0].mxu0
        %1273 = vdwg.mxu0
        %vm1274 = vcmask 130048
        %v1275 = vsel %vm1274, %v925, -inf
        %1276 = vmax.xlane.f32.xlu0 %v1275
        %v1277 = vpop.xlane.xlu0 %1276
        %v1278 = vsel %vm1274, %v928, -inf
        %1279 = vmax.xlane.f32.xlu0 %v1278
        %v1280 = vpop.xlane.xlu0 %1279
        %v1281 = vsel %vm1274, %v974, -inf
        %1282 = vmax.xlane.f32.xlu0 %v1281
        %v1283 = vpop.xlane.xlu0 %1282
        %v1284 = vsel %vm1274, %v977, -inf
        %1285 = vmax.xlane.f32.xlu0 %v1284
        %v1286 = vpop.xlane.xlu0 %1285
        %v1287 = vsel %vm1274, %v1023, -inf
        %1288 = vmax.xlane.f32.xlu0 %v1287
        %v1289 = vpop.xlane.xlu0 %1288
        %v1290 = vsel %vm1274, %v1026, -inf
        %1291 = vmax.xlane.f32.xlu0 %v1290
        %v1292 = vpop.xlane.xlu0 %1291
        %v1293 = vsel %vm1274, %v1072, -inf
        %1294 = vmax.xlane.f32.xlu0 %v1293
        %v1295 = vpop.xlane.xlu0 %1294
        %v1296 = vsel %vm1274, %v1075, -inf
        %1297 = vmax.xlane.f32.xlu0 %v1296
        %v1298 = vpop.xlane.xlu0 %1297
        %v1299 = vsel %vm1274, %v1121, -inf
        %1300 = vmax.xlane.f32.xlu0 %v1299
        %v1301 = vpop.xlane.xlu0 %1300
        %v1302 = vsel %vm1274, %v1124, -inf
        %1303 = vmax.xlane.f32.xlu0 %v1302
        %v1304 = vpop.xlane.xlu0 %1303
        %v1305 = vsel %vm1274, %v1170, -inf
        %1306 = vmax.xlane.f32.xlu0 %v1305
        %v1307 = vpop.xlane.xlu0 %1306
        %v1308 = vsel %vm1274, %v1173, -inf
        %1309 = vmax.xlane.f32.xlu0 %v1308
        %v1310 = vpop.xlane.xlu0 %1309
        %v1311 = vsel %vm1274, %v1219, -inf
        %1312 = vmax.xlane.f32.xlu0 %v1311
        %v1313 = vpop.xlane.xlu0 %1312
        %v1314 = vsel %vm1274, %v1222, -inf
        %1315 = vmax.xlane.f32.xlu0 %v1314
        %v1316 = vpop.xlane.xlu0 %1315
        %v1317 = vsel %vm1274, %v1268, -inf
        %1318 = vmax.xlane.f32.xlu0 %v1317
        %v1319 = vpop.xlane.xlu0 %1318
        %v1320 = vsel %vm1274, %v1271, -inf
        %1321 = vmax.xlane.f32.xlu0 %v1320
        %v1322 = vpop.xlane.xlu0 %1321
        %v1323 = vsub.f32 -inf, %v1277
        %v1324 = vsub.f32 -inf, %v1280
        %v1325 = vsub.f32 -inf, %v1283
        %v1326 = vsub.f32 -inf, %v1286
        %v1327 = vsub.f32 -inf, %v1289
        %v1328 = vsub.f32 -inf, %v1292
        %v1329 = vsub.f32 -inf, %v1295
        %v1330 = vsub.f32 -inf, %v1298
        %v1331 = vsub.f32 -inf, %v1301
        %v1332 = vsub.f32 -inf, %v1304
        %v1333 = vsub.f32 -inf, %v1307
        %v1334 = vsub.f32 -inf, %v1310
        %v1335 = vsub.f32 -inf, %v1313
        %v1336 = vsub.f32 -inf, %v1316
        %v1337 = vsub.f32 -inf, %v1319
        %v1338 = vsub.f32 -inf, %v1322
        %v1339 = vmul.f32 %v1323, 1.442695
        %v1340 = vpow.pop %v1339
        %v1341 = vmul.f32 %v1324, 1.442695
        %v1342 = vpow.pop %v1341
        %v1343 = vmul.f32 %v1325, 1.442695
        %v1344 = vpow.pop %v1343
        %v1345 = vmul.f32 %v1326, 1.442695
        %v1346 = vpow.pop %v1345
        %v1347 = vmul.f32 %v1327, 1.442695
        %v1348 = vpow.pop %v1347
        %v1349 = vmul.f32 %v1328, 1.442695
        %v1350 = vpow.pop %v1349
        %v1351 = vmul.f32 %v1329, 1.442695
        %v1352 = vpow.pop %v1351
        %v1353 = vmul.f32 %v1330, 1.442695
        %v1354 = vpow.pop %v1353
        %v1355 = vmul.f32 %v1331, 1.442695
        %v1356 = vpow.pop %v1355
        %v1357 = vmul.f32 %v1332, 1.442695
        %v1358 = vpow.pop %v1357
        %v1359 = vmul.f32 %v1333, 1.442695
        %v1360 = vpow.pop %v1359
        %v1361 = vmul.f32 %v1334, 1.442695
        %v1362 = vpow.pop %v1361
        %v1363 = vmul.f32 %v1335, 1.442695
        %v1364 = vpow.pop %v1363
        %v1365 = vmul.f32 %v1336, 1.442695
        %v1366 = vpow.pop %v1365
        %v1367 = vmul.f32 %v1337, 1.442695
        %v1368 = vpow.pop %v1367
        %v1369 = vmul.f32 %v1338, 1.442695
        %v1370 = vpow.pop %v1369
        %v1371 = vsub.f32 %v925, %v1277
        %v1372 = vsub.f32 %v928, %v1280
        %v1373 = vsub.f32 %v974, %v1283
        %v1374 = vsub.f32 %v977, %v1286
        %v1375 = vsub.f32 %v1023, %v1289
        %v1376 = vsub.f32 %v1026, %v1292
        %v1377 = vsub.f32 %v1072, %v1295
        %v1378 = vsub.f32 %v1075, %v1298
        %v1379 = vsub.f32 %v1121, %v1301
        %v1380 = vsub.f32 %v1124, %v1304
        %v1381 = vsub.f32 %v1170, %v1307
        %v1382 = vsub.f32 %v1173, %v1310
        %v1383 = vsub.f32 %v1219, %v1313
        %v1384 = vsub.f32 %v1222, %v1316
        %v1385 = vsub.f32 %v1268, %v1319
        %v1386 = vsub.f32 %v1271, %v1322
        %v1387 = vmul.f32 %v1371, 1.442695
        %v1388 = vpow.pop %v1387
        %v1389 = vmul.f32 %v1372, 1.442695
        %v1390 = vpow.pop %v1389
        %v1391 = vmul.f32 %v1373, 1.442695
        %v1392 = vpow.pop %v1391
        %v1393 = vmul.f32 %v1374, 1.442695
        %v1394 = vpow.pop %v1393
        %v1395 = vmul.f32 %v1375, 1.442695
        %v1396 = vpow.pop %v1395
        %v1397 = vmul.f32 %v1376, 1.442695
        %v1398 = vpow.pop %v1397
        %v1399 = vmul.f32 %v1377, 1.442695
        %v1400 = vpow.pop %v1399
        %v1401 = vmul.f32 %v1378, 1.442695
        %v1402 = vpow.pop %v1401
        %v1403 = vmul.f32 %v1379, 1.442695
        %v1404 = vpow.pop %v1403
        %v1405 = vmul.f32 %v1380, 1.442695
        %v1406 = vpow.pop %v1405
        %v1407 = vmul.f32 %v1381, 1.442695
        %v1408 = vpow.pop %v1407
        %v1409 = vmul.f32 %v1382, 1.442695
        %v1410 = vpow.pop %v1409
        %v1411 = vmul.f32 %v1383, 1.442695
        %v1412 = vpow.pop %v1411
        %v1413 = vmul.f32 %v1384, 1.442695
        %v1414 = vpow.pop %v1413
        %v1415 = vmul.f32 %v1385, 1.442695
        %v1416 = vpow.pop %v1415
        %v1417 = vmul.f32 %v1386, 1.442695
        %v1418 = vpow.pop %v1417
        %v1419 = vmul.f32 %v1340, 0.0
        %v1420 = vmul.f32 %v1342, 0.0
        %v1421 = vmul.f32 %v1344, 0.0
        %v1422 = vmul.f32 %v1346, 0.0
        %v1423 = vmul.f32 %v1348, 0.0
        %v1424 = vmul.f32 %v1350, 0.0
        %v1425 = vmul.f32 %v1352, 0.0
        %v1426 = vmul.f32 %v1354, 0.0
        %v1427 = vmul.f32 %v1356, 0.0
        %v1428 = vmul.f32 %v1358, 0.0
        %v1429 = vmul.f32 %v1360, 0.0
        %v1430 = vmul.f32 %v1362, 0.0
        %v1431 = vmul.f32 %v1364, 0.0
        %v1432 = vmul.f32 %v1366, 0.0
        %v1433 = vmul.f32 %v1368, 0.0
        %v1434 = vmul.f32 %v1370, 0.0
        %v1435 = vsel %vm1274, %v1388, 0.0
        %1436 = vadd.xlane.f32.xlu0 %v1435
        %v1437 = vpop.xlane.xlu0 %1436
        %v1438 = vsel %vm1274, %v1390, 0.0
        %1439 = vadd.xlane.f32.xlu0 %v1438
        %v1440 = vpop.xlane.xlu0 %1439
        %v1441 = vsel %vm1274, %v1392, 0.0
        %1442 = vadd.xlane.f32.xlu0 %v1441
        %v1443 = vpop.xlane.xlu0 %1442
        %v1444 = vsel %vm1274, %v1394, 0.0
        %1445 = vadd.xlane.f32.xlu0 %v1444
        %v1446 = vpop.xlane.xlu0 %1445
        %v1447 = vsel %vm1274, %v1396, 0.0
        %1448 = vadd.xlane.f32.xlu0 %v1447
        %v1449 = vpop.xlane.xlu0 %1448
        %v1450 = vsel %vm1274, %v1398, 0.0
        %1451 = vadd.xlane.f32.xlu0 %v1450
        %v1452 = vpop.xlane.xlu0 %1451
        %v1453 = vsel %vm1274, %v1400, 0.0
        %1454 = vadd.xlane.f32.xlu0 %v1453
        %v1455 = vpop.xlane.xlu0 %1454
        %v1456 = vsel %vm1274, %v1402, 0.0
        %1457 = vadd.xlane.f32.xlu0 %v1456
        %v1458 = vpop.xlane.xlu0 %1457
        %v1459 = vsel %vm1274, %v1404, 0.0
        %1460 = vadd.xlane.f32.xlu0 %v1459
        %v1461 = vpop.xlane.xlu0 %1460
        %v1462 = vsel %vm1274, %v1406, 0.0
        %1463 = vadd.xlane.f32.xlu0 %v1462
        %v1464 = vpop.xlane.xlu0 %1463
        %v1465 = vsel %vm1274, %v1408, 0.0
        %1466 = vadd.xlane.f32.xlu0 %v1465
        %v1467 = vpop.xlane.xlu0 %1466
        %v1468 = vsel %vm1274, %v1410, 0.0
        %1469 = vadd.xlane.f32.xlu0 %v1468
        %v1470 = vpop.xlane.xlu0 %1469
        %v1471 = vsel %vm1274, %v1412, 0.0
        %1472 = vadd.xlane.f32.xlu0 %v1471
        %v1473 = vpop.xlane.xlu0 %1472
        %v1474 = vsel %vm1274, %v1414, 0.0
        %1475 = vadd.xlane.f32.xlu0 %v1474
        %v1476 = vpop.xlane.xlu0 %1475
        %v1477 = vsel %vm1274, %v1416, 0.0
        %1478 = vadd.xlane.f32.xlu0 %v1477
        %v1479 = vpop.xlane.xlu0 %1478
        %v1480 = vsel %vm1274, %v1418, 0.0
        %1481 = vadd.xlane.f32.xlu0 %v1480
        %v1482 = vpop.xlane.xlu0 %1481
        %v1483 = vadd.f32 %v1419, %v1437
        %v1484 = vadd.f32 %v1420, %v1440
        %v1485 = vadd.f32 %v1421, %v1443
        %v1486 = vadd.f32 %v1422, %v1446
        %v1487 = vadd.f32 %v1423, %v1449
        %v1488 = vadd.f32 %v1424, %v1452
        %v1489 = vadd.f32 %v1425, %v1455
        %v1490 = vadd.f32 %v1426, %v1458
        %v1491 = vadd.f32 %v1427, %v1461
        %v1492 = vadd.f32 %v1428, %v1464
        %v1493 = vadd.f32 %v1429, %v1467
        %v1494 = vadd.f32 %v1430, %v1470
        %v1495 = vadd.f32 %v1431, %v1473
        %v1496 = vadd.f32 %v1432, %v1476
        %v1497 = vadd.f32 %v1433, %v1479
        %v1498 = vadd.f32 %v1434, %v1482
        %v1499 = vpack.c.bf16 %v1390, %v1388
        %v1500 = vpack.c.bf16 %v1394, %v1392
        %v1501 = vpack.c.bf16 %v1398, %v1396
        %v1502 = vpack.c.bf16 %v1402, %v1400
        %v1503 = vpack.c.bf16 %v1406, %v1404
        %v1504 = vpack.c.bf16 %v1410, %v1408
        %v1505 = vpack.c.bf16 %v1414, %v1412
        %v1506 = vpack.c.bf16 %v1418, %v1416
        %1507 = vrot.lane.b32.xlu0 %v865, 64
        %v1508 = vpop.permute.xlu0 %1507
        %v1511 = vsel %vm1274, %v1499, 0
        %1513 = vmatprep.subr.bf16.mxu0 0
        %1514 = vmatpush1.bf16.msra.mxu0 %v1508
        %1515 = vmatprep.subr.bf16.mxu0 0
        %1516 = vmatpush1.bf16.msra.mxu0 0
        %1517 = vmatprep.subr.bf16.mxu0 0
        %1518 = vmatpush1.bf16.msra.mxu0 0
        %1519 = vmatprep.subr.bf16.mxu0 0
        %1520 = vmatpush1.bf16.msra.mxu0 0
        %1521 = vmatprep.subr.bf16.mxu0 0
        %1522 = vmatpush1.bf16.msra.mxu0 0
        %1523 = vmatprep.subr.bf16.mxu0 0
        %1524 = vmatpush1.bf16.msra.mxu0 0
        %1525 = vmatprep.subr.bf16.mxu0 0
        %1526 = vmatpush1.bf16.msra.mxu0 0
        %1527 = vmatprep.subr.bf16.mxu0 0
        %1528 = vmatpush1.bf16.msra.mxu0 0
        %1529 = vmatprep.subr.bf16.mxu0 0
        %1530 = vmatpush1.bf16.msra.mxu0 0
        %1531 = vmatprep.subr.bf16.mxu0 0
        %1532 = vmatpush1.bf16.msra.mxu0 0
        %1533 = vmatprep.subr.bf16.mxu0 0
        %1534 = vmatpush1.bf16.msra.mxu0 0
        %1535 = vmatprep.subr.bf16.mxu0 0
        %1536 = vmatpush1.bf16.msra.mxu0 0
        %1537 = vmatprep.subr.bf16.mxu0 0
        %1538 = vmatpush1.bf16.msra.mxu0 0
        %1539 = vmatprep.subr.bf16.mxu0 0
        %1540 = vmatpush1.bf16.msra.mxu0 0
        %1541 = vmatprep.subr.bf16.mxu0 0
        %1542 = vmatpush1.bf16.msra.mxu0 0
        %1543 = vmatprep.subr.bf16.mxu0 0
        %1544 = vmatpush1.bf16.msra.mxu0 0
        %1545 = vmatprep.mubr.bf16.mxu0 0
        %1546 = vmatmul.mubr.bf16.gmra.mrb[0].mxu0 %v1511
        %v1547 = vpop.f32.mrb[0].mxu0
        %v1548 = vadd.f32 0.0, %v1547
        %v1549 = vpop.f32.mrb[0].mxu0
        %v1550 = vpop.f32.mrb[0].mxu0
        %v1551 = vadd.f32 0.0, %v1550
        %v1552 = vpop.f32.mrb[0].mxu0
        %1553 = vdwg.mxu0
        %1554 = vrot.lane.b32.xlu0 %v866, 64
        %v1555 = vpop.permute.xlu0 %1554
        %v1558 = vsel %vm1274, %v1500, 0
        %1560 = vmatprep.subr.bf16.mxu0 0
        %1561 = vmatpush1.bf16.msra.mxu0 %v1555
        %1562 = vmatprep.subr.bf16.mxu0 0
        %1563 = vmatpush1.bf16.msra.mxu0 0
        %1564 = vmatprep.subr.bf16.mxu0 0
        %1565 = vmatpush1.bf16.msra.mxu0 0
        %1566 = vmatprep.subr.bf16.mxu0 0
        %1567 = vmatpush1.bf16.msra.mxu0 0
        %1568 = vmatprep.subr.bf16.mxu0 0
        %1569 = vmatpush1.bf16.msra.mxu0 0
        %1570 = vmatprep.subr.bf16.mxu0 0
        %1571 = vmatpush1.bf16.msra.mxu0 0
        %1572 = vmatprep.subr.bf16.mxu0 0
        %1573 = vmatpush1.bf16.msra.mxu0 0
        %1574 = vmatprep.subr.bf16.mxu0 0
        %1575 = vmatpush1.bf16.msra.mxu0 0
        %1576 = vmatprep.subr.bf16.mxu0 0
        %1577 = vmatpush1.bf16.msra.mxu0 0
        %1578 = vmatprep.subr.bf16.mxu0 0
        %1579 = vmatpush1.bf16.msra.mxu0 0
        %1580 = vmatprep.subr.bf16.mxu0 0
        %1581 = vmatpush1.bf16.msra.mxu0 0
        %1582 = vmatprep.subr.bf16.mxu0 0
        %1583 = vmatpush1.bf16.msra.mxu0 0
        %1584 = vmatprep.subr.bf16.mxu0 0
        %1585 = vmatpush1.bf16.msra.mxu0 0
        %1586 = vmatprep.subr.bf16.mxu0 0
        %1587 = vmatpush1.bf16.msra.mxu0 0
        %1588 = vmatprep.subr.bf16.mxu0 0
        %1589 = vmatpush1.bf16.msra.mxu0 0
        %1590 = vmatprep.subr.bf16.mxu0 0
        %1591 = vmatpush1.bf16.msra.mxu0 0
        %1592 = vmatprep.mubr.bf16.mxu0 0
        %1593 = vmatmul.mubr.bf16.gmra.mrb[0].mxu0 %v1558
        %v1594 = vpop.f32.mrb[0].mxu0
        %v1595 = vadd.f32 0.0, %v1594
        %v1596 = vpop.f32.mrb[0].mxu0
        %v1597 = vpop.f32.mrb[0].mxu0
        %v1598 = vadd.f32 0.0, %v1597
        %v1599 = vpop.f32.mrb[0].mxu0
        %1600 = vdwg.mxu0
        %1601 = vrot.lane.b32.xlu0 %v870, 64
        %v1602 = vpop.permute.xlu0 %1601
        %v1605 = vsel %vm1274, %v1501, 0
        %1607 = vmatprep.subr.bf16.mxu0 0
        %1608 = vmatpush1.bf16.msra.mxu0 %v1602
        %1609 = vmatprep.subr.bf16.mxu0 0
        %1610 = vmatpush1.bf16.msra.mxu0 0
        %1611 = vmatprep.subr.bf16.mxu0 0
        %1612 = vmatpush1.bf16.msra.mxu0 0
        %1613 = vmatprep.subr.bf16.mxu0 0
        %1614 = vmatpush1.bf16.msra.mxu0 0
        %1615 = vmatprep.subr.bf16.mxu0 0
        %1616 = vmatpush1.bf16.msra.mxu0 0
        %1617 = vmatprep.subr.bf16.mxu0 0
        %1618 = vmatpush1.bf16.msra.mxu0 0
        %1619 = vmatprep.subr.bf16.mxu0 0
        %1620 = vmatpush1.bf16.msra.mxu0 0
        %1621 = vmatprep.subr.bf16.mxu0 0
        %1622 = vmatpush1.bf16.msra.mxu0 0
        %1623 = vmatprep.subr.bf16.mxu0 0
        %1624 = vmatpush1.bf16.msra.mxu0 0
        %1625 = vmatprep.subr.bf16.mxu0 0
        %1626 = vmatpush1.bf16.msra.mxu0 0
        %1627 = vmatprep.subr.bf16.mxu0 0
        %1628 = vmatpush1.bf16.msra.mxu0 0
        %1629 = vmatprep.subr.bf16.mxu0 0
        %1630 = vmatpush1.bf16.msra.mxu0 0
        %1631 = vmatprep.subr.bf16.mxu0 0
        %1632 = vmatpush1.bf16.msra.mxu0 0
        %1633 = vmatprep.subr.bf16.mxu0 0
        %1634 = vmatpush1.bf16.msra.mxu0 0
        %1635 = vmatprep.subr.bf16.mxu0 0
        %1636 = vmatpush1.bf16.msra.mxu0 0
        %1637 = vmatprep.subr.bf16.mxu0 0
        %1638 = vmatpush1.bf16.msra.mxu0 0
        %1639 = vmatprep.mubr.bf16.mxu0 0
        %1640 = vmatmul.mubr.bf16.gmra.mrb[0].mxu0 %v1605
        %v1641 = vpop.f32.mrb[0].mxu0
        %v1642 = vadd.f32 0.0, %v1641
        %v1643 = vpop.f32.mrb[0].mxu0
        %v1644 = vpop.f32.mrb[0].mxu0
        %v1645 = vadd.f32 0.0, %v1644
        %v1646 = vpop.f32.mrb[0].mxu0
        %1647 = vdwg.mxu0
        %1648 = vrot.lane.b32.xlu0 %v872, 64
        %v1649 = vpop.permute.xlu0 %1648
        %v1652 = vsel %vm1274, %v1502, 0
        %1654 = vmatprep.subr.bf16.mxu0 0
        %1655 = vmatpush1.bf16.msra.mxu0 %v1649
        %1656 = vmatprep.subr.bf16.mxu0 0
        %1657 = vmatpush1.bf16.msra.mxu0 0
        %1658 = vmatprep.subr.bf16.mxu0 0
        %1659 = vmatpush1.bf16.msra.mxu0 0
        %1660 = vmatprep.subr.bf16.mxu0 0
        %1661 = vmatpush1.bf16.msra.mxu0 0
        %1662 = vmatprep.subr.bf16.mxu0 0
        %1663 = vmatpush1.bf16.msra.mxu0 0
        %1664 = vmatprep.subr.bf16.mxu0 0
        %1665 = vmatpush1.bf16.msra.mxu0 0
        %1666 = vmatprep.subr.bf16.mxu0 0
        %1667 = vmatpush1.bf16.msra.mxu0 0
        %1668 = vmatprep.subr.bf16.mxu0 0
        %1669 = vmatpush1.bf16.msra.mxu0 0
        %1670 = vmatprep.subr.bf16.mxu0 0
        %1671 = vmatpush1.bf16.msra.mxu0 0
        %1672 = vmatprep.subr.bf16.mxu0 0
        %1673 = vmatpush1.bf16.msra.mxu0 0
        %1674 = vmatprep.subr.bf16.mxu0 0
        %1675 = vmatpush1.bf16.msra.mxu0 0
        %1676 = vmatprep.subr.bf16.mxu0 0
        %1677 = vmatpush1.bf16.msra.mxu0 0
        %1678 = vmatprep.subr.bf16.mxu0 0
        %1679 = vmatpush1.bf16.msra.mxu0 0
        %1680 = vmatprep.subr.bf16.mxu0 0
        %1681 = vmatpush1.bf16.msra.mxu0 0
        %1682 = vmatprep.subr.bf16.mxu0 0
        %1683 = vmatpush1.bf16.msra.mxu0 0
        %1684 = vmatprep.subr.bf16.mxu0 0
        %1685 = vmatpush1.bf16.msra.mxu0 0
        %1686 = vmatprep.mubr.bf16.mxu0 0
        %1687 = vmatmul.mubr.bf16.gmra.mrb[0].mxu0 %v1652
        %v1688 = vpop.f32.mrb[0].mxu0
        %v1689 = vadd.f32 0.0, %v1688
        %v1690 = vpop.f32.mrb[0].mxu0
        %v1691 = vpop.f32.mrb[0].mxu0
        %v1692 = vadd.f32 0.0, %v1691
        %v1693 = vpop.f32.mrb[0].mxu0
        %1694 = vdwg.mxu0
        %1695 = vrot.lane.b32.xlu0 %v874, 64
        %v1696 = vpop.permute.xlu0 %1695
        %v1699 = vsel %vm1274, %v1503, 0
        %1701 = vmatprep.subr.bf16.mxu0 0
        %1702 = vmatpush1.bf16.msra.mxu0 %v1696
        %1703 = vmatprep.subr.bf16.mxu0 0
        %1704 = vmatpush1.bf16.msra.mxu0 0
        %1705 = vmatprep.subr.bf16.mxu0 0
        %1706 = vmatpush1.bf16.msra.mxu0 0
        %1707 = vmatprep.subr.bf16.mxu0 0
        %1708 = vmatpush1.bf16.msra.mxu0 0
        %1709 = vmatprep.subr.bf16.mxu0 0
        %1710 = vmatpush1.bf16.msra.mxu0 0
        %1711 = vmatprep.subr.bf16.mxu0 0
        %1712 = vmatpush1.bf16.msra.mxu0 0
        %1713 = vmatprep.subr.bf16.mxu0 0
        %1714 = vmatpush1.bf16.msra.mxu0 0
        %1715 = vmatprep.subr.bf16.mxu0 0
        %1716 = vmatpush1.bf16.msra.mxu0 0
        %1717 = vmatprep.subr.bf16.mxu0 0
        %1718 = vmatpush1.bf16.msra.mxu0 0
        %1719 = vmatprep.subr.bf16.mxu0 0
        %1720 = vmatpush1.bf16.msra.mxu0 0
        %1721 = vmatprep.subr.bf16.mxu0 0
        %1722 = vmatpush1.bf16.msra.mxu0 0
        %1723 = vmatprep.subr.bf16.mxu0 0
        %1724 = vmatpush1.bf16.msra.mxu0 0
        %1725 = vmatprep.subr.bf16.mxu0 0
        %1726 = vmatpush1.bf16.msra.mxu0 0
        %1727 = vmatprep.subr.bf16.mxu0 0
        %1728 = vmatpush1.bf16.msra.mxu0 0
        %1729 = vmatprep.subr.bf16.mxu0 0
        %1730 = vmatpush1.bf16.msra.mxu0 0
        %1731 = vmatprep.subr.bf16.mxu0 0
        %1732 = vmatpush1.bf16.msra.mxu0 0
        %1733 = vmatprep.mubr.bf16.mxu0 0
        %1734 = vmatmul.mubr.bf16.gmra.mrb[0].mxu0 %v1699
        %v1735 = vpop.f32.mrb[0].mxu0
        %v1736 = vadd.f32 0.0, %v1735
        %v1737 = vpop.f32.mrb[0].mxu0
        %v1738 = vpop.f32.mrb[0].mxu0
        %v1739 = vadd.f32 0.0, %v1738
        %v1740 = vpop.f32.mrb[0].mxu0
        %1741 = vdwg.mxu0
        %1742 = vrot.lane.b32.xlu0 %v876, 64
        %v1743 = vpop.permute.xlu0 %1742
        %v1746 = vsel %vm1274, %v1504, 0
        %1748 = vmatprep.subr.bf16.mxu0 0
        %1749 = vmatpush1.bf16.msra.mxu0 %v1743
        %1750 = vmatprep.subr.bf16.mxu0 0
        %1751 = vmatpush1.bf16.msra.mxu0 0
        %1752 = vmatprep.subr.bf16.mxu0 0
        %1753 = vmatpush1.bf16.msra.mxu0 0
        %1754 = vmatprep.subr.bf16.mxu0 0
        %1755 = vmatpush1.bf16.msra.mxu0 0
        %1756 = vmatprep.subr.bf16.mxu0 0
        %1757 = vmatpush1.bf16.msra.mxu0 0
        %1758 = vmatprep.subr.bf16.mxu0 0
        %1759 = vmatpush1.bf16.msra.mxu0 0
        %1760 = vmatprep.subr.bf16.mxu0 0
        %1761 = vmatpush1.bf16.msra.mxu0 0
        %1762 = vmatprep.subr.bf16.mxu0 0
        %1763 = vmatpush1.bf16.msra.mxu0 0
        %1764 = vmatprep.subr.bf16.mxu0 0
        %1765 = vmatpush1.bf16.msra.mxu0 0
        %1766 = vmatprep.subr.bf16.mxu0 0
        %1767 = vmatpush1.bf16.msra.mxu0 0
        %1768 = vmatprep.subr.bf16.mxu0 0
        %1769 = vmatpush1.bf16.msra.mxu0 0
        %1770 = vmatprep.subr.bf16.mxu0 0
        %1771 = vmatpush1.bf16.msra.mxu0 0
        %1772 = vmatprep.subr.bf16.mxu0 0
        %1773 = vmatpush1.bf16.msra.mxu0 0
        %1774 = vmatprep.subr.bf16.mxu0 0
        %1775 = vmatpush1.bf16.msra.mxu0 0
        %1776 = vmatprep.subr.bf16.mxu0 0
        %1777 = vmatpush1.bf16.msra.mxu0 0
        %1778 = vmatprep.subr.bf16.mxu0 0
        %1779 = vmatpush1.bf16.msra.mxu0 0
        %1780 = vmatprep.mubr.bf16.mxu0 0
        %1781 = vmatmul.mubr.bf16.gmra.mrb[0].mxu0 %v1746
        %v1782 = vpop.f32.mrb[0].mxu0
        %v1783 = vadd.f32 0.0, %v1782
        %v1784 = vpop.f32.mrb[0].mxu0
        %v1785 = vpop.f32.mrb[0].mxu0
        %v1786 = vadd.f32 0.0, %v1785
        %v1787 = vpop.f32.mrb[0].mxu0
        %1788 = vdwg.mxu0
        %1789 = vrot.lane.b32.xlu0 %v878, 64
        %v1790 = vpop.permute.xlu0 %1789
        %v1793 = vsel %vm1274, %v1505, 0
        %1795 = vmatprep.subr.bf16.mxu0 0
        %1796 = vmatpush1.bf16.msra.mxu0 %v1790
        %1797 = vmatprep.subr.bf16.mxu0 0
        %1798 = vmatpush1.bf16.msra.mxu0 0
        %1799 = vmatprep.subr.bf16.mxu0 0
        %1800 = vmatpush1.bf16.msra.mxu0 0
        %1801 = vmatprep.subr.bf16.mxu0 0
        %1802 = vmatpush1.bf16.msra.mxu0 0
        %1803 = vmatprep.subr.bf16.mxu0 0
        %1804 = vmatpush1.bf16.msra.mxu0 0
        %1805 = vmatprep.subr.bf16.mxu0 0
        %1806 = vmatpush1.bf16.msra.mxu0 0
        %1807 = vmatprep.subr.bf16.mxu0 0
        %1808 = vmatpush1.bf16.msra.mxu0 0
        %1809 = vmatprep.subr.bf16.mxu0 0
        %1810 = vmatpush1.bf16.msra.mxu0 0
        %1811 = vmatprep.subr.bf16.mxu0 0
        %1812 = vmatpush1.bf16.msra.mxu0 0
        %1813 = vmatprep.subr.bf16.mxu0 0
        %1814 = vmatpush1.bf16.msra.mxu0 0
        %1815 = vmatprep.subr.bf16.mxu0 0
        %1816 = vmatpush1.bf16.msra.mxu0 0
        %1817 = vmatprep.subr.bf16.mxu0 0
        %1818 = vmatpush1.bf16.msra.mxu0 0
        %1819 = vmatprep.subr.bf16.mxu0 0
        %1820 = vmatpush1.bf16.msra.mxu0 0
        %1821 = vmatprep.subr.bf16.mxu0 0
        %1822 = vmatpush1.bf16.msra.mxu0 0
        %1823 = vmatprep.subr.bf16.mxu0 0
        %1824 = vmatpush1.bf16.msra.mxu0 0
        %1825 = vmatprep.subr.bf16.mxu0 0
        %1826 = vmatpush1.bf16.msra.mxu0 0
        %1827 = vmatprep.mubr.bf16.mxu0 0
        %1828 = vmatmul.mubr.bf16.gmra.mrb[0].mxu0 %v1793
        %v1829 = vpop.f32.mrb[0].mxu0
        %v1830 = vadd.f32 0.0, %v1829
        %v1831 = vpop.f32.mrb[0].mxu0
        %v1832 = vpop.f32.mrb[0].mxu0
        %v1833 = vadd.f32 0.0, %v1832
        %v1834 = vpop.f32.mrb[0].mxu0
        %1835 = vdwg.mxu0
        %1836 = vrot.lane.b32.xlu0 %v880, 64
        %v1837 = vpop.permute.xlu0 %1836
        %v1840 = vsel %vm1274, %v1506, 0
        %1842 = vmatprep.subr.bf16.mxu0 0
        %1843 = vmatpush1.bf16.msra.mxu0 %v1837
        %1844 = vmatprep.subr.bf16.mxu0 0
        %1845 = vmatpush1.bf16.msra.mxu0 0
        %1846 = vmatprep.subr.bf16.mxu0 0
        %1847 = vmatpush1.bf16.msra.mxu0 0
        %1848 = vmatprep.subr.bf16.mxu0 0
        %1849 = vmatpush1.bf16.msra.mxu0 0
        %1850 = vmatprep.subr.bf16.mxu0 0
        %1851 = vmatpush1.bf16.msra.mxu0 0
        %1852 = vmatprep.subr.bf16.mxu0 0
        %1853 = vmatpush1.bf16.msra.mxu0 0
        %1854 = vmatprep.subr.bf16.mxu0 0
        %1855 = vmatpush1.bf16.msra.mxu0 0
        %1856 = vmatprep.subr.bf16.mxu0 0
        %1857 = vmatpush1.bf16.msra.mxu0 0
        %1858 = vmatprep.subr.bf16.mxu0 0
        %1859 = vmatpush1.bf16.msra.mxu0 0
        %1860 = vmatprep.subr.bf16.mxu0 0
        %1861 = vmatpush1.bf16.msra.mxu0 0
        %1862 = vmatprep.subr.bf16.mxu0 0
        %1863 = vmatpush1.bf16.msra.mxu0 0
        %1864 = vmatprep.subr.bf16.mxu0 0
        %1865 = vmatpush1.bf16.msra.mxu0 0
        %1866 = vmatprep.subr.bf16.mxu0 0
        %1867 = vmatpush1.bf16.msra.mxu0 0
        %1868 = vmatprep.subr.bf16.mxu0 0
        %1869 = vmatpush1.bf16.msra.mxu0 0
        %1870 = vmatprep.subr.bf16.mxu0 0
        %1871 = vmatpush1.bf16.msra.mxu0 0
        %1872 = vmatprep.subr.bf16.mxu0 0
        %1873 = vmatpush1.bf16.msra.mxu0 0
        %1874 = vmatprep.mubr.bf16.mxu0 0
        %1875 = vmatmul.mubr.bf16.gmra.mrb[0].mxu0 %v1840
        %v1876 = vpop.f32.mrb[0].mxu0
        %v1877 = vadd.f32 0.0, %v1876
        %v1878 = vpop.f32.mrb[0].mxu0
        %v1879 = vpop.f32.mrb[0].mxu0
        %v1880 = vadd.f32 0.0, %v1879
        %v1881 = vpop.f32.mrb[0].mxu0
        %1882 = vdwg.mxu0
        %v1883 = vadd.f32 %v1419, %v1548
        %v1884 = vadd.f32 %v1420, %v1551
        %v1885 = vadd.f32 %v1421, %v1595
        %v1886 = vadd.f32 %v1422, %v1598
        %v1887 = vadd.f32 %v1423, %v1642
        %v1888 = vadd.f32 %v1424, %v1645
        %v1889 = vadd.f32 %v1425, %v1689
        %v1890 = vadd.f32 %v1426, %v1692
        %v1891 = vadd.f32 %v1427, %v1736
        %v1892 = vadd.f32 %v1428, %v1739
        %v1893 = vadd.f32 %v1429, %v1783
        %v1894 = vadd.f32 %v1430, %v1786
        %v1895 = vadd.f32 %v1431, %v1830
        %v1896 = vadd.f32 %v1432, %v1833
        %v1897 = vadd.f32 %v1433, %v1877
        %v1898 = vadd.f32 %v1434, %v1880
        %v1899 = vrcp.pop %v1483
        %v1900 = vrcp.pop %v1484
        %v1901 = vrcp.pop %v1485
        %v1902 = vrcp.pop %v1486
        %v1903 = vrcp.pop %v1487
        %v1904 = vrcp.pop %v1488
        %v1905 = vrcp.pop %v1489
        %v1906 = vrcp.pop %v1490
        %v1907 = vrcp.pop %v1491
        %v1908 = vrcp.pop %v1492
        %v1909 = vrcp.pop %v1493
        %v1910 = vrcp.pop %v1494
        %v1911 = vrcp.pop %v1495
        %v1912 = vrcp.pop %v1496
        %v1913 = vrcp.pop %v1497
        %v1914 = vrcp.pop %v1498
        %v1915 = vmul.f32 %v1883, %v1899
        %v1916 = vmul.f32 %v1884, %v1900
        %v1917 = vmul.f32 %v1885, %v1901
        %v1918 = vmul.f32 %v1886, %v1902
        %v1919 = vmul.f32 %v1887, %v1903
        %v1920 = vmul.f32 %v1888, %v1904
        %v1921 = vmul.f32 %v1889, %v1905
        %v1922 = vmul.f32 %v1890, %v1906
        %v1923 = vmul.f32 %v1891, %v1907
        %v1924 = vmul.f32 %v1892, %v1908
        %v1925 = vmul.f32 %v1893, %v1909
        %v1926 = vmul.f32 %v1894, %v1910
        %v1927 = vmul.f32 %v1895, %v1911
        %v1928 = vmul.f32 %v1896, %v1912
        %v1929 = vmul.f32 %v1897, %v1913
        %v1930 = vmul.f32 %v1898, %v1914
        %1935 = vrot.lane.b32.xlu0 %v1919, 8
        %v1936 = vpop.permute.xlu0 %1935
        %1937 = vrot.lane.b32.xlu0 %v1920, 8
        %v1938 = vpop.permute.xlu0 %1937
        %1939 = vrot.lane.b32.xlu0 %v1921, 8
        %v1940 = vpop.permute.xlu0 %1939
        %1941 = vrot.lane.b32.xlu0 %v1922, 8
        %v1942 = vpop.permute.xlu0 %1941
        %1951 = vrot.lane.b32.xlu0 %v1923, 16
        %v1952 = vpop.permute.xlu0 %1951
        %1953 = vrot.lane.b32.xlu0 %v1924, 16
        %v1954 = vpop.permute.xlu0 %1953
        %1955 = vrot.lane.b32.xlu0 %v1925, 16
        %v1956 = vpop.permute.xlu0 %1955
        %1957 = vrot.lane.b32.xlu0 %v1926, 16
        %v1958 = vpop.permute.xlu0 %1957
        %1967 = vrot.lane.b32.xlu0 %v1927, 24
        %v1968 = vpop.permute.xlu0 %1967
        %1969 = vrot.lane.b32.xlu0 %v1928, 24
        %v1970 = vpop.permute.xlu0 %1969
        %1971 = vrot.lane.b32.xlu0 %v1929, 24
        %v1972 = vpop.permute.xlu0 %1971
        %1973 = vrot.lane.b32.xlu0 %v1930, 24
        %v1974 = vpop.permute.xlu0 %1973
        %v1979 = vsel %vm883, %v1915, %v1936
        %v1980 = vsel %vm883, %v1916, %v1938
        %v1981 = vsel %vm883, %v1917, %v1940
        %v1982 = vsel %vm883, %v1918, %v1942
        %v1983 = vsel %vm1274, %v1979, %v1952
        %v1984 = vsel %vm1274, %v1980, %v1954
        %v1985 = vsel %vm1274, %v1981, %v1956
        %v1986 = vsel %vm1274, %v1982, %v1958
        %vm1987 = vcmask 195584
        %v1988 = vsel %vm1987, %v1983, %v1968
        %v1989 = vsel %vm1987, %v1984, %v1970
        %v1990 = vsel %vm1987, %v1985, %v1972
        %v1991 = vsel %vm1987, %v1986, %v1974
        %v1992 = vpack.c.bf16 %v1989, %v1988
        %v1993 = vpack.c.bf16 %v1991, %v1990
        %v1994 = vld [vmem:[%s714] sm:$0xf]
        %v1995 = vld [vmem:[%s714 + $0x4] sm:$0xf]
        %v1996 = vld [vmem:[%s714 + $0x8] sm:$0xf]
        %v1997 = vld [vmem:[%s714 + $0xc] sm:$0xf]
        %v1998 = vld [vmem:[%s717] sm:$0x1]
        %v2000 = vlaneseq
        %v2001 = vshrl.u32 %v2000, 7
        %v2002 = vsub.s32 0, %v2001
        %v2003 = vrot.slane %v1998, %v2002
        %v2009 = vunpack.c.l.b16 %v1994
        %v2010 = vunpack.c.l.b16 %v1995
        %v2011 = vunpack.c.l.b16 %v1996
        %v2012 = vunpack.c.l.b16 %v1997
        %v2013 = vpack.c.b16 %v2010, %v2009
        %v2014 = vpack.c.b16 %v2012, %v2011
        %v2018 = vsel %vm789, %v1992, 0
        %v2021 = vsel %vm789, %v1993, 0
        %2023 = vmatprep.subr.bf16.mxu0 0
        %2024 = vmatpush1.bf16.msra.mxu0 %v2013
        %2025 = vmatprep.subr.bf16.mxu0 0
        %2026 = vmatpush1.bf16.msra.mxu0 %v2014
        %2027 = vmatprep.subr.bf16.mxu0 0
        %2028 = vmatpush1.bf16.msra.mxu0 0
        %2029 = vmatprep.subr.bf16.mxu0 0
        %2030 = vmatpush1.bf16.msra.mxu0 0
        %2031 = vmatprep.subr.bf16.mxu0 0
        %2032 = vmatpush1.bf16.msra.mxu0 0
        %2033 = vmatprep.subr.bf16.mxu0 0
        %2034 = vmatpush1.bf16.msra.mxu0 0
        %2035 = vmatprep.subr.bf16.mxu0 0
        %2036 = vmatpush1.bf16.msra.mxu0 0
        %2037 = vmatprep.subr.bf16.mxu0 0
        %2038 = vmatpush1.bf16.msra.mxu0 0
        %2039 = vmatprep.subr.bf16.mxu0 0
        %2040 = vmatpush1.bf16.msra.mxu0 0
        %2041 = vmatprep.subr.bf16.mxu0 0
        %2042 = vmatpush1.bf16.msra.mxu0 0
        %2043 = vmatprep.subr.bf16.mxu0 0
        %2044 = vmatpush1.bf16.msra.mxu0 0
        %2045 = vmatprep.subr.bf16.mxu0 0
        %2046 = vmatpush1.bf16.msra.mxu0 0
        %2047 = vmatprep.subr.bf16.mxu0 0
        %2048 = vmatpush1.bf16.msra.mxu0 0
        %2049 = vmatprep.subr.bf16.mxu0 0
        %2050 = vmatpush1.bf16.msra.mxu0 0
        %2051 = vmatprep.subr.bf16.mxu0 0
        %2052 = vmatpush1.bf16.msra.mxu0 0
        %2053 = vmatprep.subr.bf16.mxu0 0
        %2054 = vmatpush1.bf16.msra.mxu0 0
        %2055 = vmatprep.mubr.bf16.mxu0 0
        %2056 = vmatmul.mubr.bf16.gmra.mrb[0].mxu0 %v2018
        %v2057 = vpop.f32.mrb[0].mxu0
        %v2058 = vadd.f32 %v2003, %v2057
        %v2059 = vpop.f32.mrb[0].mxu0
        %v2060 = vpop.f32.mrb[0].mxu0
        %v2061 = vadd.f32 %v2003, %v2060
        %v2062 = vpop.f32.mrb[0].mxu0
        %2063 = vmatprep.mubr.bf16.mxu0 0
        %2064 = vmatmul.mubr.bf16.gmra.mrb[0].mxu0 %v2021
        %v2065 = vpop.f32.mrb[0].mxu0
        %v2066 = vadd.f32 %v2003, %v2065
        %v2067 = vpop.f32.mrb[0].mxu0
        %v2068 = vpop.f32.mrb[0].mxu0
        %v2069 = vadd.f32 %v2003, %v2068
        %v2070 = vpop.f32.mrb[0].mxu0
        %2071 = vdwg.mxu0
        %v2072 = vadd.f32 %v760, %v2058
        %v2073 = vadd.f32 %v761, %v2061
        %v2074 = vadd.f32 %v762, %v2066
        %v2075 = vadd.f32 %v763, %v2069
        %v2076 = vld [vmem:[%s720] sm:$0x1]
        %v2077 = vld [vmem:[%s723] sm:$0x1]
        %v2078 = vsel %vm789, %v2072, 0.0
        %2079 = vadd.xlane.f32.xlu0 %v2078
        %v2080 = vpop.xlane.xlu0 %2079
        %v2081 = vsel %vm789, %v2073, 0.0
        %2082 = vadd.xlane.f32.xlu0 %v2081
        %v2083 = vpop.xlane.xlu0 %2082
        %v2084 = vsel %vm789, %v2074, 0.0
        %2085 = vadd.xlane.f32.xlu0 %v2084
        %v2086 = vpop.xlane.xlu0 %2085
        %v2087 = vsel %vm789, %v2075, 0.0
        %2088 = vadd.xlane.f32.xlu0 %v2087
        %v2089 = vpop.xlane.xlu0 %2088
        %v2090 = vrcp.pop 32.0
        %v2091 = vmul.f32 %v2080, %v2090
        %v2092 = vmul.f32 %v2083, %v2090
        %v2093 = vmul.f32 %v2086, %v2090
        %v2094 = vmul.f32 %v2089, %v2090
        %v2095 = vsub.f32 %v2072, %v2091
        %v2096 = vsub.f32 %v2073, %v2092
        %v2097 = vsub.f32 %v2074, %v2093
        %v2098 = vsub.f32 %v2075, %v2094
        %v2099 = vmul.f32 %v2095, %v2095
        %v2100 = vmul.f32 %v2096, %v2096
        %v2101 = vmul.f32 %v2097, %v2097
        %v2102 = vmul.f32 %v2098, %v2098
        %v2103 = vsel %vm789, %v2099, 0.0
        %2104 = vadd.xlane.f32.xlu0 %v2103
        %v2105 = vpop.xlane.xlu0 %2104
        %v2106 = vsel %vm789, %v2100, 0.0
        %2107 = vadd.xlane.f32.xlu0 %v2106
        %v2108 = vpop.xlane.xlu0 %2107
        %v2109 = vsel %vm789, %v2101, 0.0
        %2110 = vadd.xlane.f32.xlu0 %v2109
        %v2111 = vpop.xlane.xlu0 %2110
        %v2112 = vsel %vm789, %v2102, 0.0
        %2113 = vadd.xlane.f32.xlu0 %v2112
        %v2114 = vpop.xlane.xlu0 %2113
        %v2115 = vmul.f32 %v2105, %v2090
        %v2116 = vmul.f32 %v2108, %v2090
        %v2117 = vmul.f32 %v2111, %v2090
        %v2118 = vmul.f32 %v2114, %v2090
        %v2119 = vadd.f32 %v2115, 1e-05
        %v2120 = vadd.f32 %v2116, 1e-05
        %v2121 = vadd.f32 %v2117, 1e-05
        %v2122 = vadd.f32 %v2118, 1e-05
        %v2123 = vrsqrt.pop %v2119
        %v2124 = vrsqrt.pop %v2120
        %v2125 = vrsqrt.pop %v2121
        %v2126 = vrsqrt.pop %v2122
        %v2127 = vmul.f32 %v2095, %v2123
        %v2128 = vmul.f32 %v2096, %v2124
        %v2129 = vmul.f32 %v2097, %v2125
        %v2130 = vmul.f32 %v2098, %v2126
        %v2132 = vlaneseq
        %v2133 = vshrl.u32 %v2132, 7
        %v2134 = vsub.s32 0, %v2133
        %v2135 = vrot.slane %v2076, %v2134
        %v2137 = vmul.f32 %v2127, %v2135
        %v2138 = vmul.f32 %v2128, %v2135
        %v2139 = vmul.f32 %v2129, %v2135
        %v2140 = vmul.f32 %v2130, %v2135
        %v2142 = vlaneseq
        %v2143 = vshrl.u32 %v2142, 7
        %v2144 = vsub.s32 0, %v2143
        %v2145 = vrot.slane %v2077, %v2144
        %v2147 = vadd.f32 %v2137, %v2145
        %v2148 = vadd.f32 %v2138, %v2145
        %v2149 = vadd.f32 %v2139, %v2145
        %v2150 = vadd.f32 %v2140, %v2145
        %v2151 = vpack.c.bf16 %v2148, %v2147
        %v2152 = vpack.c.bf16 %v2150, %v2149
        %v2153 = vld [vmem:[%s728] sm:$0xf]
        %v2154 = vld [vmem:[%s728 + $0x4] sm:$0xf]
        %v2155 = vld [vmem:[%s728 + $0x8] sm:$0xf]
        %v2156 = vld [vmem:[%s728 + $0xc] sm:$0xf]
        %v2157 = vld [vmem:[%s731] sm:$0x1]
        %v2159 = vlaneseq
        %v2160 = vshrl.u32 %v2159, 7
        %v2161 = vsub.s32 0, %v2160
        %v2162 = vrot.slane %v2157, %v2161
        %v2168 = vunpack.c.l.b16 %v2153
        %v2169 = vunpack.c.l.b16 %v2154
        %v2170 = vunpack.c.l.b16 %v2155
        %v2171 = vunpack.c.l.b16 %v2156
        %v2172 = vpack.c.b16 %v2169, %v2168
        %v2173 = vpack.c.b16 %v2171, %v2170
        %v2177 = vsel %vm789, %v2151, 0
        %v2180 = vsel %vm789, %v2152, 0
        %2182 = vmatprep.subr.bf16.mxu0 0
        %2183 = vmatpush1.bf16.msra.mxu0 %v2172
        %2184 = vmatprep.subr.bf16.mxu0 0
        %2185 = vmatpush1.bf16.msra.mxu0 %v2173
        %2186 = vmatprep.subr.bf16.mxu0 0
        %2187 = vmatpush1.bf16.msra.mxu0 0
        %2188 = vmatprep.subr.bf16.mxu0 0
        %2189 = vmatpush1.bf16.msra.mxu0 0
        %2190 = vmatprep.subr.bf16.mxu0 0
        %2191 = vmatpush1.bf16.msra.mxu0 0
        %2192 = vmatprep.subr.bf16.mxu0 0
        %2193 = vmatpush1.bf16.msra.mxu0 0
        %2194 = vmatprep.subr.bf16.mxu0 0
        %2195 = vmatpush1.bf16.msra.mxu0 0
        %2196 = vmatprep.subr.bf16.mxu0 0
        %2197 = vmatpush1.bf16.msra.mxu0 0
        %2198 = vmatprep.subr.bf16.mxu0 0
        %2199 = vmatpush1.bf16.msra.mxu0 0
        %2200 = vmatprep.subr.bf16.mxu0 0
        %2201 = vmatpush1.bf16.msra.mxu0 0
        %2202 = vmatprep.subr.bf16.mxu0 0
        %2203 = vmatpush1.bf16.msra.mxu0 0
        %2204 = vmatprep.subr.bf16.mxu0 0
        %2205 = vmatpush1.bf16.msra.mxu0 0
        %2206 = vmatprep.subr.bf16.mxu0 0
        %2207 = vmatpush1.bf16.msra.mxu0 0
        %2208 = vmatprep.subr.bf16.mxu0 0
        %2209 = vmatpush1.bf16.msra.mxu0 0
        %2210 = vmatprep.subr.bf16.mxu0 0
        %2211 = vmatpush1.bf16.msra.mxu0 0
        %2212 = vmatprep.subr.bf16.mxu0 0
        %2213 = vmatpush1.bf16.msra.mxu0 0
        %2214 = vmatprep.mubr.bf16.mxu0 0
        %2215 = vmatmul.mubr.bf16.gmra.mrb[0].mxu0 %v2177
        %v2216 = vpop.f32.mrb[0].mxu0
        %v2217 = vadd.f32 %v2162, %v2216
        %v2218 = vpop.f32.mrb[0].mxu0
        %v2219 = vpop.f32.mrb[0].mxu0
        %v2220 = vadd.f32 %v2162, %v2219
        %v2221 = vpop.f32.mrb[0].mxu0
        %2222 = vmatprep.mubr.bf16.mxu0 0
        %2223 = vmatmul.mubr.bf16.gmra.mrb[0].mxu0 %v2180
        %v2224 = vpop.f32.mrb[0].mxu0
        %v2225 = vadd.f32 %v2162, %v2224
        %v2226 = vpop.f32.mrb[0].mxu0
        %v2227 = vpop.f32.mrb[0].mxu0
        %v2228 = vadd.f32 %v2162, %v2227
        %v2229 = vpop.f32.mrb[0].mxu0
        %2230 = vdwg.mxu0
        %v2231 = vmax.f32 %v2217, 0.0
        %v2232 = vmax.f32 %v2220, 0.0
        %v2233 = vmax.f32 %v2225, 0.0
        %v2234 = vmax.f32 %v2228, 0.0
        %v2235 = vpack.c.bf16 %v2232, %v2231
        %v2236 = vpack.c.bf16 %v2234, %v2233
        %v2237 = vld [vmem:[%s736] sm:$0xf]
        %v2238 = vld [vmem:[%s736 + $0x4] sm:$0xf]
        %v2239 = vld [vmem:[%s736 + $0x8] sm:$0xf]
        %v2240 = vld [vmem:[%s736 + $0xc] sm:$0xf]
        %v2241 = vld [vmem:[%s736 + $0x10] sm:$0xf]
        %v2242 = vld [vmem:[%s736 + $0x14] sm:$0xf]
        %v2243 = vld [vmem:[%s736 + $0x18] sm:$0xf]
        %v2244 = vld [vmem:[%s736 + $0x1c] sm:$0xf]
        %v2245 = vld [vmem:[%s736 + $0x20] sm:$0xf]
        %v2246 = vld [vmem:[%s736 + $0x24] sm:$0xf]
        %v2247 = vld [vmem:[%s736 + $0x28] sm:$0xf]
        %v2248 = vld [vmem:[%s736 + $0x2c] sm:$0xf]
        %v2249 = vld [vmem:[%s736 + $0x30] sm:$0xf]
        %v2250 = vld [vmem:[%s736 + $0x34] sm:$0xf]
        %v2251 = vld [vmem:[%s736 + $0x38] sm:$0xf]
        %v2252 = vld [vmem:[%s736 + $0x3c] sm:$0xf]
        %v2253 = vld [vmem:[%s739] sm:$0x1]
        %v2255 = vlaneseq
        %v2256 = vshrl.u32 %v2255, 7
        %v2257 = vsub.s32 0, %v2256
        %v2258 = vrot.slane %v2253, %v2257
        %v2276 = vunpack.c.l.b16 %v2237
        %v2277 = vunpack.c.l.b16 %v2238
        %v2278 = vunpack.c.l.b16 %v2239
        %v2279 = vunpack.c.l.b16 %v2240
        %v2280 = vunpack.c.l.b16 %v2241
        %v2281 = vunpack.c.l.b16 %v2242
        %v2282 = vunpack.c.l.b16 %v2243
        %v2283 = vunpack.c.l.b16 %v2244
        %v2284 = vunpack.c.l.b16 %v2245
        %v2285 = vunpack.c.l.b16 %v2246
        %v2286 = vunpack.c.l.b16 %v2247
        %v2287 = vunpack.c.l.b16 %v2248
        %v2288 = vunpack.c.l.b16 %v2249
        %v2289 = vunpack.c.l.b16 %v2250
        %v2290 = vunpack.c.l.b16 %v2251
        %v2291 = vunpack.c.l.b16 %v2252
        %v2292 = vpack.c.b16 %v2277, %v2276
        %v2293 = vpack.c.b16 %v2279, %v2278
        %v2294 = vpack.c.b16 %v2281, %v2280
        %v2295 = vpack.c.b16 %v2283, %v2282
        %v2296 = vpack.c.b16 %v2285, %v2284
        %v2297 = vpack.c.b16 %v2287, %v2286
        %v2298 = vpack.c.b16 %v2289, %v2288
        %v2299 = vpack.c.b16 %v2291, %v2290
        %2308 = vmatprep.subr.bf16.mxu0 0
        %2309 = vmatpush1.bf16.msra.mxu0 %v2292
        %2310 = vmatprep.subr.bf16.mxu0 0
        %2311 = vmatpush1.bf16.msra.mxu0 %v2293
        %2312 = vmatprep.subr.bf16.mxu0 0
        %2313 = vmatpush1.bf16.msra.mxu0 %v2294
        %2314 = vmatprep.subr.bf16.mxu0 0
        %2315 = vmatpush1.bf16.msra.mxu0 %v2295
        %2316 = vmatprep.subr.bf16.mxu0 0
        %2317 = vmatpush1.bf16.msra.mxu0 %v2296
        %2318 = vmatprep.subr.bf16.mxu0 0
        %2319 = vmatpush1.bf16.msra.mxu0 %v2297
        %2320 = vmatprep.subr.bf16.mxu0 0
        %2321 = vmatpush1.bf16.msra.mxu0 %v2298
        %2322 = vmatprep.subr.bf16.mxu0 0
        %2323 = vmatpush1.bf16.msra.mxu0 %v2299
        %2324 = vmatprep.subr.bf16.mxu0 0
        %2325 = vmatpush1.bf16.msra.mxu0 0
        %2326 = vmatprep.subr.bf16.mxu0 0
        %2327 = vmatpush1.bf16.msra.mxu0 0
        %2328 = vmatprep.subr.bf16.mxu0 0
        %2329 = vmatpush1.bf16.msra.mxu0 0
        %2330 = vmatprep.subr.bf16.mxu0 0
        %2331 = vmatpush1.bf16.msra.mxu0 0
        %2332 = vmatprep.subr.bf16.mxu0 0
        %2333 = vmatpush1.bf16.msra.mxu0 0
        %2334 = vmatprep.subr.bf16.mxu0 0
        %2335 = vmatpush1.bf16.msra.mxu0 0
        %2336 = vmatprep.subr.bf16.mxu0 0
        %2337 = vmatpush1.bf16.msra.mxu0 0
        %2338 = vmatprep.subr.bf16.mxu0 0
        %2339 = vmatpush1.bf16.msra.mxu0 0
        %2340 = vmatprep.mubr.bf16.mxu0 0
        %2341 = vmatmul.mubr.bf16.gmra.mrb[0].mxu0 %v2235
        %v2342 = vpop.f32.mrb[0].mxu0
        %v2343 = vadd.f32 %v2258, %v2342
        %v2344 = vpop.f32.mrb[0].mxu0
        %v2345 = vpop.f32.mrb[0].mxu0
        %v2346 = vadd.f32 %v2258, %v2345
        %v2347 = vpop.f32.mrb[0].mxu0
        %2348 = vmatprep.mubr.bf16.mxu0 0
        %2349 = vmatmul.mubr.bf16.gmra.mrb[0].mxu0 %v2236
        %v2350 = vpop.f32.mrb[0].mxu0
        %v2351 = vadd.f32 %v2258, %v2350
        %v2352 = vpop.f32.mrb[0].mxu0
        %v2353 = vpop.f32.mrb[0].mxu0
        %v2354 = vadd.f32 %v2258, %v2353
        %v2355 = vpop.f32.mrb[0].mxu0
        %2356 = vdwg.mxu0
        %v2357 = vadd.f32 %v2147, %v2343
        %v2358 = vadd.f32 %v2148, %v2346
        %v2359 = vadd.f32 %v2149, %v2351
        %v2360 = vadd.f32 %v2150, %v2354
        %v2361 = vld [vmem:[%s742] sm:$0x1]
        %v2362 = vld [vmem:[%s745] sm:$0x1]
        %v2363 = vsel %vm789, %v2357, 0.0
        %2364 = vadd.xlane.f32.xlu0 %v2363
        %v2365 = vpop.xlane.xlu0 %2364
        %v2366 = vsel %vm789, %v2358, 0.0
        %2367 = vadd.xlane.f32.xlu0 %v2366
        %v2368 = vpop.xlane.xlu0 %2367
        %v2369 = vsel %vm789, %v2359, 0.0
        %2370 = vadd.xlane.f32.xlu0 %v2369
        %v2371 = vpop.xlane.xlu0 %2370
        %v2372 = vsel %vm789, %v2360, 0.0
        %2373 = vadd.xlane.f32.xlu0 %v2372
        %v2374 = vpop.xlane.xlu0 %2373
        %v2375 = vmul.f32 %v2365, %v2090
        %v2376 = vmul.f32 %v2368, %v2090
        %v2377 = vmul.f32 %v2371, %v2090
        %v2378 = vmul.f32 %v2374, %v2090
        %v2379 = vsub.f32 %v2357, %v2375
        %v2380 = vsub.f32 %v2358, %v2376
        %v2381 = vsub.f32 %v2359, %v2377
        %v2382 = vsub.f32 %v2360, %v2378
        %v2383 = vmul.f32 %v2379, %v2379
        %v2384 = vmul.f32 %v2380, %v2380
        %v2385 = vmul.f32 %v2381, %v2381
        %v2386 = vmul.f32 %v2382, %v2382
        %v2387 = vsel %vm789, %v2383, 0.0
        %2388 = vadd.xlane.f32.xlu0 %v2387
        %v2389 = vpop.xlane.xlu0 %2388
        %v2390 = vsel %vm789, %v2384, 0.0
        %2391 = vadd.xlane.f32.xlu0 %v2390
        %v2392 = vpop.xlane.xlu0 %2391
        %v2393 = vsel %vm789, %v2385, 0.0
        %2394 = vadd.xlane.f32.xlu0 %v2393
        %v2395 = vpop.xlane.xlu0 %2394
        %v2396 = vsel %vm789, %v2386, 0.0
        %2397 = vadd.xlane.f32.xlu0 %v2396
        %v2398 = vpop.xlane.xlu0 %2397
        %v2399 = vmul.f32 %v2389, %v2090
        %v2400 = vmul.f32 %v2392, %v2090
        %v2401 = vmul.f32 %v2395, %v2090
        %v2402 = vmul.f32 %v2398, %v2090
        %v2403 = vadd.f32 %v2399, 1e-05
        %v2404 = vadd.f32 %v2400, 1e-05
        %v2405 = vadd.f32 %v2401, 1e-05
        %v2406 = vadd.f32 %v2402, 1e-05
        %v2407 = vrsqrt.pop %v2403
        %v2408 = vrsqrt.pop %v2404
        %v2409 = vrsqrt.pop %v2405
        %v2410 = vrsqrt.pop %v2406
        %v2411 = vmul.f32 %v2379, %v2407
        %v2412 = vmul.f32 %v2380, %v2408
        %v2413 = vmul.f32 %v2381, %v2409
        %v2414 = vmul.f32 %v2382, %v2410
        %v2416 = vlaneseq
        %v2417 = vshrl.u32 %v2416, 7
        %v2418 = vsub.s32 0, %v2417
        %v2419 = vrot.slane %v2361, %v2418
        %v2421 = vmul.f32 %v2411, %v2419
        %v2422 = vmul.f32 %v2412, %v2419
        %v2423 = vmul.f32 %v2413, %v2419
        %v2424 = vmul.f32 %v2414, %v2419
        %v2426 = vlaneseq
        %v2427 = vshrl.u32 %v2426, 7
        %v2428 = vsub.s32 0, %v2427
        %v2429 = vrot.slane %v2362, %v2428
        %v2431 = vadd.f32 %v2421, %v2429
        %v2432 = vadd.f32 %v2422, %v2429
        %v2433 = vadd.f32 %v2423, %v2429
        %v2434 = vadd.f32 %v2424, %v2429
        %2435 = vst.msk [vmem:[#allocation2] sm:$0xff] %vm789, %v2431
        %2436 = vst.msk [vmem:[#allocation2 + $0x8] sm:$0xff] %vm789, %v2432
        %2437 = vst.msk [vmem:[#allocation2 + $0x10] sm:$0xff] %vm789, %v2433
        %2438 = vst.msk [vmem:[#allocation2 + $0x18] sm:$0xff] %vm789, %v2434
        %p2439 = scmp.eq.s32.totalorder %s34, 1
        // Predicated region
        $region93: #{enhanced_geometric_transformer_forward.3} parent=87 // pred_check
          %p2440 = pneg %p2439
        $region94: #{enhanced_geometric_transformer_forward.3} parent=87 // pred_check_branch
          %2442 = sbr.rel (%p2440) target = $region96
        $region95: #{enhanced_geometric_transformer_forward.3} parent=87 // pred_region
          %v2443 = vld [vmem:[%s13] sm:$0x1]
          %v2444 = vld [vmem:[%s14] sm:$0x1]
          %v2445 = vsel %vm789, %v2431, 0.0
          %2446 = vadd.xlane.f32.xlu0 %v2445
          %v2447 = vpop.xlane.xlu0 %2446
          %v2448 = vsel %vm789, %v2432, 0.0
          %2449 = vadd.xlane.f32.xlu0 %v2448
          %v2450 = vpop.xlane.xlu0 %2449
          %v2451 = vsel %vm789, %v2433, 0.0
          %2452 = vadd.xlane.f32.xlu0 %v2451
          %v2453 = vpop.xlane.xlu0 %2452
          %v2454 = vsel %vm789, %v2434, 0.0
          %2455 = vadd.xlane.f32.xlu0 %v2454
          %v2456 = vpop.xlane.xlu0 %2455
          %v2457 = vmul.f32 %v2447, %v2090
          %v2458 = vmul.f32 %v2450, %v2090
          %v2459 = vmul.f32 %v2453, %v2090
          %v2460 = vmul.f32 %v2456, %v2090
          %v2461 = vsub.f32 %v2431, %v2457
          %v2462 = vsub.f32 %v2432, %v2458
          %v2463 = vsub.f32 %v2433, %v2459
          %v2464 = vsub.f32 %v2434, %v2460
          %v2465 = vmul.f32 %v2461, %v2461
          %v2466 = vmul.f32 %v2462, %v2462
          %v2467 = vmul.f32 %v2463, %v2463
          %v2468 = vmul.f32 %v2464, %v2464
          %v2469 = vsel %vm789, %v2465, 0.0
          %2470 = vadd.xlane.f32.xlu0 %v2469
          %v2471 = vpop.xlane.xlu0 %2470
          %v2472 = vsel %vm789, %v2466, 0.0
          %2473 = vadd.xlane.f32.xlu0 %v2472
          %v2474 = vpop.xlane.xlu0 %2473
          %v2475 = vsel %vm789, %v2467, 0.0
          %2476 = vadd.xlane.f32.xlu0 %v2475
          %v2477 = vpop.xlane.xlu0 %2476
          %v2478 = vsel %vm789, %v2468, 0.0
          %2479 = vadd.xlane.f32.xlu0 %v2478
          %v2480 = vpop.xlane.xlu0 %2479
          %v2481 = vmul.f32 %v2471, %v2090
          %v2482 = vmul.f32 %v2474, %v2090
          %v2483 = vmul.f32 %v2477, %v2090
          %v2484 = vmul.f32 %v2480, %v2090
          %v2485 = vadd.f32 %v2481, 1e-05
          %v2486 = vadd.f32 %v2482, 1e-05
          %v2487 = vadd.f32 %v2483, 1e-05
          %v2488 = vadd.f32 %v2484, 1e-05
          %v2489 = vrsqrt.pop %v2485
          %v2490 = vrsqrt.pop %v2486
          %v2491 = vrsqrt.pop %v2487
          %v2492 = vrsqrt.pop %v2488
          %v2493 = vmul.f32 %v2461, %v2489
          %v2494 = vmul.f32 %v2462, %v2490
          %v2495 = vmul.f32 %v2463, %v2491
          %v2496 = vmul.f32 %v2464, %v2492
          %v2498 = vlaneseq
          %v2499 = vshrl.u32 %v2498, 7
          %v2500 = vsub.s32 0, %v2499
          %v2501 = vrot.slane %v2443, %v2500
          %v2503 = vmul.f32 %v2493, %v2501
          %v2504 = vmul.f32 %v2494, %v2501
          %v2505 = vmul.f32 %v2495, %v2501
          %v2506 = vmul.f32 %v2496, %v2501
          %v2508 = vlaneseq
          %v2509 = vshrl.u32 %v2508, 7
          %v2510 = vsub.s32 0, %v2509
          %v2511 = vrot.slane %v2444, %v2510
          %v2513 = vadd.f32 %v2503, %v2511
          %v2514 = vadd.f32 %v2504, %v2511
          %v2515 = vadd.f32 %v2505, %v2511
          %v2516 = vadd.f32 %v2506, %v2511
          %v2517 = vsel %vm789, %v2513, -inf
          %v2518 = vsel %vm789, %v2514, -inf
          %v2519 = vmax.f32 %v2517, %v2518
          %v2520 = vrot.slane %v2519, 4
          %v2521 = vmax.f32 %v2519, %v2520
          %v2522 = vrot.slane %v2521, 2
          %v2523 = vmax.f32 %v2521, %v2522
          %v2524 = vrot.slane %v2523, 1
          %v2525 = vmax.f32 %v2523, %v2524
          %v2526 = vsel %vm789, %v2515, -inf
          %v2527 = vsel %vm789, %v2516, -inf
          %v2528 = vmax.f32 %v2526, %v2527
          %v2529 = vrot.slane %v2528, 4
          %v2530 = vmax.f32 %v2528, %v2529
          %v2531 = vrot.slane %v2530, 2
          %v2532 = vmax.f32 %v2530, %v2531
          %v2533 = vrot.slane %v2532, 1
          %v2534 = vmax.f32 %v2532, %v2533
          %v2535 = vld [vmem:[%s15] sm:$0xff]
          %v2536 = vld [vmem:[%s15 + $0x8] sm:$0xff]
          %v2537 = vld [vmem:[%s15 + $0x10] sm:$0xff]
          %v2538 = vld [vmem:[%s15 + $0x18] sm:$0xff]
          %v2539 = vld [vmem:[%s16] sm:$0x1]
          %v2541 = vlaneseq
          %v2542 = vshrl.u32 %v2541, 7
          %v2543 = vsub.s32 0, %v2542
          %v2544 = vrot.slane %v2539, %v2543
          %vm2548 = vcmask 1041409
          %v2549 = vsel %vm2548, %v2534, %v2525
          %v2550 = vsel %vm789, %v2549, 0
          %2552 = vmatprep.subr.mxu0 0.0
          %2553 = vmatpush1.msra.mxu0 %v2535
          %2554 = vmatprep.subr.mxu0 0.0
          %2555 = vmatpush1.msra.mxu0 %v2536
          %2556 = vmatprep.subr.mxu0 0.0
          %2557 = vmatpush1.msra.mxu0 %v2537
          %2558 = vmatprep.subr.mxu0 0.0
          %2559 = vmatpush1.msra.mxu0 %v2538
          %2560 = vmatprep.subr.mxu0 0.0
          %2561 = vmatpush1.msra.mxu0 0.0
          %2562 = vmatprep.subr.mxu0 0.0
          %2563 = vmatpush1.msra.mxu0 0.0
          %2564 = vmatprep.subr.mxu0 0.0
          %2565 = vmatpush1.msra.mxu0 0.0
          %2566 = vmatprep.subr.mxu0 0.0
          %2567 = vmatpush1.msra.mxu0 0.0
          %2568 = vmatprep.subr.mxu0 0.0
          %2569 = vmatpush1.msra.mxu0 0.0
          %2570 = vmatprep.subr.mxu0 0.0
          %2571 = vmatpush1.msra.mxu0 0.0
          %2572 = vmatprep.subr.mxu0 0.0
          %2573 = vmatpush1.msra.mxu0 0.0
          %2574 = vmatprep.subr.mxu0 0.0
          %2575 = vmatpush1.msra.mxu0 0.0
          %2576 = vmatprep.subr.mxu0 0.0
          %2577 = vmatpush1.msra.mxu0 0.0
          %2578 = vmatprep.subr.mxu0 0.0
          %2579 = vmatpush1.msra.mxu0 0.0
          %2580 = vmatprep.subr.mxu0 0.0
          %2581 = vmatpush1.msra.mxu0 0.0
          %2582 = vmatprep.subr.mxu0 0.0
          %2583 = vmatpush1.msra.mxu0 0.0
          %2584 = vmatprep.subr.mxu0 0.0
          %2585 = vmatpush1.msra.mxu0 0.0
          %2586 = vmatprep.subr.mxu0 0.0
          %2587 = vmatpush1.msra.mxu0 0.0
          %2588 = vmatprep.subr.mxu0 0.0
          %2589 = vmatpush1.msra.mxu0 0.0
          %2590 = vmatprep.subr.mxu0 0.0
          %2591 = vmatpush1.msra.mxu0 0.0
          %2592 = vmatprep.subr.mxu0 0.0
          %2593 = vmatpush1.msra.mxu0 0.0
          %2594 = vmatprep.subr.mxu0 0.0
          %2595 = vmatpush1.msra.mxu0 0.0
          %2596 = vmatprep.subr.mxu0 0.0
          %2597 = vmatpush1.msra.mxu0 0.0
          %2598 = vmatprep.subr.mxu0 0.0
          %2599 = vmatpush1.msra.mxu0 0.0
          %2600 = vmatprep.subr.mxu0 0.0
          %2601 = vmatpush1.msra.mxu0 0.0
          %2602 = vmatprep.subr.mxu0 0.0
          %2603 = vmatpush1.msra.mxu0 0.0
          %2604 = vmatprep.subr.mxu0 0.0
          %2605 = vmatpush1.msra.mxu0 0.0
          %2606 = vmatprep.subr.mxu0 0.0
          %2607 = vmatpush1.msra.mxu0 0.0
          %2608 = vmatprep.subr.mxu0 0.0
          %2609 = vmatpush1.msra.mxu0 0.0
          %2610 = vmatprep.subr.mxu0 0.0
          %2611 = vmatpush1.msra.mxu0 0.0
          %2612 = vmatprep.subr.mxu0 0.0
          %2613 = vmatpush1.msra.mxu0 0.0
          %2614 = vmatprep.subr.mxu0 0.0
          %2615 = vmatpush1.msra.mxu0 0.0
          %2616 = vmatprep.mubr.f32.mxu0 0.0
          %2617 = vmatmul.mubr.f32.gmra.mrb[0].mxu0 %v2550
          %v2618 = vpop.f32.mrb[0].mxu0
          %v2619 = vadd.f32 %v2544, %v2618
          %v2620 = vpop.f32.mrb[0].mxu0
          %2621 = vdwg.mxu0
          %vm2622 = vcmask 74752
          %2623 = vst.msk [vmem:[#allocation3] sm:$0x3] %vm2622, %v2619
        $region96: #{enhanced_geometric_transformer_forward.3} parent=87 // pred_fallthru
          _
        // Predicated region
        $region97: #{enhanced_geometric_transformer_forward.3} parent=87 // pred_check
          %p2624 = pneg %p481
        $region98: #{enhanced_geometric_transformer_forward.3} parent=87 // pred_check_branch
          %2626 = sbr.rel (%p2624) target = $region100
        $region99: #{enhanced_geometric_transformer_forward.3} parent=87 // pred_region
          %s2628 = ssub.s32 32, 32
          %2629 = vsyncadd [#allocation4], %s2628
          %s2630 = smul.addr %s33, 32
          %s2631 = scalar_lea.hbm %s17, %s2630
          %s2633 = sshll.u32 [#allocation3], 4
          %s2634 = int_to_ptr.vmem [resolvable:$true] %s2633
          %2636 = dma.vmem_to_hbm [thread:$0]  %s2634, 32, %s2631, [#allocation4]
        $region100: #{enhanced_geometric_transformer_forward.3} parent=87 // pred_fallthru
          _
        // Predicated region
        $region101: #{enhanced_geometric_transformer_forward.3} parent=87 // pred_check
          %p2637 = pneg %p481
        $region102: #{enhanced_geometric_transformer_forward.3} parent=87 // pred_check_branch
          %2639 = sbr.rel (%p2637) target = $region104
        $region103: #{enhanced_geometric_transformer_forward.3} parent=87 // pred_region
          %2640 = dma.done [#allocation4], 32
        $region104: #{enhanced_geometric_transformer_forward.3} parent=87 // pred_fallthru
          _
      $region88: #{enhanced_geometric_transformer_forward.3} parent=5 // pred_fallthru
        _
      %p2641 = scmp.le.s32.totalorder 2, %s24
      // Predicated region
      $region105: #{enhanced_geometric_transformer_forward.3} parent=5 // pred_check
        %p2642 = pneg %p2641
      $region106: #{enhanced_geometric_transformer_forward.3} parent=5 // pred_check_branch
        %2644 = sbr.rel (%p2642) target = $region108
      $region107: #{enhanced_geometric_transformer_forward.3} parent=5 // pred_region
        %s2645 = ssub.s32 %s24, 2
      $region108: #{enhanced_geometric_transformer_forward.3} parent=5 // pred_fallthru
        _
    $region6: #{enhanced_geometric_transformer_forward.3} parent=1 // loop_footer
      %s28 = sadd.s32 1, %s24
    $region7: #{enhanced_geometric_transformer_forward.3} parent=1 // loop_footer_branch
      %23 = sbr.rel target = $region3
    $region8: #{enhanced_geometric_transformer_forward.3} parent=1 // loop_exit
      _
    %2646 = vsyncpa [#allocation4], 1
    %s2647 = scalar_lea.sflag [#allocation4], 1
    %2648 = vsyncpa %s2647, 1

</llo_original>
